<compile_context>
chip_gen: v6e
topology: v6e:2x2x1
jax: 0.10.0
libtpu: 0.0.40
codegen_flags: <defaults>
</compile_context>

<pallas_src>
import math

import jax
import jax.numpy as jnp
from jax import lax
from jax.experimental import pallas as pl
from jax.experimental.pallas import tpu as pltpu


def _round_up(x, m):
    return (x + m - 1) // m * m


def _sigmoid_ref(x):
    return 1.0 / (1.0 + jnp.exp(-x))


# -----------------------------------------------------------------------------
# Fused multi-layer GRU + Linear head kernel (single invocation, all in VMEM)
# -----------------------------------------------------------------------------
def _make_gru_kernel(num_layers, seq_len, batch_pad, hidden_dim):
    H = hidden_dim
    B = batch_pad  # multiple of 8

    def _sigmoid(x):
        # exp + approx reciprocal both issue on the EUP slot (idle otherwise
        # during the recurrence) instead of a VPU divide.
        return pl.reciprocal(1.0 + jnp.exp(-x), approx=True)

    def kernel(*refs):
        # ---- unpack refs: inputs..., output, scratch... ----------------------
        x_ref = refs[0]                                   # (T*B, D_in)  bf16
        layer_refs = refs[1:1 + 10 * num_layers]          # 10 refs / layer
        w_fc_ref = refs[1 + 10 * num_layers]              # (H, out_dim) f32
        b_fc_ref = refs[2 + 10 * num_layers]              # (1, out_dim) f32
        out_ref = refs[3 + 10 * num_layers]               # (B, out_dim) f32
        seq_ref, gr_ref, gz_ref, gn_ref = refs[4 + 10 * num_layers:]
        # seq_ref: (T*B, H) f32 inter-layer sequence (reused in place)
        # g*_ref : (T*B, H) f32 precomputed input-side gates (r, z, n)

        h_last = None
        for l in range(num_layers):
            (w_ih_r, w_ih_z, w_ih_n,                      # (D_l, H) bf16
             w_hh_r, w_hh_z, w_hh_n,                      # (H, H)  bf16
             b_r, b_z, b_in, b_hn) = [                    # (1, H)  f32
                 layer_refs[10 * l + i][...] for i in range(10)]

            # ---- batched input projection over ALL timesteps (big-M matmuls).
            # b_hh_r / b_hh_z are already folded into b_r / b_z on the host;
            # b_hh_n must stay inside the r * (.) term below.
            if l == 0:
                inp = x_ref[...]                          # (T*B, D_in) bf16
            else:
                # read fully BEFORE the recurrence overwrites seq_ref in place
                inp = seq_ref[...].astype(jnp.bfloat16)   # (T*B, H)
            gr_ref[...] = jnp.dot(inp, w_ih_r, preferred_element_type=jnp.float32) + b_r
            gz_ref[...] = jnp.dot(inp, w_ih_z, preferred_element_type=jnp.float32) + b_z
            gn_ref[...] = jnp.dot(inp, w_ih_n, preferred_element_type=jnp.float32) + b_in

            # hoist the (1,H)->(B,H) broadcast out of the serial loop
            b_hn_b = jnp.broadcast_to(b_hn, (B, H))

            is_last = (l == num_layers - 1)

            # ---- sequential recurrence (h0 = 0, as in the PyTorch forward) ---
            def step(t, h, *, last=is_last,
                     w_hh_r=w_hh_r, w_hh_z=w_hh_z, w_hh_n=w_hh_n, b_hn_b=b_hn_b):
                base = pl.multiple_of(t * B, B)           # sublane-aligned row offset
                h16 = h.astype(jnp.bfloat16)
                gh_r = jnp.dot(h16, w_hh_r, preferred_element_type=jnp.float32)
                gh_z = jnp.dot(h16, w_hh_z, preferred_element_type=jnp.float32)
                gh_n = jnp.dot(h16, w_hh_n, preferred_element_type=jnp.float32) + b_hn_b
                r = _sigmoid(gr_ref[pl.ds(base, B), :] + gh_r)
                z = _sigmoid(gz_ref[pl.ds(base, B), :] + gh_z)
                n = jnp.tanh(gn_ref[pl.ds(base, B), :] + r * gh_n)
                h_new = (1.0 - z) * n + z * h
                if not last:
                    seq_ref[pl.ds(base, B), :] = h_new    # feeds the next layer
                return h_new

            h_last = lax.fori_loop(0, seq_len, step,
                                   jnp.zeros((B, H), jnp.float32),
                                   unroll=True)

        # ---- classifier head on the last timestep of the top layer ----------
        out_ref[...] = (jnp.dot(h_last, w_fc_ref[...],
                                preferred_element_type=jnp.float32)
                        + b_fc_ref[...])

    return kernel


def basic_gru_forward(x, params):
    """x: (B, T, input_dim), batch_first as in the PyTorch module."""
    x = x.astype(jnp.float32)
    B, T, D_in = x.shape
    H = params["hidden_dim"]
    L = params["num_layers"]
    out_dim = params["w_fc"].shape[-1]

    # pad batch to the f32 sublane tile (8) and flatten time-major -> (T*B_pad, D_in)
    B_pad = max(8, _round_up(B, 8))
    xt = jnp.transpose(x, (1, 0, 2))                      # (T, B, D_in)
    if B_pad != B:
        xt = jnp.pad(xt, ((0, 0), (0, B_pad - B), (0, 0)))
    x_flat = xt.reshape(T * B_pad, D_in).astype(jnp.bfloat16)

    inputs = [x_flat]
    for (w_ih, w_hh, b_ih, b_hh) in params["layers"]:
        # split per gate ([r | z | n]) -> lane-offset-0 slices inside the kernel
        w_ih_g = [w_ih[:, i * H:(i + 1) * H].astype(jnp.bfloat16) for i in range(3)]
        w_hh_g = [w_hh[:, i * H:(i + 1) * H].astype(jnp.bfloat16) for i in range(3)]
        b_r = b_ih[:, 0 * H:1 * H] + b_hh[:, 0 * H:1 * H]   # fold b_hh_r
        b_z = b_ih[:, 1 * H:2 * H] + b_hh[:, 1 * H:2 * H]   # fold b_hh_z
        b_in = b_ih[:, 2 * H:3 * H]
        b_hn = b_hh[:, 2 * H:3 * H]                         # stays in the recurrence
        inputs += w_ih_g + w_hh_g + [b_r, b_z, b_in, b_hn]
    inputs += [params["w_fc"], params["b_fc"]]

    # explicit scoped-VMEM budget: resident inputs + scratch (+ headroom)
    scratch_bytes = 4 * T * B_pad * H * 4
    in_bytes = sum(int(a.size) * a.dtype.itemsize for a in inputs)
    vmem_limit = int(min(max(4 * (scratch_bytes + in_bytes), 16 << 20), 96 << 20))

    kernel = _make_gru_kernel(L, T, B_pad, H)
    out = pl.pallas_call(
        kernel,
        out_shape=jax.ShapeDtypeStruct((B_pad, out_dim), jnp.float32),
        scratch_shapes=[
            pltpu.VMEM((T * B_pad, H), jnp.float32),   # inter-layer sequence
            pltpu.VMEM((T * B_pad, H), jnp.float32),   # precomputed r gate (input side)
            pltpu.VMEM((T * B_pad, H), jnp.float32),   # precomputed z gate (input side)
            pltpu.VMEM((T * B_pad, H), jnp.float32),   # precomputed n gate (input side)
        ],
        compiler_params=pltpu.CompilerParams(vmem_limit_bytes=vmem_limit),
    )(*inputs)
    return out[:B]


# -----------------------------------------------------------------------------
# Deterministic parameter init (PyTorch-style uniform(-1/sqrt(H), 1/sqrt(H)))
# -----------------------------------------------------------------------------
def init_params(key, input_dim, hidden_dim, num_layers, output_dim):
    bound = 1.0 / math.sqrt(hidden_dim)
    layers = []
    d = input_dim
    for _ in range(num_layers):
        key, k1, k2, k3, k4 = jax.random.split(key, 5)
        w_ih = jax.random.uniform(k1, (d, 3 * hidden_dim), jnp.float32, -bound, bound)
        w_hh = jax.random.uniform(k2, (hidden_dim, 3 * hidden_dim), jnp.float32, -bound, bound)
        b_ih = jax.random.uniform(k3, (1, 3 * hidden_dim), jnp.float32, -bound, bound)
        b_hh = jax.random.uniform(k4, (1, 3 * hidden_dim), jnp.float32, -bound, bound)
        layers.append((w_ih, w_hh, b_ih, b_hh))
        d = hidden_dim
    key, k5, k6 = jax.random.split(key, 3)
    w_fc = jax.random.uniform(k5, (hidden_dim, output_dim), jnp.float32, -bound, bound)
    b_fc = jax.random.uniform(k6, (1, output_dim), jnp.float32, -bound, bound)
    return {"layers": layers, "w_fc": w_fc, "b_fc": b_fc,
            "hidden_dim": hidden_dim, "num_layers": num_layers}


# -----------------------------------------------------------------------------
# Pure-JAX reference (same math as the kernel / PyTorch GRU, eval mode, f32)
# -----------------------------------------------------------------------------
def basic_gru_reference(x, params):
    x = x.astype(jnp.float32)
    B = x.shape[0]
    H = params["hidden_dim"]
    hp = lax.Precision.HIGHEST
    seq = x
    for (w_ih, w_hh, b_ih, b_hh) in params["layers"]:
        def step(h, x_t, w_ih=w_ih, w_hh=w_hh, b_ih=b_ih, b_hh=b_hh):
            gx = jnp.dot(x_t, w_ih, precision=hp) + b_ih
            gh = jnp.dot(h, w_hh, precision=hp) + b_hh
            r = _sigmoid_ref(gx[:, :H] + gh[:, :H])
            z = _sigmoid_ref(gx[:, H:2 * H] + gh[:, H:2 * H])
            n = jnp.tanh(gx[:, 2 * H:] + r * gh[:, 2 * H:])
            h_new = (1.0 - z) * n + z * h
            return h_new, h_new
        h0 = jnp.zeros((B, H), jnp.float32)
        _, outs = lax.scan(step, h0, jnp.transpose(seq, (1, 0, 2)))
        seq = jnp.transpose(outs, (1, 0, 2))
    last = seq[:, -1, :]
    return jnp.dot(last, params["w_fc"], precision=hp) + params["b_fc"]


if __name__ == "__main__":
    B, T = 2, 8
    INPUT_DIM, HIDDEN_DIM, NUM_LAYERS, OUTPUT_DIM = 4, 32, 2, 6

    key = jax.random.PRNGKey(0)
    kx, kp = jax.random.split(key)
    x = jax.random.normal(kx, (B, T, INPUT_DIM), jnp.float32)
    params = init_params(kp, INPUT_DIM, HIDDEN_DIM, NUM_LAYERS, OUTPUT_DIM)

    y = basic_gru_forward(x, params)
    jax.block_until_ready(y)
    assert y.shape == (B, OUTPUT_DIM) and y.dtype == jnp.float32

    y_ref = basic_gru_reference(x, params)
    max_err = float(jnp.max(jnp.abs(y - y_ref)))
    assert bool(jnp.allclose(y, y_ref, rtol=2e-2, atol=2e-2)), (
        f"kernel/reference mismatch, max abs err = {max_err}")

    print("KERNEL_OK")
</pallas_src>

<mosaic_0001>
module attributes {stable_mosaic.version = 11 : i64} {
  func.func @kernel(%arg0: memref<64x4xbf16, #tpu.memory_space<vmem>>, %arg1: memref<4x32xbf16, #tpu.memory_space<vmem>>, %arg2: memref<4x32xbf16, #tpu.memory_space<vmem>>, %arg3: memref<4x32xbf16, #tpu.memory_space<vmem>>, %arg4: memref<32x32xbf16, #tpu.memory_space<vmem>>, %arg5: memref<32x32xbf16, #tpu.memory_space<vmem>>, %arg6: memref<32x32xbf16, #tpu.memory_space<vmem>>, %arg7: memref<1x32xf32, #tpu.memory_space<vmem>>, %arg8: memref<1x32xf32, #tpu.memory_space<vmem>>, %arg9: memref<1x32xf32, #tpu.memory_space<vmem>>, %arg10: memref<1x32xf32, #tpu.memory_space<vmem>>, %arg11: memref<32x32xbf16, #tpu.memory_space<vmem>>, %arg12: memref<32x32xbf16, #tpu.memory_space<vmem>>, %arg13: memref<32x32xbf16, #tpu.memory_space<vmem>>, %arg14: memref<32x32xbf16, #tpu.memory_space<vmem>>, %arg15: memref<32x32xbf16, #tpu.memory_space<vmem>>, %arg16: memref<32x32xbf16, #tpu.memory_space<vmem>>, %arg17: memref<1x32xf32, #tpu.memory_space<vmem>>, %arg18: memref<1x32xf32, #tpu.memory_space<vmem>>, %arg19: memref<1x32xf32, #tpu.memory_space<vmem>>, %arg20: memref<1x32xf32, #tpu.memory_space<vmem>>, %arg21: memref<32x6xf32, #tpu.memory_space<vmem>>, %arg22: memref<1x6xf32, #tpu.memory_space<vmem>>, %arg23: memref<8x6xf32, #tpu.memory_space<vmem>>, %arg24: memref<64x32xf32, #tpu.memory_space<vmem>>, %arg25: memref<64x32xf32, #tpu.memory_space<vmem>>, %arg26: memref<64x32xf32, #tpu.memory_space<vmem>>, %arg27: memref<64x32xf32, #tpu.memory_space<vmem>>) attributes {dimension_semantics = [], scalar_prefetch = 0 : i64, scratch_operands = 4 : i64, tpu.core_type = #tpu.core_type<tc>} {
    %c0 = arith.constant 0 : index
    %c0_0 = arith.constant 0 : index
    %0 = vector.load %arg1[%c0, %c0_0] : memref<4x32xbf16, #tpu.memory_space<vmem>>, vector<4x32xbf16>
    %c0_1 = arith.constant 0 : index
    %c0_2 = arith.constant 0 : index
    %1 = vector.load %arg2[%c0_1, %c0_2] : memref<4x32xbf16, #tpu.memory_space<vmem>>, vector<4x32xbf16>
    %c0_3 = arith.constant 0 : index
    %c0_4 = arith.constant 0 : index
    %2 = vector.load %arg3[%c0_3, %c0_4] : memref<4x32xbf16, #tpu.memory_space<vmem>>, vector<4x32xbf16>
    %c0_5 = arith.constant 0 : index
    %c0_6 = arith.constant 0 : index
    %3 = vector.load %arg4[%c0_5, %c0_6] : memref<32x32xbf16, #tpu.memory_space<vmem>>, vector<32x32xbf16>
    %c0_7 = arith.constant 0 : index
    %c0_8 = arith.constant 0 : index
    %4 = vector.load %arg5[%c0_7, %c0_8] : memref<32x32xbf16, #tpu.memory_space<vmem>>, vector<32x32xbf16>
    %c0_9 = arith.constant 0 : index
    %c0_10 = arith.constant 0 : index
    %5 = vector.load %arg6[%c0_9, %c0_10] : memref<32x32xbf16, #tpu.memory_space<vmem>>, vector<32x32xbf16>
    %c0_11 = arith.constant 0 : index
    %c0_12 = arith.constant 0 : index
    %6 = vector.load %arg7[%c0_11, %c0_12] : memref<1x32xf32, #tpu.memory_space<vmem>>, vector<1x32xf32>
    %c0_13 = arith.constant 0 : index
    %c0_14 = arith.constant 0 : index
    %7 = vector.load %arg8[%c0_13, %c0_14] : memref<1x32xf32, #tpu.memory_space<vmem>>, vector<1x32xf32>
    %c0_15 = arith.constant 0 : index
    %c0_16 = arith.constant 0 : index
    %8 = vector.load %arg9[%c0_15, %c0_16] : memref<1x32xf32, #tpu.memory_space<vmem>>, vector<1x32xf32>
    %c0_17 = arith.constant 0 : index
    %c0_18 = arith.constant 0 : index
    %9 = vector.load %arg10[%c0_17, %c0_18] : memref<1x32xf32, #tpu.memory_space<vmem>>, vector<1x32xf32>
    %c0_19 = arith.constant 0 : index
    %c0_20 = arith.constant 0 : index
    %10 = vector.load %arg0[%c0_19, %c0_20] : memref<64x4xbf16, #tpu.memory_space<vmem>>, vector<64x4xbf16>
    %cst = arith.constant dense<0.000000e+00> : vector<64x32xf32>
    %11 = tpu.matmul %10, %0, %cst {dimension_numbers = #tpu.dot_dimension_numbers<[1], [0], [0], [1], [0, 0, 1, 1], [], []>} : vector<64x4xbf16>, vector<4x32xbf16>, vector<64x32xf32> -> vector<64x32xf32>
    %12 = vector.broadcast %6 : vector<1x32xf32> to vector<64x32xf32>
    %13 = arith.addf %11, %12 : vector<64x32xf32>
    %c0_21 = arith.constant 0 : index
    %c0_22 = arith.constant 0 : index
    %14 = vector.load %arg25[%c0_21, %c0_22] : memref<64x32xf32, #tpu.memory_space<vmem>>, vector<64x32xf32>
    tpu.vector_store %arg25[%c0_21, %c0_22], %13 {strides = array<i32>} : memref<64x32xf32, #tpu.memory_space<vmem>>, vector<64x32xf32>,
    %cst_23 = arith.constant dense<0.000000e+00> : vector<64x32xf32>
    %15 = tpu.matmul %10, %1, %cst_23 {dimension_numbers = #tpu.dot_dimension_numbers<[1], [0], [0], [1], [0, 0, 1, 1], [], []>} : vector<64x4xbf16>, vector<4x32xbf16>, vector<64x32xf32> -> vector<64x32xf32>
    %16 = vector.broadcast %7 : vector<1x32xf32> to vector<64x32xf32>
    %17 = arith.addf %15, %16 : vector<64x32xf32>
    %c0_24 = arith.constant 0 : index
    %c0_25 = arith.constant 0 : index
    %18 = vector.load %arg26[%c0_24, %c0_25] : memref<64x32xf32, #tpu.memory_space<vmem>>, vector<64x32xf32>
    tpu.vector_store %arg26[%c0_24, %c0_25], %17 {strides = array<i32>} : memref<64x32xf32, #tpu.memory_space<vmem>>, vector<64x32xf32>,
    %cst_26 = arith.constant dense<0.000000e+00> : vector<64x32xf32>
    %19 = tpu.matmul %10, %2, %cst_26 {dimension_numbers = #tpu.dot_dimension_numbers<[1], [0], [0], [1], [0, 0, 1, 1], [], []>} : vector<64x4xbf16>, vector<4x32xbf16>, vector<64x32xf32> -> vector<64x32xf32>
    %20 = vector.broadcast %8 : vector<1x32xf32> to vector<64x32xf32>
    %21 = arith.addf %19, %20 : vector<64x32xf32>
    %c0_27 = arith.constant 0 : index
    %c0_28 = arith.constant 0 : index
    %22 = vector.load %arg27[%c0_27, %c0_28] : memref<64x32xf32, #tpu.memory_space<vmem>>, vector<64x32xf32>
    tpu.vector_store %arg27[%c0_27, %c0_28], %21 {strides = array<i32>} : memref<64x32xf32, #tpu.memory_space<vmem>>, vector<64x32xf32>,
    %23 = vector.shape_cast %9 : vector<1x32xf32> to vector<1x32xf32>
    %24 = vector.broadcast %23 : vector<1x32xf32> to vector<8x32xf32>
    %cst_29 = arith.constant 0.000000e+00 : f32
    %25 = vector.broadcast %cst_29 : f32 to vector<8x32xf32>
    %c0_i32 = arith.constant 0 : i32
    %c8_i32 = arith.constant 8 : i32
    %26 = arith.muli %c0_i32, %c8_i32 : i32
    %27 = tpu.assume_multiple %26, 8 : i32
    %28 = arith.truncf %25 : vector<8x32xf32> to vector<8x32xbf16>
    %cst_30 = arith.constant dense<0.000000e+00> : vector<8x32xf32>
    %29 = tpu.matmul %28, %3, %cst_30 {dimension_numbers = #tpu.dot_dimension_numbers<[1], [0], [0], [1], [0, 0, 1, 1], [], []>} : vector<8x32xbf16>, vector<32x32xbf16>, vector<8x32xf32> -> vector<8x32xf32>
    %cst_31 = arith.constant dense<0.000000e+00> : vector<8x32xf32>
    %30 = tpu.matmul %28, %4, %cst_31 {dimension_numbers = #tpu.dot_dimension_numbers<[1], [0], [0], [1], [0, 0, 1, 1], [], []>} : vector<8x32xbf16>, vector<32x32xbf16>, vector<8x32xf32> -> vector<8x32xf32>
    %cst_32 = arith.constant dense<0.000000e+00> : vector<8x32xf32>
    %31 = tpu.matmul %28, %5, %cst_32 {dimension_numbers = #tpu.dot_dimension_numbers<[1], [0], [0], [1], [0, 0, 1, 1], [], []>} : vector<8x32xbf16>, vector<32x32xbf16>, vector<8x32xf32> -> vector<8x32xf32>
    %32 = arith.addf %31, %24 : vector<8x32xf32>
    %33 = arith.index_cast %27 : i32 to index
    %c0_33 = arith.constant 0 : index
    %34 = vector.load %arg25[%33, %c0_33] : memref<64x32xf32, #tpu.memory_space<vmem>>, vector<8x32xf32>
    %35 = arith.addf %34, %29 : vector<8x32xf32>
    %cst_34 = arith.constant 0.000000e+00 : f32
    %36 = vector.broadcast %cst_34 : f32 to vector<8x32xf32>
    %37 = arith.subf %36, %35 : vector<8x32xf32>
    %38 = math.exp %37 : vector<8x32xf32>
    %cst_35 = arith.constant 1.000000e+00 : f32
    %39 = vector.broadcast %cst_35 : f32 to vector<8x32xf32>
    %40 = arith.addf %39, %38 : vector<8x32xf32>
    %41 = tpu.reciprocal %40 {approx = true} : vector<8x32xf32> -> vector<8x32xf32>
    %42 = arith.index_cast %27 : i32 to index
    %c0_36 = arith.constant 0 : index
    %43 = vector.load %arg26[%42, %c0_36] : memref<64x32xf32, #tpu.memory_space<vmem>>, vector<8x32xf32>
    %44 = arith.addf %43, %30 : vector<8x32xf32>
    %cst_37 = arith.constant 0.000000e+00 : f32
    %45 = vector.broadcast %cst_37 : f32 to vector<8x32xf32>
    %46 = arith.subf %45, %44 : vector<8x32xf32>
    %47 = math.exp %46 : vector<8x32xf32>
    %cst_38 = arith.constant 1.000000e+00 : f32
    %48 = vector.broadcast %cst_38 : f32 to vector<8x32xf32>
    %49 = arith.addf %48, %47 : vector<8x32xf32>
    %50 = tpu.reciprocal %49 {approx = true} : vector<8x32xf32> -> vector<8x32xf32>
    %51 = arith.index_cast %27 : i32 to index
    %c0_39 = arith.constant 0 : index
    %52 = vector.load %arg27[%51, %c0_39] : memref<64x32xf32, #tpu.memory_space<vmem>>, vector<8x32xf32>
    %53 = arith.mulf %41, %32 : vector<8x32xf32>
    %54 = arith.addf %52, %53 : vector<8x32xf32>
    %55 = math.tanh %54 : vector<8x32xf32>
    %cst_40 = arith.constant 1.000000e+00 : f32
    %56 = vector.broadcast %cst_40 : f32 to vector<8x32xf32>
    %57 = arith.subf %56, %50 : vector<8x32xf32>
    %58 = arith.mulf %57, %55 : vector<8x32xf32>
    %59 = arith.mulf %50, %25 : vector<8x32xf32>
    %60 = arith.addf %58, %59 : vector<8x32xf32>
    %61 = arith.index_cast %27 : i32 to index
    %c0_41 = arith.constant 0 : index
    %62 = vector.load %arg24[%61, %c0_41] : memref<64x32xf32, #tpu.memory_space<vmem>>, vector<8x32xf32>
    tpu.vector_store %arg24[%61, %c0_41], %60 {strides = array<i32>} : memref<64x32xf32, #tpu.memory_space<vmem>>, vector<8x32xf32>,
    %c1_i32 = arith.constant 1 : i32
    %c8_i32_42 = arith.constant 8 : i32
    %63 = arith.muli %c1_i32, %c8_i32_42 : i32
    %64 = tpu.assume_multiple %63, 8 : i32
    %65 = arith.truncf %60 : vector<8x32xf32> to vector<8x32xbf16>
    %cst_43 = arith.constant dense<0.000000e+00> : vector<8x32xf32>
    %66 = tpu.matmul %65, %3, %cst_43 {dimension_numbers = #tpu.dot_dimension_numbers<[1], [0], [0], [1], [0, 0, 1, 1], [], []>} : vector<8x32xbf16>, vector<32x32xbf16>, vector<8x32xf32> -> vector<8x32xf32>
    %cst_44 = arith.constant dense<0.000000e+00> : vector<8x32xf32>
    %67 = tpu.matmul %65, %4, %cst_44 {dimension_numbers = #tpu.dot_dimension_numbers<[1], [0], [0], [1], [0, 0, 1, 1], [], []>} : vector<8x32xbf16>, vector<32x32xbf16>, vector<8x32xf32> -> vector<8x32xf32>
    %cst_45 = arith.constant dense<0.000000e+00> : vector<8x32xf32>
    %68 = tpu.matmul %65, %5, %cst_45 {dimension_numbers = #tpu.dot_dimension_numbers<[1], [0], [0], [1], [0, 0, 1, 1], [], []>} : vector<8x32xbf16>, vector<32x32xbf16>, vector<8x32xf32> -> vector<8x32xf32>
    %69 = arith.addf %68, %24 : vector<8x32xf32>
    %70 = arith.index_cast %64 : i32 to index
    %c0_46 = arith.constant 0 : index
    %71 = vector.load %arg25[%70, %c0_46] : memref<64x32xf32, #tpu.memory_space<vmem>>, vector<8x32xf32>
    %72 = arith.addf %71, %66 : vector<8x32xf32>
    %cst_47 = arith.constant 0.000000e+00 : f32
    %73 = vector.broadcast %cst_47 : f32 to vector<8x32xf32>
    %74 = arith.subf %73, %72 : vector<8x32xf32>
    %75 = math.exp %74 : vector<8x32xf32>
    %cst_48 = arith.constant 1.000000e+00 : f32
    %76 = vector.broadcast %cst_48 : f32 to vector<8x32xf32>
    %77 = arith.addf %76, %75 : vector<8x32xf32>
    %78 = tpu.reciprocal %77 {approx = true} : vector<8x32xf32> -> vector<8x32xf32>
    %79 = arith.index_cast %64 : i32 to index
    %c0_49 = arith.constant 0 : index
    %80 = vector.load %arg26[%79, %c0_49] : memref<64x32xf32, #tpu.memory_space<vmem>>, vector<8x32xf32>
    %81 = arith.addf %80, %67 : vector<8x32xf32>
    %cst_50 = arith.constant 0.000000e+00 : f32
    %82 = vector.broadcast %cst_50 : f32 to vector<8x32xf32>
    %83 = arith.subf %82, %81 : vector<8x32xf32>
    %84 = math.exp %83 : vector<8x32xf32>
    %cst_51 = arith.constant 1.000000e+00 : f32
    %85 = vector.broadcast %cst_51 : f32 to vector<8x32xf32>
    %86 = arith.addf %85, %84 : vector<8x32xf32>
    %87 = tpu.reciprocal %86 {approx = true} : vector<8x32xf32> -> vector<8x32xf32>
    %88 = arith.index_cast %64 : i32 to index
    %c0_52 = arith.constant 0 : index
    %89 = vector.load %arg27[%88, %c0_52] : memref<64x32xf32, #tpu.memory_space<vmem>>, vector<8x32xf32>
    %90 = arith.mulf %78, %69 : vector<8x32xf32>
    %91 = arith.addf %89, %90 : vector<8x32xf32>
    %92 = math.tanh %91 : vector<8x32xf32>
    %cst_53 = arith.constant 1.000000e+00 : f32
    %93 = vector.broadcast %cst_53 : f32 to vector<8x32xf32>
    %94 = arith.subf %93, %87 : vector<8x32xf32>
    %95 = arith.mulf %94, %92 : vector<8x32xf32>
    %96 = arith.mulf %87, %60 : vector<8x32xf32>
    %97 = arith.addf %95, %96 : vector<8x32xf32>
    %98 = arith.index_cast %64 : i32 to index
    %c0_54 = arith.constant 0 : index
    %99 = vector.load %arg24[%98, %c0_54] : memref<64x32xf32, #tpu.memory_space<vmem>>, vector<8x32xf32>
    tpu.vector_store %arg24[%98, %c0_54], %97 {strides = array<i32>} : memref<64x32xf32, #tpu.memory_space<vmem>>, vector<8x32xf32>,
    %c2_i32 = arith.constant 2 : i32
    %c8_i32_55 = arith.constant 8 : i32
    %100 = arith.muli %c2_i32, %c8_i32_55 : i32
    %101 = tpu.assume_multiple %100, 8 : i32
    %102 = arith.truncf %97 : vector<8x32xf32> to vector<8x32xbf16>
    %cst_56 = arith.constant dense<0.000000e+00> : vector<8x32xf32>
    %103 = tpu.matmul %102, %3, %cst_56 {dimension_numbers = #tpu.dot_dimension_numbers<[1], [0], [0], [1], [0, 0, 1, 1], [], []>} : vector<8x32xbf16>, vector<32x32xbf16>, vector<8x32xf32> -> vector<8x32xf32>
    %cst_57 = arith.constant dense<0.000000e+00> : vector<8x32xf32>
    %104 = tpu.matmul %102, %4, %cst_57 {dimension_numbers = #tpu.dot_dimension_numbers<[1], [0], [0], [1], [0, 0, 1, 1], [], []>} : vector<8x32xbf16>, vector<32x32xbf16>, vector<8x32xf32> -> vector<8x32xf32>
    %cst_58 = arith.constant dense<0.000000e+00> : vector<8x32xf32>
    %105 = tpu.matmul %102, %5, %cst_58 {dimension_numbers = #tpu.dot_dimension_numbers<[1], [0], [0], [1], [0, 0, 1, 1], [], []>} : vector<8x32xbf16>, vector<32x32xbf16>, vector<8x32xf32> -> vector<8x32xf32>
    %106 = arith.addf %105, %24 : vector<8x32xf32>
    %107 = arith.index_cast %101 : i32 to index
    %c0_59 = arith.constant 0 : index
    %108 = vector.load %arg25[%107, %c0_59] : memref<64x32xf32, #tpu.memory_space<vmem>>, vector<8x32xf32>
    %109 = arith.addf %108, %103 : vector<8x32xf32>
    %cst_60 = arith.constant 0.000000e+00 : f32
    %110 = vector.broadcast %cst_60 : f32 to vector<8x32xf32>
    %111 = arith.subf %110, %109 : vector<8x32xf32>
    %112 = math.exp %111 : vector<8x32xf32>
    %cst_61 = arith.constant 1.000000e+00 : f32
    %113 = vector.broadcast %cst_61 : f32 to vector<8x32xf32>
    %114 = arith.addf %113, %112 : vector<8x32xf32>
    %115 = tpu.reciprocal %114 {approx = true} : vector<8x32xf32> -> vector<8x32xf32>
    %116 = arith.index_cast %101 : i32 to index
    %c0_62 = arith.constant 0 : index
    %117 = vector.load %arg26[%116, %c0_62] : memref<64x32xf32, #tpu.memory_space<vmem>>, vector<8x32xf32>
    %118 = arith.addf %117, %104 : vector<8x32xf32>
    %cst_63 = arith.constant 0.000000e+00 : f32
    %119 = vector.broadcast %cst_63 : f32 to vector<8x32xf32>
    %120 = arith.subf %119, %118 : vector<8x32xf32>
    %121 = math.exp %120 : vector<8x32xf32>
    %cst_64 = arith.constant 1.000000e+00 : f32
    %122 = vector.broadcast %cst_64 : f32 to vector<8x32xf32>
    %123 = arith.addf %122, %121 : vector<8x32xf32>
    %124 = tpu.reciprocal %123 {approx = true} : vector<8x32xf32> -> vector<8x32xf32>
    %125 = arith.index_cast %101 : i32 to index
    %c0_65 = arith.constant 0 : index
    %126 = vector.load %arg27[%125, %c0_65] : memref<64x32xf32, #tpu.memory_space<vmem>>, vector<8x32xf32>
    %127 = arith.mulf %115, %106 : vector<8x32xf32>
    %128 = arith.addf %126, %127 : vector<8x32xf32>
    %129 = math.tanh %128 : vector<8x32xf32>
    %cst_66 = arith.constant 1.000000e+00 : f32
    %130 = vector.broadcast %cst_66 : f32 to vector<8x32xf32>
    %131 = arith.subf %130, %124 : vector<8x32xf32>
    %132 = arith.mulf %131, %129 : vector<8x32xf32>
    %133 = arith.mulf %124, %97 : vector<8x32xf32>
    %134 = arith.addf %132, %133 : vector<8x32xf32>
    %135 = arith.index_cast %101 : i32 to index
    %c0_67 = arith.constant 0 : index
    %136 = vector.load %arg24[%135, %c0_67] : memref<64x32xf32, #tpu.memory_space<vmem>>, vector<8x32xf32>
    tpu.vector_store %arg24[%135, %c0_67], %134 {strides = array<i32>} : memref<64x32xf32, #tpu.memory_space<vmem>>, vector<8x32xf32>,
    %c3_i32 = arith.constant 3 : i32
    %c8_i32_68 = arith.constant 8 : i32
    %137 = arith.muli %c3_i32, %c8_i32_68 : i32
    %138 = tpu.assume_multiple %137, 8 : i32
    %139 = arith.truncf %134 : vector<8x32xf32> to vector<8x32xbf16>
    %cst_69 = arith.constant dense<0.000000e+00> : vector<8x32xf32>
    %140 = tpu.matmul %139, %3, %cst_69 {dimension_numbers = #tpu.dot_dimension_numbers<[1], [0], [0], [1], [0, 0, 1, 1], [], []>} : vector<8x32xbf16>, vector<32x32xbf16>, vector<8x32xf32> -> vector<8x32xf32>
    %cst_70 = arith.constant dense<0.000000e+00> : vector<8x32xf32>
    %141 = tpu.matmul %139, %4, %cst_70 {dimension_numbers = #tpu.dot_dimension_numbers<[1], [0], [0], [1], [0, 0, 1, 1], [], []>} : vector<8x32xbf16>, vector<32x32xbf16>, vector<8x32xf32> -> vector<8x32xf32>
    %cst_71 = arith.constant dense<0.000000e+00> : vector<8x32xf32>
    %142 = tpu.matmul %139, %5, %cst_71 {dimension_numbers = #tpu.dot_dimension_numbers<[1], [0], [0], [1], [0, 0, 1, 1], [], []>} : vector<8x32xbf16>, vector<32x32xbf16>, vector<8x32xf32> -> vector<8x32xf32>
    %143 = arith.addf %142, %24 : vector<8x32xf32>
    %144 = arith.index_cast %138 : i32 to index
    %c0_72 = arith.constant 0 : index
    %145 = vector.load %arg25[%144, %c0_72] : memref<64x32xf32, #tpu.memory_space<vmem>>, vector<8x32xf32>
    %146 = arith.addf %145, %140 : vector<8x32xf32>
    %cst_73 = arith.constant 0.000000e+00 : f32
    %147 = vector.broadcast %cst_73 : f32 to vector<8x32xf32>
    %148 = arith.subf %147, %146 : vector<8x32xf32>
    %149 = math.exp %148 : vector<8x32xf32>
    %cst_74 = arith.constant 1.000000e+00 : f32
    %150 = vector.broadcast %cst_74 : f32 to vector<8x32xf32>
    %151 = arith.addf %150, %149 : vector<8x32xf32>
    %152 = tpu.reciprocal %151 {approx = true} : vector<8x32xf32> -> vector<8x32xf32>
    %153 = arith.index_cast %138 : i32 to index
    %c0_75 = arith.constant 0 : index
    %154 = vector.load %arg26[%153, %c0_75] : memref<64x32xf32, #tpu.memory_space<vmem>>, vector<8x32xf32>
    %155 = arith.addf %154, %141 : vector<8x32xf32>
    %cst_76 = arith.constant 0.000000e+00 : f32
    %156 = vector.broadcast %cst_76 : f32 to vector<8x32xf32>
    %157 = arith.subf %156, %155 : vector<8x32xf32>
    %158 = math.exp %157 : vector<8x32xf32>
    %cst_77 = arith.constant 1.000000e+00 : f32
    %159 = vector.broadcast %cst_77 : f32 to vector<8x32xf32>
    %160 = arith.addf %159, %158 : vector<8x32xf32>
    %161 = tpu.reciprocal %160 {approx = true} : vector<8x32xf32> -> vector<8x32xf32>
    %162 = arith.index_cast %138 : i32 to index
    %c0_78 = arith.constant 0 : index
    %163 = vector.load %arg27[%162, %c0_78] : memref<64x32xf32, #tpu.memory_space<vmem>>, vector<8x32xf32>
    %164 = arith.mulf %152, %143 : vector<8x32xf32>
    %165 = arith.addf %163, %164 : vector<8x32xf32>
    %166 = math.tanh %165 : vector<8x32xf32>
    %cst_79 = arith.constant 1.000000e+00 : f32
    %167 = vector.broadcast %cst_79 : f32 to vector<8x32xf32>
    %168 = arith.subf %167, %161 : vector<8x32xf32>
    %169 = arith.mulf %168, %166 : vector<8x32xf32>
    %170 = arith.mulf %161, %134 : vector<8x32xf32>
    %171 = arith.addf %169, %170 : vector<8x32xf32>
    %172 = arith.index_cast %138 : i32 to index
    %c0_80 = arith.constant 0 : index
    %173 = vector.load %arg24[%172, %c0_80] : memref<64x32xf32, #tpu.memory_space<vmem>>, vector<8x32xf32>
    tpu.vector_store %arg24[%172, %c0_80], %171 {strides = array<i32>} : memref<64x32xf32, #tpu.memory_space<vmem>>, vector<8x32xf32>,
    %c4_i32 = arith.constant 4 : i32
    %c8_i32_81 = arith.constant 8 : i32
    %174 = arith.muli %c4_i32, %c8_i32_81 : i32
    %175 = tpu.assume_multiple %174, 8 : i32
    %176 = arith.truncf %171 : vector<8x32xf32> to vector<8x32xbf16>
    %cst_82 = arith.constant dense<0.000000e+00> : vector<8x32xf32>
    %177 = tpu.matmul %176, %3, %cst_82 {dimension_numbers = #tpu.dot_dimension_numbers<[1], [0], [0], [1], [0, 0, 1, 1], [], []>} : vector<8x32xbf16>, vector<32x32xbf16>, vector<8x32xf32> -> vector<8x32xf32>
    %cst_83 = arith.constant dense<0.000000e+00> : vector<8x32xf32>
    %178 = tpu.matmul %176, %4, %cst_83 {dimension_numbers = #tpu.dot_dimension_numbers<[1], [0], [0], [1], [0, 0, 1, 1], [], []>} : vector<8x32xbf16>, vector<32x32xbf16>, vector<8x32xf32> -> vector<8x32xf32>
    %cst_84 = arith.constant dense<0.000000e+00> : vector<8x32xf32>
    %179 = tpu.matmul %176, %5, %cst_84 {dimension_numbers = #tpu.dot_dimension_numbers<[1], [0], [0], [1], [0, 0, 1, 1], [], []>} : vector<8x32xbf16>, vector<32x32xbf16>, vector<8x32xf32> -> vector<8x32xf32>
    %180 = arith.addf %179, %24 : vector<8x32xf32>
    %181 = arith.index_cast %175 : i32 to index
    %c0_85 = arith.constant 0 : index
    %182 = vector.load %arg25[%181, %c0_85] : memref<64x32xf32, #tpu.memory_space<vmem>>, vector<8x32xf32>
    %183 = arith.addf %182, %177 : vector<8x32xf32>
    %cst_86 = arith.constant 0.000000e+00 : f32
    %184 = vector.broadcast %cst_86 : f32 to vector<8x32xf32>
    %185 = arith.subf %184, %183 : vector<8x32xf32>
    %186 = math.exp %185 : vector<8x32xf32>
    %cst_87 = arith.constant 1.000000e+00 : f32
    %187 = vector.broadcast %cst_87 : f32 to vector<8x32xf32>
    %188 = arith.addf %187, %186 : vector<8x32xf32>
    %189 = tpu.reciprocal %188 {approx = true} : vector<8x32xf32> -> vector<8x32xf32>
    %190 = arith.index_cast %175 : i32 to index
    %c0_88 = arith.constant 0 : index
    %191 = vector.load %arg26[%190, %c0_88] : memref<64x32xf32, #tpu.memory_space<vmem>>, vector<8x32xf32>
    %192 = arith.addf %191, %178 : vector<8x32xf32>
    %cst_89 = arith.constant 0.000000e+00 : f32
    %193 = vector.broadcast %cst_89 : f32 to vector<8x32xf32>
    %194 = arith.subf %193, %192 : vector<8x32xf32>
    %195 = math.exp %194 : vector<8x32xf32>
    %cst_90 = arith.constant 1.000000e+00 : f32
    %196 = vector.broadcast %cst_90 : f32 to vector<8x32xf32>
    %197 = arith.addf %196, %195 : vector<8x32xf32>
    %198 = tpu.reciprocal %197 {approx = true} : vector<8x32xf32> -> vector<8x32xf32>
    %199 = arith.index_cast %175 : i32 to index
    %c0_91 = arith.constant 0 : index
    %200 = vector.load %arg27[%199, %c0_91] : memref<64x32xf32, #tpu.memory_space<vmem>>, vector<8x32xf32>
    %201 = arith.mulf %189, %180 : vector<8x32xf32>
    %202 = arith.addf %200, %201 : vector<8x32xf32>
    %203 = math.tanh %202 : vector<8x32xf32>
    %cst_92 = arith.constant 1.000000e+00 : f32
    %204 = vector.broadcast %cst_92 : f32 to vector<8x32xf32>
    %205 = arith.subf %204, %198 : vector<8x32xf32>
    %206 = arith.mulf %205, %203 : vector<8x32xf32>
    %207 = arith.mulf %198, %171 : vector<8x32xf32>
    %208 = arith.addf %206, %207 : vector<8x32xf32>
    %209 = arith.index_cast %175 : i32 to index
    %c0_93 = arith.constant 0 : index
    %210 = vector.load %arg24[%209, %c0_93] : memref<64x32xf32, #tpu.memory_space<vmem>>, vector<8x32xf32>
    tpu.vector_store %arg24[%209, %c0_93], %208 {strides = array<i32>} : memref<64x32xf32, #tpu.memory_space<vmem>>, vector<8x32xf32>,
    %c5_i32 = arith.constant 5 : i32
    %c8_i32_94 = arith.constant 8 : i32
    %211 = arith.muli %c5_i32, %c8_i32_94 : i32
    %212 = tpu.assume_multiple %211, 8 : i32
    %213 = arith.truncf %208 : vector<8x32xf32> to vector<8x32xbf16>
    %cst_95 = arith.constant dense<0.000000e+00> : vector<8x32xf32>
    %214 = tpu.matmul %213, %3, %cst_95 {dimension_numbers = #tpu.dot_dimension_numbers<[1], [0], [0], [1], [0, 0, 1, 1], [], []>} : vector<8x32xbf16>, vector<32x32xbf16>, vector<8x32xf32> -> vector<8x32xf32>
    %cst_96 = arith.constant dense<0.000000e+00> : vector<8x32xf32>
    %215 = tpu.matmul %213, %4, %cst_96 {dimension_numbers = #tpu.dot_dimension_numbers<[1], [0], [0], [1], [0, 0, 1, 1], [], []>} : vector<8x32xbf16>, vector<32x32xbf16>, vector<8x32xf32> -> vector<8x32xf32>
    %cst_97 = arith.constant dense<0.000000e+00> : vector<8x32xf32>
    %216 = tpu.matmul %213, %5, %cst_97 {dimension_numbers = #tpu.dot_dimension_numbers<[1], [0], [0], [1], [0, 0, 1, 1], [], []>} : vector<8x32xbf16>, vector<32x32xbf16>, vector<8x32xf32> -> vector<8x32xf32>
    %217 = arith.addf %216, %24 : vector<8x32xf32>
    %218 = arith.index_cast %212 : i32 to index
    %c0_98 = arith.constant 0 : index
    %219 = vector.load %arg25[%218, %c0_98] : memref<64x32xf32, #tpu.memory_space<vmem>>, vector<8x32xf32>
    %220 = arith.addf %219, %214 : vector<8x32xf32>
    %cst_99 = arith.constant 0.000000e+00 : f32
    %221 = vector.broadcast %cst_99 : f32 to vector<8x32xf32>
    %222 = arith.subf %221, %220 : vector<8x32xf32>
    %223 = math.exp %222 : vector<8x32xf32>
    %cst_100 = arith.constant 1.000000e+00 : f32
    %224 = vector.broadcast %cst_100 : f32 to vector<8x32xf32>
    %225 = arith.addf %224, %223 : vector<8x32xf32>
    %226 = tpu.reciprocal %225 {approx = true} : vector<8x32xf32> -> vector<8x32xf32>
    %227 = arith.index_cast %212 : i32 to index
    %c0_101 = arith.constant 0 : index
    %228 = vector.load %arg26[%227, %c0_101] : memref<64x32xf32, #tpu.memory_space<vmem>>, vector<8x32xf32>
    %229 = arith.addf %228, %215 : vector<8x32xf32>
    %cst_102 = arith.constant 0.000000e+00 : f32
    %230 = vector.broadcast %cst_102 : f32 to vector<8x32xf32>
    %231 = arith.subf %230, %229 : vector<8x32xf32>
    %232 = math.exp %231 : vector<8x32xf32>
    %cst_103 = arith.constant 1.000000e+00 : f32
    %233 = vector.broadcast %cst_103 : f32 to vector<8x32xf32>
    %234 = arith.addf %233, %232 : vector<8x32xf32>
    %235 = tpu.reciprocal %234 {approx = true} : vector<8x32xf32> -> vector<8x32xf32>
    %236 = arith.index_cast %212 : i32 to index
    %c0_104 = arith.constant 0 : index
    %237 = vector.load %arg27[%236, %c0_104] : memref<64x32xf32, #tpu.memory_space<vmem>>, vector<8x32xf32>
    %238 = arith.mulf %226, %217 : vector<8x32xf32>
    %239 = arith.addf %237, %238 : vector<8x32xf32>
    %240 = math.tanh %239 : vector<8x32xf32>
    %cst_105 = arith.constant 1.000000e+00 : f32
    %241 = vector.broadcast %cst_105 : f32 to vector<8x32xf32>
    %242 = arith.subf %241, %235 : vector<8x32xf32>
    %243 = arith.mulf %242, %240 : vector<8x32xf32>
    %244 = arith.mulf %235, %208 : vector<8x32xf32>
    %245 = arith.addf %243, %244 : vector<8x32xf32>
    %246 = arith.index_cast %212 : i32 to index
    %c0_106 = arith.constant 0 : index
    %247 = vector.load %arg24[%246, %c0_106] : memref<64x32xf32, #tpu.memory_space<vmem>>, vector<8x32xf32>
    tpu.vector_store %arg24[%246, %c0_106], %245 {strides = array<i32>} : memref<64x32xf32, #tpu.memory_space<vmem>>, vector<8x32xf32>,
    %c6_i32 = arith.constant 6 : i32
    %c8_i32_107 = arith.constant 8 : i32
    %248 = arith.muli %c6_i32, %c8_i32_107 : i32
    %249 = tpu.assume_multiple %248, 8 : i32
    %250 = arith.truncf %245 : vector<8x32xf32> to vector<8x32xbf16>
    %cst_108 = arith.constant dense<0.000000e+00> : vector<8x32xf32>
    %251 = tpu.matmul %250, %3, %cst_108 {dimension_numbers = #tpu.dot_dimension_numbers<[1], [0], [0], [1], [0, 0, 1, 1], [], []>} : vector<8x32xbf16>, vector<32x32xbf16>, vector<8x32xf32> -> vector<8x32xf32>
    %cst_109 = arith.constant dense<0.000000e+00> : vector<8x32xf32>
    %252 = tpu.matmul %250, %4, %cst_109 {dimension_numbers = #tpu.dot_dimension_numbers<[1], [0], [0], [1], [0, 0, 1, 1], [], []>} : vector<8x32xbf16>, vector<32x32xbf16>, vector<8x32xf32> -> vector<8x32xf32>
    %cst_110 = arith.constant dense<0.000000e+00> : vector<8x32xf32>
    %253 = tpu.matmul %250, %5, %cst_110 {dimension_numbers = #tpu.dot_dimension_numbers<[1], [0], [0], [1], [0, 0, 1, 1], [], []>} : vector<8x32xbf16>, vector<32x32xbf16>, vector<8x32xf32> -> vector<8x32xf32>
    %254 = arith.addf %253, %24 : vector<8x32xf32>
    %255 = arith.index_cast %249 : i32 to index
    %c0_111 = arith.constant 0 : index
    %256 = vector.load %arg25[%255, %c0_111] : memref<64x32xf32, #tpu.memory_space<vmem>>, vector<8x32xf32>
    %257 = arith.addf %256, %251 : vector<8x32xf32>
    %cst_112 = arith.constant 0.000000e+00 : f32
    %258 = vector.broadcast %cst_112 : f32 to vector<8x32xf32>
    %259 = arith.subf %258, %257 : vector<8x32xf32>
    %260 = math.exp %259 : vector<8x32xf32>
    %cst_113 = arith.constant 1.000000e+00 : f32
    %261 = vector.broadcast %cst_113 : f32 to vector<8x32xf32>
    %262 = arith.addf %261, %260 : vector<8x32xf32>
    %263 = tpu.reciprocal %262 {approx = true} : vector<8x32xf32> -> vector<8x32xf32>
    %264 = arith.index_cast %249 : i32 to index
    %c0_114 = arith.constant 0 : index
    %265 = vector.load %arg26[%264, %c0_114] : memref<64x32xf32, #tpu.memory_space<vmem>>, vector<8x32xf32>
    %266 = arith.addf %265, %252 : vector<8x32xf32>
    %cst_115 = arith.constant 0.000000e+00 : f32
    %267 = vector.broadcast %cst_115 : f32 to vector<8x32xf32>
    %268 = arith.subf %267, %266 : vector<8x32xf32>
    %269 = math.exp %268 : vector<8x32xf32>
    %cst_116 = arith.constant 1.000000e+00 : f32
    %270 = vector.broadcast %cst_116 : f32 to vector<8x32xf32>
    %271 = arith.addf %270, %269 : vector<8x32xf32>
    %272 = tpu.reciprocal %271 {approx = true} : vector<8x32xf32> -> vector<8x32xf32>
    %273 = arith.index_cast %249 : i32 to index
    %c0_117 = arith.constant 0 : index
    %274 = vector.load %arg27[%273, %c0_117] : memref<64x32xf32, #tpu.memory_space<vmem>>, vector<8x32xf32>
    %275 = arith.mulf %263, %254 : vector<8x32xf32>
    %276 = arith.addf %274, %275 : vector<8x32xf32>
    %277 = math.tanh %276 : vector<8x32xf32>
    %cst_118 = arith.constant 1.000000e+00 : f32
    %278 = vector.broadcast %cst_118 : f32 to vector<8x32xf32>
    %279 = arith.subf %278, %272 : vector<8x32xf32>
    %280 = arith.mulf %279, %277 : vector<8x32xf32>
    %281 = arith.mulf %272, %245 : vector<8x32xf32>
    %282 = arith.addf %280, %281 : vector<8x32xf32>
    %283 = arith.index_cast %249 : i32 to index
    %c0_119 = arith.constant 0 : index
    %284 = vector.load %arg24[%283, %c0_119] : memref<64x32xf32, #tpu.memory_space<vmem>>, vector<8x32xf32>
    tpu.vector_store %arg24[%283, %c0_119], %282 {strides = array<i32>} : memref<64x32xf32, #tpu.memory_space<vmem>>, vector<8x32xf32>,
    %c7_i32 = arith.constant 7 : i32
    %c8_i32_120 = arith.constant 8 : i32
    %285 = arith.muli %c7_i32, %c8_i32_120 : i32
    %286 = tpu.assume_multiple %285, 8 : i32
    %287 = arith.truncf %282 : vector<8x32xf32> to vector<8x32xbf16>
    %cst_121 = arith.constant dense<0.000000e+00> : vector<8x32xf32>
    %288 = tpu.matmul %287, %3, %cst_121 {dimension_numbers = #tpu.dot_dimension_numbers<[1], [0], [0], [1], [0, 0, 1, 1], [], []>} : vector<8x32xbf16>, vector<32x32xbf16>, vector<8x32xf32> -> vector<8x32xf32>
    %cst_122 = arith.constant dense<0.000000e+00> : vector<8x32xf32>
    %289 = tpu.matmul %287, %4, %cst_122 {dimension_numbers = #tpu.dot_dimension_numbers<[1], [0], [0], [1], [0, 0, 1, 1], [], []>} : vector<8x32xbf16>, vector<32x32xbf16>, vector<8x32xf32> -> vector<8x32xf32>
    %cst_123 = arith.constant dense<0.000000e+00> : vector<8x32xf32>
    %290 = tpu.matmul %287, %5, %cst_123 {dimension_numbers = #tpu.dot_dimension_numbers<[1], [0], [0], [1], [0, 0, 1, 1], [], []>} : vector<8x32xbf16>, vector<32x32xbf16>, vector<8x32xf32> -> vector<8x32xf32>
    %291 = arith.addf %290, %24 : vector<8x32xf32>
    %292 = arith.index_cast %286 : i32 to index
    %c0_124 = arith.constant 0 : index
    %293 = vector.load %arg25[%292, %c0_124] : memref<64x32xf32, #tpu.memory_space<vmem>>, vector<8x32xf32>
    %294 = arith.addf %293, %288 : vector<8x32xf32>
    %cst_125 = arith.constant 0.000000e+00 : f32
    %295 = vector.broadcast %cst_125 : f32 to vector<8x32xf32>
    %296 = arith.subf %295, %294 : vector<8x32xf32>
    %297 = math.exp %296 : vector<8x32xf32>
    %cst_126 = arith.constant 1.000000e+00 : f32
    %298 = vector.broadcast %cst_126 : f32 to vector<8x32xf32>
    %299 = arith.addf %298, %297 : vector<8x32xf32>
    %300 = tpu.reciprocal %299 {approx = true} : vector<8x32xf32> -> vector<8x32xf32>
    %301 = arith.index_cast %286 : i32 to index
    %c0_127 = arith.constant 0 : index
    %302 = vector.load %arg26[%301, %c0_127] : memref<64x32xf32, #tpu.memory_space<vmem>>, vector<8x32xf32>
    %303 = arith.addf %302, %289 : vector<8x32xf32>
    %cst_128 = arith.constant 0.000000e+00 : f32
    %304 = vector.broadcast %cst_128 : f32 to vector<8x32xf32>
    %305 = arith.subf %304, %303 : vector<8x32xf32>
    %306 = math.exp %305 : vector<8x32xf32>
    %cst_129 = arith.constant 1.000000e+00 : f32
    %307 = vector.broadcast %cst_129 : f32 to vector<8x32xf32>
    %308 = arith.addf %307, %306 : vector<8x32xf32>
    %309 = tpu.reciprocal %308 {approx = true} : vector<8x32xf32> -> vector<8x32xf32>
    %310 = arith.index_cast %286 : i32 to index
    %c0_130 = arith.constant 0 : index
    %311 = vector.load %arg27[%310, %c0_130] : memref<64x32xf32, #tpu.memory_space<vmem>>, vector<8x32xf32>
    %312 = arith.mulf %300, %291 : vector<8x32xf32>
    %313 = arith.addf %311, %312 : vector<8x32xf32>
    %314 = math.tanh %313 : vector<8x32xf32>
    %cst_131 = arith.constant 1.000000e+00 : f32
    %315 = vector.broadcast %cst_131 : f32 to vector<8x32xf32>
    %316 = arith.subf %315, %309 : vector<8x32xf32>
    %317 = arith.mulf %316, %314 : vector<8x32xf32>
    %318 = arith.mulf %309, %282 : vector<8x32xf32>
    %319 = arith.addf %317, %318 : vector<8x32xf32>
    %320 = arith.index_cast %286 : i32 to index
    %c0_132 = arith.constant 0 : index
    %321 = vector.load %arg24[%320, %c0_132] : memref<64x32xf32, #tpu.memory_space<vmem>>, vector<8x32xf32>
    tpu.vector_store %arg24[%320, %c0_132], %319 {strides = array<i32>} : memref<64x32xf32, #tpu.memory_space<vmem>>, vector<8x32xf32>,
    %c8_i32_133 = arith.constant 8 : i32
    %c0_134 = arith.constant 0 : index
    %c0_135 = arith.constant 0 : index
    %322 = vector.load %arg11[%c0_134, %c0_135] : memref<32x32xbf16, #tpu.memory_space<vmem>>, vector<32x32xbf16>
    %c0_136 = arith.constant 0 : index
    %c0_137 = arith.constant 0 : index
    %323 = vector.load %arg12[%c0_136, %c0_137] : memref<32x32xbf16, #tpu.memory_space<vmem>>, vector<32x32xbf16>
    %c0_138 = arith.constant 0 : index
    %c0_139 = arith.constant 0 : index
    %324 = vector.load %arg13[%c0_138, %c0_139] : memref<32x32xbf16, #tpu.memory_space<vmem>>, vector<32x32xbf16>
    %c0_140 = arith.constant 0 : index
    %c0_141 = arith.constant 0 : index
    %325 = vector.load %arg14[%c0_140, %c0_141] : memref<32x32xbf16, #tpu.memory_space<vmem>>, vector<32x32xbf16>
    %c0_142 = arith.constant 0 : index
    %c0_143 = arith.constant 0 : index
    %326 = vector.load %arg15[%c0_142, %c0_143] : memref<32x32xbf16, #tpu.memory_space<vmem>>, vector<32x32xbf16>
    %c0_144 = arith.constant 0 : index
    %c0_145 = arith.constant 0 : index
    %327 = vector.load %arg16[%c0_144, %c0_145] : memref<32x32xbf16, #tpu.memory_space<vmem>>, vector<32x32xbf16>
    %c0_146 = arith.constant 0 : index
    %c0_147 = arith.constant 0 : index
    %328 = vector.load %arg17[%c0_146, %c0_147] : memref<1x32xf32, #tpu.memory_space<vmem>>, vector<1x32xf32>
    %c0_148 = arith.constant 0 : index
    %c0_149 = arith.constant 0 : index
    %329 = vector.load %arg18[%c0_148, %c0_149] : memref<1x32xf32, #tpu.memory_space<vmem>>, vector<1x32xf32>
    %c0_150 = arith.constant 0 : index
    %c0_151 = arith.constant 0 : index
    %330 = vector.load %arg19[%c0_150, %c0_151] : memref<1x32xf32, #tpu.memory_space<vmem>>, vector<1x32xf32>
    %c0_152 = arith.constant 0 : index
    %c0_153 = arith.constant 0 : index
    %331 = vector.load %arg20[%c0_152, %c0_153] : memref<1x32xf32, #tpu.memory_space<vmem>>, vector<1x32xf32>
    %c0_154 = arith.constant 0 : index
    %c0_155 = arith.constant 0 : index
    %332 = vector.load %arg24[%c0_154, %c0_155] : memref<64x32xf32, #tpu.memory_space<vmem>>, vector<64x32xf32>
    %333 = arith.truncf %332 : vector<64x32xf32> to vector<64x32xbf16>
    %cst_156 = arith.constant dense<0.000000e+00> : vector<64x32xf32>
    %334 = tpu.matmul %333, %322, %cst_156 {dimension_numbers = #tpu.dot_dimension_numbers<[1], [0], [0], [1], [0, 0, 1, 1], [], []>} : vector<64x32xbf16>, vector<32x32xbf16>, vector<64x32xf32> -> vector<64x32xf32>
    %335 = vector.broadcast %328 : vector<1x32xf32> to vector<64x32xf32>
    %336 = arith.addf %334, %335 : vector<64x32xf32>
    %c0_157 = arith.constant 0 : index
    %c0_158 = arith.constant 0 : index
    %337 = vector.load %arg25[%c0_157, %c0_158] : memref<64x32xf32, #tpu.memory_space<vmem>>, vector<64x32xf32>
    tpu.vector_store %arg25[%c0_157, %c0_158], %336 {strides = array<i32>} : memref<64x32xf32, #tpu.memory_space<vmem>>, vector<64x32xf32>,
    %cst_159 = arith.constant dense<0.000000e+00> : vector<64x32xf32>
    %338 = tpu.matmul %333, %323, %cst_159 {dimension_numbers = #tpu.dot_dimension_numbers<[1], [0], [0], [1], [0, 0, 1, 1], [], []>} : vector<64x32xbf16>, vector<32x32xbf16>, vector<64x32xf32> -> vector<64x32xf32>
    %339 = vector.broadcast %329 : vector<1x32xf32> to vector<64x32xf32>
    %340 = arith.addf %338, %339 : vector<64x32xf32>
    %c0_160 = arith.constant 0 : index
    %c0_161 = arith.constant 0 : index
    %341 = vector.load %arg26[%c0_160, %c0_161] : memref<64x32xf32, #tpu.memory_space<vmem>>, vector<64x32xf32>
    tpu.vector_store %arg26[%c0_160, %c0_161], %340 {strides = array<i32>} : memref<64x32xf32, #tpu.memory_space<vmem>>, vector<64x32xf32>,
    %cst_162 = arith.constant dense<0.000000e+00> : vector<64x32xf32>
    %342 = tpu.matmul %333, %324, %cst_162 {dimension_numbers = #tpu.dot_dimension_numbers<[1], [0], [0], [1], [0, 0, 1, 1], [], []>} : vector<64x32xbf16>, vector<32x32xbf16>, vector<64x32xf32> -> vector<64x32xf32>
    %343 = vector.broadcast %330 : vector<1x32xf32> to vector<64x32xf32>
    %344 = arith.addf %342, %343 : vector<64x32xf32>
    %c0_163 = arith.constant 0 : index
    %c0_164 = arith.constant 0 : index
    %345 = vector.load %arg27[%c0_163, %c0_164] : memref<64x32xf32, #tpu.memory_space<vmem>>, vector<64x32xf32>
    tpu.vector_store %arg27[%c0_163, %c0_164], %344 {strides = array<i32>} : memref<64x32xf32, #tpu.memory_space<vmem>>, vector<64x32xf32>,
    %346 = vector.shape_cast %331 : vector<1x32xf32> to vector<1x32xf32>
    %347 = vector.broadcast %346 : vector<1x32xf32> to vector<8x32xf32>
    %cst_165 = arith.constant 0.000000e+00 : f32
    %348 = vector.broadcast %cst_165 : f32 to vector<8x32xf32>
    %c0_i32_166 = arith.constant 0 : i32
    %c8_i32_167 = arith.constant 8 : i32
    %349 = arith.muli %c0_i32_166, %c8_i32_167 : i32
    %350 = tpu.assume_multiple %349, 8 : i32
    %351 = arith.truncf %348 : vector<8x32xf32> to vector<8x32xbf16>
    %cst_168 = arith.constant dense<0.000000e+00> : vector<8x32xf32>
    %352 = tpu.matmul %351, %325, %cst_168 {dimension_numbers = #tpu.dot_dimension_numbers<[1], [0], [0], [1], [0, 0, 1, 1], [], []>} : vector<8x32xbf16>, vector<32x32xbf16>, vector<8x32xf32> -> vector<8x32xf32>
    %cst_169 = arith.constant dense<0.000000e+00> : vector<8x32xf32>
    %353 = tpu.matmul %351, %326, %cst_169 {dimension_numbers = #tpu.dot_dimension_numbers<[1], [0], [0], [1], [0, 0, 1, 1], [], []>} : vector<8x32xbf16>, vector<32x32xbf16>, vector<8x32xf32> -> vector<8x32xf32>
    %cst_170 = arith.constant dense<0.000000e+00> : vector<8x32xf32>
    %354 = tpu.matmul %351, %327, %cst_170 {dimension_numbers = #tpu.dot_dimension_numbers<[1], [0], [0], [1], [0, 0, 1, 1], [], []>} : vector<8x32xbf16>, vector<32x32xbf16>, vector<8x32xf32> -> vector<8x32xf32>
    %355 = arith.addf %354, %347 : vector<8x32xf32>
    %356 = arith.index_cast %350 : i32 to index
    %c0_171 = arith.constant 0 : index
    %357 = vector.load %arg25[%356, %c0_171] : memref<64x32xf32, #tpu.memory_space<vmem>>, vector<8x32xf32>
    %358 = arith.addf %357, %352 : vector<8x32xf32>
    %cst_172 = arith.constant 0.000000e+00 : f32
    %359 = vector.broadcast %cst_172 : f32 to vector<8x32xf32>
    %360 = arith.subf %359, %358 : vector<8x32xf32>
    %361 = math.exp %360 : vector<8x32xf32>
    %cst_173 = arith.constant 1.000000e+00 : f32
    %362 = vector.broadcast %cst_173 : f32 to vector<8x32xf32>
    %363 = arith.addf %362, %361 : vector<8x32xf32>
    %364 = tpu.reciprocal %363 {approx = true} : vector<8x32xf32> -> vector<8x32xf32>
    %365 = arith.index_cast %350 : i32 to index
    %c0_174 = arith.constant 0 : index
    %366 = vector.load %arg26[%365, %c0_174] : memref<64x32xf32, #tpu.memory_space<vmem>>, vector<8x32xf32>
    %367 = arith.addf %366, %353 : vector<8x32xf32>
    %cst_175 = arith.constant 0.000000e+00 : f32
    %368 = vector.broadcast %cst_175 : f32 to vector<8x32xf32>
    %369 = arith.subf %368, %367 : vector<8x32xf32>
    %370 = math.exp %369 : vector<8x32xf32>
    %cst_176 = arith.constant 1.000000e+00 : f32
    %371 = vector.broadcast %cst_176 : f32 to vector<8x32xf32>
    %372 = arith.addf %371, %370 : vector<8x32xf32>
    %373 = tpu.reciprocal %372 {approx = true} : vector<8x32xf32> -> vector<8x32xf32>
    %374 = arith.index_cast %350 : i32 to index
    %c0_177 = arith.constant 0 : index
    %375 = vector.load %arg27[%374, %c0_177] : memref<64x32xf32, #tpu.memory_space<vmem>>, vector<8x32xf32>
    %376 = arith.mulf %364, %355 : vector<8x32xf32>
    %377 = arith.addf %375, %376 : vector<8x32xf32>
    %378 = math.tanh %377 : vector<8x32xf32>
    %cst_178 = arith.constant 1.000000e+00 : f32
    %379 = vector.broadcast %cst_178 : f32 to vector<8x32xf32>
    %380 = arith.subf %379, %373 : vector<8x32xf32>
    %381 = arith.mulf %380, %378 : vector<8x32xf32>
    %382 = arith.mulf %373, %348 : vector<8x32xf32>
    %383 = arith.addf %381, %382 : vector<8x32xf32>
    %c1_i32_179 = arith.constant 1 : i32
    %c8_i32_180 = arith.constant 8 : i32
    %384 = arith.muli %c1_i32_179, %c8_i32_180 : i32
    %385 = tpu.assume_multiple %384, 8 : i32
    %386 = arith.truncf %383 : vector<8x32xf32> to vector<8x32xbf16>
    %cst_181 = arith.constant dense<0.000000e+00> : vector<8x32xf32>
    %387 = tpu.matmul %386, %325, %cst_181 {dimension_numbers = #tpu.dot_dimension_numbers<[1], [0], [0], [1], [0, 0, 1, 1], [], []>} : vector<8x32xbf16>, vector<32x32xbf16>, vector<8x32xf32> -> vector<8x32xf32>
    %cst_182 = arith.constant dense<0.000000e+00> : vector<8x32xf32>
    %388 = tpu.matmul %386, %326, %cst_182 {dimension_numbers = #tpu.dot_dimension_numbers<[1], [0], [0], [1], [0, 0, 1, 1], [], []>} : vector<8x32xbf16>, vector<32x32xbf16>, vector<8x32xf32> -> vector<8x32xf32>
    %cst_183 = arith.constant dense<0.000000e+00> : vector<8x32xf32>
    %389 = tpu.matmul %386, %327, %cst_183 {dimension_numbers = #tpu.dot_dimension_numbers<[1], [0], [0], [1], [0, 0, 1, 1], [], []>} : vector<8x32xbf16>, vector<32x32xbf16>, vector<8x32xf32> -> vector<8x32xf32>
    %390 = arith.addf %389, %347 : vector<8x32xf32>
    %391 = arith.index_cast %385 : i32 to index
    %c0_184 = arith.constant 0 : index
    %392 = vector.load %arg25[%391, %c0_184] : memref<64x32xf32, #tpu.memory_space<vmem>>, vector<8x32xf32>
    %393 = arith.addf %392, %387 : vector<8x32xf32>
    %cst_185 = arith.constant 0.000000e+00 : f32
    %394 = vector.broadcast %cst_185 : f32 to vector<8x32xf32>
    %395 = arith.subf %394, %393 : vector<8x32xf32>
    %396 = math.exp %395 : vector<8x32xf32>
    %cst_186 = arith.constant 1.000000e+00 : f32
    %397 = vector.broadcast %cst_186 : f32 to vector<8x32xf32>
    %398 = arith.addf %397, %396 : vector<8x32xf32>
    %399 = tpu.reciprocal %398 {approx = true} : vector<8x32xf32> -> vector<8x32xf32>
    %400 = arith.index_cast %385 : i32 to index
    %c0_187 = arith.constant 0 : index
    %401 = vector.load %arg26[%400, %c0_187] : memref<64x32xf32, #tpu.memory_space<vmem>>, vector<8x32xf32>
    %402 = arith.addf %401, %388 : vector<8x32xf32>
    %cst_188 = arith.constant 0.000000e+00 : f32
    %403 = vector.broadcast %cst_188 : f32 to vector<8x32xf32>
    %404 = arith.subf %403, %402 : vector<8x32xf32>
    %405 = math.exp %404 : vector<8x32xf32>
    %cst_189 = arith.constant 1.000000e+00 : f32
    %406 = vector.broadcast %cst_189 : f32 to vector<8x32xf32>
    %407 = arith.addf %406, %405 : vector<8x32xf32>
    %408 = tpu.reciprocal %407 {approx = true} : vector<8x32xf32> -> vector<8x32xf32>
    %409 = arith.index_cast %385 : i32 to index
    %c0_190 = arith.constant 0 : index
    %410 = vector.load %arg27[%409, %c0_190] : memref<64x32xf32, #tpu.memory_space<vmem>>, vector<8x32xf32>
    %411 = arith.mulf %399, %390 : vector<8x32xf32>
    %412 = arith.addf %410, %411 : vector<8x32xf32>
    %413 = math.tanh %412 : vector<8x32xf32>
    %cst_191 = arith.constant 1.000000e+00 : f32
    %414 = vector.broadcast %cst_191 : f32 to vector<8x32xf32>
    %415 = arith.subf %414, %408 : vector<8x32xf32>
    %416 = arith.mulf %415, %413 : vector<8x32xf32>
    %417 = arith.mulf %408, %383 : vector<8x32xf32>
    %418 = arith.addf %416, %417 : vector<8x32xf32>
    %c2_i32_192 = arith.constant 2 : i32
    %c8_i32_193 = arith.constant 8 : i32
    %419 = arith.muli %c2_i32_192, %c8_i32_193 : i32
    %420 = tpu.assume_multiple %419, 8 : i32
    %421 = arith.truncf %418 : vector<8x32xf32> to vector<8x32xbf16>
    %cst_194 = arith.constant dense<0.000000e+00> : vector<8x32xf32>
    %422 = tpu.matmul %421, %325, %cst_194 {dimension_numbers = #tpu.dot_dimension_numbers<[1], [0], [0], [1], [0, 0, 1, 1], [], []>} : vector<8x32xbf16>, vector<32x32xbf16>, vector<8x32xf32> -> vector<8x32xf32>
    %cst_195 = arith.constant dense<0.000000e+00> : vector<8x32xf32>
    %423 = tpu.matmul %421, %326, %cst_195 {dimension_numbers = #tpu.dot_dimension_numbers<[1], [0], [0], [1], [0, 0, 1, 1], [], []>} : vector<8x32xbf16>, vector<32x32xbf16>, vector<8x32xf32> -> vector<8x32xf32>
    %cst_196 = arith.constant dense<0.000000e+00> : vector<8x32xf32>
    %424 = tpu.matmul %421, %327, %cst_196 {dimension_numbers = #tpu.dot_dimension_numbers<[1], [0], [0], [1], [0, 0, 1, 1], [], []>} : vector<8x32xbf16>, vector<32x32xbf16>, vector<8x32xf32> -> vector<8x32xf32>
    %425 = arith.addf %424, %347 : vector<8x32xf32>
    %426 = arith.index_cast %420 : i32 to index
    %c0_197 = arith.constant 0 : index
    %427 = vector.load %arg25[%426, %c0_197] : memref<64x32xf32, #tpu.memory_space<vmem>>, vector<8x32xf32>
    %428 = arith.addf %427, %422 : vector<8x32xf32>
    %cst_198 = arith.constant 0.000000e+00 : f32
    %429 = vector.broadcast %cst_198 : f32 to vector<8x32xf32>
    %430 = arith.subf %429, %428 : vector<8x32xf32>
    %431 = math.exp %430 : vector<8x32xf32>
    %cst_199 = arith.constant 1.000000e+00 : f32
    %432 = vector.broadcast %cst_199 : f32 to vector<8x32xf32>
    %433 = arith.addf %432, %431 : vector<8x32xf32>
    %434 = tpu.reciprocal %433 {approx = true} : vector<8x32xf32> -> vector<8x32xf32>
    %435 = arith.index_cast %420 : i32 to index
    %c0_200 = arith.constant 0 : index
    %436 = vector.load %arg26[%435, %c0_200] : memref<64x32xf32, #tpu.memory_space<vmem>>, vector<8x32xf32>
    %437 = arith.addf %436, %423 : vector<8x32xf32>
    %cst_201 = arith.constant 0.000000e+00 : f32
    %438 = vector.broadcast %cst_201 : f32 to vector<8x32xf32>
    %439 = arith.subf %438, %437 : vector<8x32xf32>
    %440 = math.exp %439 : vector<8x32xf32>
    %cst_202 = arith.constant 1.000000e+00 : f32
    %441 = vector.broadcast %cst_202 : f32 to vector<8x32xf32>
    %442 = arith.addf %441, %440 : vector<8x32xf32>
    %443 = tpu.reciprocal %442 {approx = true} : vector<8x32xf32> -> vector<8x32xf32>
    %444 = arith.index_cast %420 : i32 to index
    %c0_203 = arith.constant 0 : index
    %445 = vector.load %arg27[%444, %c0_203] : memref<64x32xf32, #tpu.memory_space<vmem>>, vector<8x32xf32>
    %446 = arith.mulf %434, %425 : vector<8x32xf32>
    %447 = arith.addf %445, %446 : vector<8x32xf32>
    %448 = math.tanh %447 : vector<8x32xf32>
    %cst_204 = arith.constant 1.000000e+00 : f32
    %449 = vector.broadcast %cst_204 : f32 to vector<8x32xf32>
    %450 = arith.subf %449, %443 : vector<8x32xf32>
    %451 = arith.mulf %450, %448 : vector<8x32xf32>
    %452 = arith.mulf %443, %418 : vector<8x32xf32>
    %453 = arith.addf %451, %452 : vector<8x32xf32>
    %c3_i32_205 = arith.constant 3 : i32
    %c8_i32_206 = arith.constant 8 : i32
    %454 = arith.muli %c3_i32_205, %c8_i32_206 : i32
    %455 = tpu.assume_multiple %454, 8 : i32
    %456 = arith.truncf %453 : vector<8x32xf32> to vector<8x32xbf16>
    %cst_207 = arith.constant dense<0.000000e+00> : vector<8x32xf32>
    %457 = tpu.matmul %456, %325, %cst_207 {dimension_numbers = #tpu.dot_dimension_numbers<[1], [0], [0], [1], [0, 0, 1, 1], [], []>} : vector<8x32xbf16>, vector<32x32xbf16>, vector<8x32xf32> -> vector<8x32xf32>
    %cst_208 = arith.constant dense<0.000000e+00> : vector<8x32xf32>
    %458 = tpu.matmul %456, %326, %cst_208 {dimension_numbers = #tpu.dot_dimension_numbers<[1], [0], [0], [1], [0, 0, 1, 1], [], []>} : vector<8x32xbf16>, vector<32x32xbf16>, vector<8x32xf32> -> vector<8x32xf32>
    %cst_209 = arith.constant dense<0.000000e+00> : vector<8x32xf32>
    %459 = tpu.matmul %456, %327, %cst_209 {dimension_numbers = #tpu.dot_dimension_numbers<[1], [0], [0], [1], [0, 0, 1, 1], [], []>} : vector<8x32xbf16>, vector<32x32xbf16>, vector<8x32xf32> -> vector<8x32xf32>
    %460 = arith.addf %459, %347 : vector<8x32xf32>
    %461 = arith.index_cast %455 : i32 to index
    %c0_210 = arith.constant 0 : index
    %462 = vector.load %arg25[%461, %c0_210] : memref<64x32xf32, #tpu.memory_space<vmem>>, vector<8x32xf32>
    %463 = arith.addf %462, %457 : vector<8x32xf32>
    %cst_211 = arith.constant 0.000000e+00 : f32
    %464 = vector.broadcast %cst_211 : f32 to vector<8x32xf32>
    %465 = arith.subf %464, %463 : vector<8x32xf32>
    %466 = math.exp %465 : vector<8x32xf32>
    %cst_212 = arith.constant 1.000000e+00 : f32
    %467 = vector.broadcast %cst_212 : f32 to vector<8x32xf32>
    %468 = arith.addf %467, %466 : vector<8x32xf32>
    %469 = tpu.reciprocal %468 {approx = true} : vector<8x32xf32> -> vector<8x32xf32>
    %470 = arith.index_cast %455 : i32 to index
    %c0_213 = arith.constant 0 : index
    %471 = vector.load %arg26[%470, %c0_213] : memref<64x32xf32, #tpu.memory_space<vmem>>, vector<8x32xf32>
    %472 = arith.addf %471, %458 : vector<8x32xf32>
    %cst_214 = arith.constant 0.000000e+00 : f32
    %473 = vector.broadcast %cst_214 : f32 to vector<8x32xf32>
    %474 = arith.subf %473, %472 : vector<8x32xf32>
    %475 = math.exp %474 : vector<8x32xf32>
    %cst_215 = arith.constant 1.000000e+00 : f32
    %476 = vector.broadcast %cst_215 : f32 to vector<8x32xf32>
    %477 = arith.addf %476, %475 : vector<8x32xf32>
    %478 = tpu.reciprocal %477 {approx = true} : vector<8x32xf32> -> vector<8x32xf32>
    %479 = arith.index_cast %455 : i32 to index
    %c0_216 = arith.constant 0 : index
    %480 = vector.load %arg27[%479, %c0_216] : memref<64x32xf32, #tpu.memory_space<vmem>>, vector<8x32xf32>
    %481 = arith.mulf %469, %460 : vector<8x32xf32>
    %482 = arith.addf %480, %481 : vector<8x32xf32>
    %483 = math.tanh %482 : vector<8x32xf32>
    %cst_217 = arith.constant 1.000000e+00 : f32
    %484 = vector.broadcast %cst_217 : f32 to vector<8x32xf32>
    %485 = arith.subf %484, %478 : vector<8x32xf32>
    %486 = arith.mulf %485, %483 : vector<8x32xf32>
    %487 = arith.mulf %478, %453 : vector<8x32xf32>
    %488 = arith.addf %486, %487 : vector<8x32xf32>
    %c4_i32_218 = arith.constant 4 : i32
    %c8_i32_219 = arith.constant 8 : i32
    %489 = arith.muli %c4_i32_218, %c8_i32_219 : i32
    %490 = tpu.assume_multiple %489, 8 : i32
    %491 = arith.truncf %488 : vector<8x32xf32> to vector<8x32xbf16>
    %cst_220 = arith.constant dense<0.000000e+00> : vector<8x32xf32>
    %492 = tpu.matmul %491, %325, %cst_220 {dimension_numbers = #tpu.dot_dimension_numbers<[1], [0], [0], [1], [0, 0, 1, 1], [], []>} : vector<8x32xbf16>, vector<32x32xbf16>, vector<8x32xf32> -> vector<8x32xf32>
    %cst_221 = arith.constant dense<0.000000e+00> : vector<8x32xf32>
    %493 = tpu.matmul %491, %326, %cst_221 {dimension_numbers = #tpu.dot_dimension_numbers<[1], [0], [0], [1], [0, 0, 1, 1], [], []>} : vector<8x32xbf16>, vector<32x32xbf16>, vector<8x32xf32> -> vector<8x32xf32>
    %cst_222 = arith.constant dense<0.000000e+00> : vector<8x32xf32>
    %494 = tpu.matmul %491, %327, %cst_222 {dimension_numbers = #tpu.dot_dimension_numbers<[1], [0], [0], [1], [0, 0, 1, 1], [], []>} : vector<8x32xbf16>, vector<32x32xbf16>, vector<8x32xf32> -> vector<8x32xf32>
    %495 = arith.addf %494, %347 : vector<8x32xf32>
    %496 = arith.index_cast %490 : i32 to index
    %c0_223 = arith.constant 0 : index
    %497 = vector.load %arg25[%496, %c0_223] : memref<64x32xf32, #tpu.memory_space<vmem>>, vector<8x32xf32>
    %498 = arith.addf %497, %492 : vector<8x32xf32>
    %cst_224 = arith.constant 0.000000e+00 : f32
    %499 = vector.broadcast %cst_224 : f32 to vector<8x32xf32>
    %500 = arith.subf %499, %498 : vector<8x32xf32>
    %501 = math.exp %500 : vector<8x32xf32>
    %cst_225 = arith.constant 1.000000e+00 : f32
    %502 = vector.broadcast %cst_225 : f32 to vector<8x32xf32>
    %503 = arith.addf %502, %501 : vector<8x32xf32>
    %504 = tpu.reciprocal %503 {approx = true} : vector<8x32xf32> -> vector<8x32xf32>
    %505 = arith.index_cast %490 : i32 to index
    %c0_226 = arith.constant 0 : index
    %506 = vector.load %arg26[%505, %c0_226] : memref<64x32xf32, #tpu.memory_space<vmem>>, vector<8x32xf32>
    %507 = arith.addf %506, %493 : vector<8x32xf32>
    %cst_227 = arith.constant 0.000000e+00 : f32
    %508 = vector.broadcast %cst_227 : f32 to vector<8x32xf32>
    %509 = arith.subf %508, %507 : vector<8x32xf32>
    %510 = math.exp %509 : vector<8x32xf32>
    %cst_228 = arith.constant 1.000000e+00 : f32
    %511 = vector.broadcast %cst_228 : f32 to vector<8x32xf32>
    %512 = arith.addf %511, %510 : vector<8x32xf32>
    %513 = tpu.reciprocal %512 {approx = true} : vector<8x32xf32> -> vector<8x32xf32>
    %514 = arith.index_cast %490 : i32 to index
    %c0_229 = arith.constant 0 : index
    %515 = vector.load %arg27[%514, %c0_229] : memref<64x32xf32, #tpu.memory_space<vmem>>, vector<8x32xf32>
    %516 = arith.mulf %504, %495 : vector<8x32xf32>
    %517 = arith.addf %515, %516 : vector<8x32xf32>
    %518 = math.tanh %517 : vector<8x32xf32>
    %cst_230 = arith.constant 1.000000e+00 : f32
    %519 = vector.broadcast %cst_230 : f32 to vector<8x32xf32>
    %520 = arith.subf %519, %513 : vector<8x32xf32>
    %521 = arith.mulf %520, %518 : vector<8x32xf32>
    %522 = arith.mulf %513, %488 : vector<8x32xf32>
    %523 = arith.addf %521, %522 : vector<8x32xf32>
    %c5_i32_231 = arith.constant 5 : i32
    %c8_i32_232 = arith.constant 8 : i32
    %524 = arith.muli %c5_i32_231, %c8_i32_232 : i32
    %525 = tpu.assume_multiple %524, 8 : i32
    %526 = arith.truncf %523 : vector<8x32xf32> to vector<8x32xbf16>
    %cst_233 = arith.constant dense<0.000000e+00> : vector<8x32xf32>
    %527 = tpu.matmul %526, %325, %cst_233 {dimension_numbers = #tpu.dot_dimension_numbers<[1], [0], [0], [1], [0, 0, 1, 1], [], []>} : vector<8x32xbf16>, vector<32x32xbf16>, vector<8x32xf32> -> vector<8x32xf32>
    %cst_234 = arith.constant dense<0.000000e+00> : vector<8x32xf32>
    %528 = tpu.matmul %526, %326, %cst_234 {dimension_numbers = #tpu.dot_dimension_numbers<[1], [0], [0], [1], [0, 0, 1, 1], [], []>} : vector<8x32xbf16>, vector<32x32xbf16>, vector<8x32xf32> -> vector<8x32xf32>
    %cst_235 = arith.constant dense<0.000000e+00> : vector<8x32xf32>
    %529 = tpu.matmul %526, %327, %cst_235 {dimension_numbers = #tpu.dot_dimension_numbers<[1], [0], [0], [1], [0, 0, 1, 1], [], []>} : vector<8x32xbf16>, vector<32x32xbf16>, vector<8x32xf32> -> vector<8x32xf32>
    %530 = arith.addf %529, %347 : vector<8x32xf32>
    %531 = arith.index_cast %525 : i32 to index
    %c0_236 = arith.constant 0 : index
    %532 = vector.load %arg25[%531, %c0_236] : memref<64x32xf32, #tpu.memory_space<vmem>>, vector<8x32xf32>
    %533 = arith.addf %532, %527 : vector<8x32xf32>
    %cst_237 = arith.constant 0.000000e+00 : f32
    %534 = vector.broadcast %cst_237 : f32 to vector<8x32xf32>
    %535 = arith.subf %534, %533 : vector<8x32xf32>
    %536 = math.exp %535 : vector<8x32xf32>
    %cst_238 = arith.constant 1.000000e+00 : f32
    %537 = vector.broadcast %cst_238 : f32 to vector<8x32xf32>
    %538 = arith.addf %537, %536 : vector<8x32xf32>
    %539 = tpu.reciprocal %538 {approx = true} : vector<8x32xf32> -> vector<8x32xf32>
    %540 = arith.index_cast %525 : i32 to index
    %c0_239 = arith.constant 0 : index
    %541 = vector.load %arg26[%540, %c0_239] : memref<64x32xf32, #tpu.memory_space<vmem>>, vector<8x32xf32>
    %542 = arith.addf %541, %528 : vector<8x32xf32>
    %cst_240 = arith.constant 0.000000e+00 : f32
    %543 = vector.broadcast %cst_240 : f32 to vector<8x32xf32>
    %544 = arith.subf %543, %542 : vector<8x32xf32>
    %545 = math.exp %544 : vector<8x32xf32>
    %cst_241 = arith.constant 1.000000e+00 : f32
    %546 = vector.broadcast %cst_241 : f32 to vector<8x32xf32>
    %547 = arith.addf %546, %545 : vector<8x32xf32>
    %548 = tpu.reciprocal %547 {approx = true} : vector<8x32xf32> -> vector<8x32xf32>
    %549 = arith.index_cast %525 : i32 to index
    %c0_242 = arith.constant 0 : index
    %550 = vector.load %arg27[%549, %c0_242] : memref<64x32xf32, #tpu.memory_space<vmem>>, vector<8x32xf32>
    %551 = arith.mulf %539, %530 : vector<8x32xf32>
    %552 = arith.addf %550, %551 : vector<8x32xf32>
    %553 = math.tanh %552 : vector<8x32xf32>
    %cst_243 = arith.constant 1.000000e+00 : f32
    %554 = vector.broadcast %cst_243 : f32 to vector<8x32xf32>
    %555 = arith.subf %554, %548 : vector<8x32xf32>
    %556 = arith.mulf %555, %553 : vector<8x32xf32>
    %557 = arith.mulf %548, %523 : vector<8x32xf32>
    %558 = arith.addf %556, %557 : vector<8x32xf32>
    %c6_i32_244 = arith.constant 6 : i32
    %c8_i32_245 = arith.constant 8 : i32
    %559 = arith.muli %c6_i32_244, %c8_i32_245 : i32
    %560 = tpu.assume_multiple %559, 8 : i32
    %561 = arith.truncf %558 : vector<8x32xf32> to vector<8x32xbf16>
    %cst_246 = arith.constant dense<0.000000e+00> : vector<8x32xf32>
    %562 = tpu.matmul %561, %325, %cst_246 {dimension_numbers = #tpu.dot_dimension_numbers<[1], [0], [0], [1], [0, 0, 1, 1], [], []>} : vector<8x32xbf16>, vector<32x32xbf16>, vector<8x32xf32> -> vector<8x32xf32>
    %cst_247 = arith.constant dense<0.000000e+00> : vector<8x32xf32>
    %563 = tpu.matmul %561, %326, %cst_247 {dimension_numbers = #tpu.dot_dimension_numbers<[1], [0], [0], [1], [0, 0, 1, 1], [], []>} : vector<8x32xbf16>, vector<32x32xbf16>, vector<8x32xf32> -> vector<8x32xf32>
    %cst_248 = arith.constant dense<0.000000e+00> : vector<8x32xf32>
    %564 = tpu.matmul %561, %327, %cst_248 {dimension_numbers = #tpu.dot_dimension_numbers<[1], [0], [0], [1], [0, 0, 1, 1], [], []>} : vector<8x32xbf16>, vector<32x32xbf16>, vector<8x32xf32> -> vector<8x32xf32>
    %565 = arith.addf %564, %347 : vector<8x32xf32>
    %566 = arith.index_cast %560 : i32 to index
    %c0_249 = arith.constant 0 : index
    %567 = vector.load %arg25[%566, %c0_249] : memref<64x32xf32, #tpu.memory_space<vmem>>, vector<8x32xf32>
    %568 = arith.addf %567, %562 : vector<8x32xf32>
    %cst_250 = arith.constant 0.000000e+00 : f32
    %569 = vector.broadcast %cst_250 : f32 to vector<8x32xf32>
    %570 = arith.subf %569, %568 : vector<8x32xf32>
    %571 = math.exp %570 : vector<8x32xf32>
    %cst_251 = arith.constant 1.000000e+00 : f32
    %572 = vector.broadcast %cst_251 : f32 to vector<8x32xf32>
    %573 = arith.addf %572, %571 : vector<8x32xf32>
    %574 = tpu.reciprocal %573 {approx = true} : vector<8x32xf32> -> vector<8x32xf32>
    %575 = arith.index_cast %560 : i32 to index
    %c0_252 = arith.constant 0 : index
    %576 = vector.load %arg26[%575, %c0_252] : memref<64x32xf32, #tpu.memory_space<vmem>>, vector<8x32xf32>
    %577 = arith.addf %576, %563 : vector<8x32xf32>
    %cst_253 = arith.constant 0.000000e+00 : f32
    %578 = vector.broadcast %cst_253 : f32 to vector<8x32xf32>
    %579 = arith.subf %578, %577 : vector<8x32xf32>
    %580 = math.exp %579 : vector<8x32xf32>
    %cst_254 = arith.constant 1.000000e+00 : f32
    %581 = vector.broadcast %cst_254 : f32 to vector<8x32xf32>
    %582 = arith.addf %581, %580 : vector<8x32xf32>
    %583 = tpu.reciprocal %582 {approx = true} : vector<8x32xf32> -> vector<8x32xf32>
    %584 = arith.index_cast %560 : i32 to index
    %c0_255 = arith.constant 0 : index
    %585 = vector.load %arg27[%584, %c0_255] : memref<64x32xf32, #tpu.memory_space<vmem>>, vector<8x32xf32>
    %586 = arith.mulf %574, %565 : vector<8x32xf32>
    %587 = arith.addf %585, %586 : vector<8x32xf32>
    %588 = math.tanh %587 : vector<8x32xf32>
    %cst_256 = arith.constant 1.000000e+00 : f32
    %589 = vector.broadcast %cst_256 : f32 to vector<8x32xf32>
    %590 = arith.subf %589, %583 : vector<8x32xf32>
    %591 = arith.mulf %590, %588 : vector<8x32xf32>
    %592 = arith.mulf %583, %558 : vector<8x32xf32>
    %593 = arith.addf %591, %592 : vector<8x32xf32>
    %c7_i32_257 = arith.constant 7 : i32
    %c8_i32_258 = arith.constant 8 : i32
    %594 = arith.muli %c7_i32_257, %c8_i32_258 : i32
    %595 = tpu.assume_multiple %594, 8 : i32
    %596 = arith.truncf %593 : vector<8x32xf32> to vector<8x32xbf16>
    %cst_259 = arith.constant dense<0.000000e+00> : vector<8x32xf32>
    %597 = tpu.matmul %596, %325, %cst_259 {dimension_numbers = #tpu.dot_dimension_numbers<[1], [0], [0], [1], [0, 0, 1, 1], [], []>} : vector<8x32xbf16>, vector<32x32xbf16>, vector<8x32xf32> -> vector<8x32xf32>
    %cst_260 = arith.constant dense<0.000000e+00> : vector<8x32xf32>
    %598 = tpu.matmul %596, %326, %cst_260 {dimension_numbers = #tpu.dot_dimension_numbers<[1], [0], [0], [1], [0, 0, 1, 1], [], []>} : vector<8x32xbf16>, vector<32x32xbf16>, vector<8x32xf32> -> vector<8x32xf32>
    %cst_261 = arith.constant dense<0.000000e+00> : vector<8x32xf32>
    %599 = tpu.matmul %596, %327, %cst_261 {dimension_numbers = #tpu.dot_dimension_numbers<[1], [0], [0], [1], [0, 0, 1, 1], [], []>} : vector<8x32xbf16>, vector<32x32xbf16>, vector<8x32xf32> -> vector<8x32xf32>
    %600 = arith.addf %599, %347 : vector<8x32xf32>
    %601 = arith.index_cast %595 : i32 to index
    %c0_262 = arith.constant 0 : index
    %602 = vector.load %arg25[%601, %c0_262] : memref<64x32xf32, #tpu.memory_space<vmem>>, vector<8x32xf32>
    %603 = arith.addf %602, %597 : vector<8x32xf32>
    %cst_263 = arith.constant 0.000000e+00 : f32
    %604 = vector.broadcast %cst_263 : f32 to vector<8x32xf32>
    %605 = arith.subf %604, %603 : vector<8x32xf32>
    %606 = math.exp %605 : vector<8x32xf32>
    %cst_264 = arith.constant 1.000000e+00 : f32
    %607 = vector.broadcast %cst_264 : f32 to vector<8x32xf32>
    %608 = arith.addf %607, %606 : vector<8x32xf32>
    %609 = tpu.reciprocal %608 {approx = true} : vector<8x32xf32> -> vector<8x32xf32>
    %610 = arith.index_cast %595 : i32 to index
    %c0_265 = arith.constant 0 : index
    %611 = vector.load %arg26[%610, %c0_265] : memref<64x32xf32, #tpu.memory_space<vmem>>, vector<8x32xf32>
    %612 = arith.addf %611, %598 : vector<8x32xf32>
    %cst_266 = arith.constant 0.000000e+00 : f32
    %613 = vector.broadcast %cst_266 : f32 to vector<8x32xf32>
    %614 = arith.subf %613, %612 : vector<8x32xf32>
    %615 = math.exp %614 : vector<8x32xf32>
    %cst_267 = arith.constant 1.000000e+00 : f32
    %616 = vector.broadcast %cst_267 : f32 to vector<8x32xf32>
    %617 = arith.addf %616, %615 : vector<8x32xf32>
    %618 = tpu.reciprocal %617 {approx = true} : vector<8x32xf32> -> vector<8x32xf32>
    %619 = arith.index_cast %595 : i32 to index
    %c0_268 = arith.constant 0 : index
    %620 = vector.load %arg27[%619, %c0_268] : memref<64x32xf32, #tpu.memory_space<vmem>>, vector<8x32xf32>
    %621 = arith.mulf %609, %600 : vector<8x32xf32>
    %622 = arith.addf %620, %621 : vector<8x32xf32>
    %623 = math.tanh %622 : vector<8x32xf32>
    %cst_269 = arith.constant 1.000000e+00 : f32
    %624 = vector.broadcast %cst_269 : f32 to vector<8x32xf32>
    %625 = arith.subf %624, %618 : vector<8x32xf32>
    %626 = arith.mulf %625, %623 : vector<8x32xf32>
    %627 = arith.mulf %618, %593 : vector<8x32xf32>
    %628 = arith.addf %626, %627 : vector<8x32xf32>
    %c8_i32_270 = arith.constant 8 : i32
    %c0_271 = arith.constant 0 : index
    %c0_272 = arith.constant 0 : index
    %629 = vector.load %arg21[%c0_271, %c0_272] : memref<32x6xf32, #tpu.memory_space<vmem>>, vector<32x6xf32>
    %cst_273 = arith.constant dense<0.000000e+00> : vector<8x6xf32>
    %630 = tpu.matmul %628, %629, %cst_273 {dimension_numbers = #tpu.dot_dimension_numbers<[1], [0], [0], [1], [0, 0, 1, 1], [], []>} : vector<8x32xf32>, vector<32x6xf32>, vector<8x6xf32> -> vector<8x6xf32>
    %c0_274 = arith.constant 0 : index
    %c0_275 = arith.constant 0 : index
    %631 = vector.load %arg22[%c0_274, %c0_275] : memref<1x6xf32, #tpu.memory_space<vmem>>, vector<1x6xf32>
    %632 = vector.broadcast %631 : vector<1x6xf32> to vector<8x6xf32>
    %633 = arith.addf %630, %632 : vector<8x6xf32>
    %c0_276 = arith.constant 0 : index
    %c0_277 = arith.constant 0 : index
    %634 = vector.load %arg23[%c0_276, %c0_277] : memref<8x6xf32, #tpu.memory_space<vmem>>, vector<8x6xf32>
    tpu.vector_store %arg23[%c0_276, %c0_277], %633 {strides = array<i32>} : memref<8x6xf32, #tpu.memory_space<vmem>>, vector<8x6xf32>,
    return
  }
}

</mosaic_0001>

<llo_original>
// kernel: tpu_custom_call.1
$region0: #{tpu_custom_call.1}
  #allocation0 [shape = 'u32[]', space=smem, size = 0x4, offset = 0x4, fixed_abs, tag = 'smem constant byte address 0x4 - core index']
  #allocation1 [shape = 'u32[144,128]{1,0:T(1,128)}', space=vmem, size = 0x12000, scoped, tag = 'internal scratch']
  #allocation2 [shape = 'f32[64,32]{1,0:T(8,128)}', space=vmem, size = 0x8000, scoped, tag = 'scratch operand']
  #allocation3 [shape = 'f32[64,32]{1,0:T(8,128)}', space=vmem, size = 0x8000, scoped, tag = 'scratch operand']
  #allocation4 [shape = 'f32[64,32]{1,0:T(8,128)}', space=vmem, size = 0x8000, scoped, tag = 'scratch operand']
  #allocation5 [shape = 'f32[64,32]{1,0:T(8,128)}', space=vmem, size = 0x8000, scoped, tag = 'scratch operand']
  %s0 = inlined_call_operand.vmem [shape: bf16[64,4], index: 0, kind: input, shape index: {}]
  %s1 = inlined_call_operand.hbm [shape: bf16[4,32], index: 1, kind: input, shape index: {}]
  %s2 = inlined_call_operand.hbm [shape: bf16[4,32], index: 2, kind: input, shape index: {}]
  %s3 = inlined_call_operand.hbm [shape: bf16[4,32], index: 3, kind: input, shape index: {}]
  %s4 = inlined_call_operand.vmem [shape: bf16[32,32], index: 4, kind: input, shape index: {}]
  %s5 = inlined_call_operand.vmem [shape: bf16[32,32], index: 5, kind: input, shape index: {}]
  %s6 = inlined_call_operand.vmem [shape: bf16[32,32], index: 6, kind: input, shape index: {}]
  %s7 = inlined_call_operand.vmem [shape: f32[1,32], index: 7, kind: input, shape index: {}]
  %s8 = inlined_call_operand.hbm [shape: f32[1,32], index: 8, kind: input, shape index: {}]
  %s9 = inlined_call_operand.hbm [shape: f32[1,32], index: 9, kind: input, shape index: {}]
  %s10 = inlined_call_operand.hbm [shape: f32[1,32], index: 10, kind: input, shape index: {}]
  %s11 = inlined_call_operand.vmem [shape: bf16[32,32], index: 11, kind: input, shape index: {}]
  %s12 = inlined_call_operand.vmem [shape: bf16[32,32], index: 12, kind: input, shape index: {}]
  %s13 = inlined_call_operand.vmem [shape: bf16[32,32], index: 13, kind: input, shape index: {}]
  %s14 = inlined_call_operand.hbm [shape: bf16[32,32], index: 14, kind: input, shape index: {}]
  %s15 = inlined_call_operand.hbm [shape: bf16[32,32], index: 15, kind: input, shape index: {}]
  %s16 = inlined_call_operand.hbm [shape: bf16[32,32], index: 16, kind: input, shape index: {}]
  %s17 = inlined_call_operand.hbm [shape: f32[1,32], index: 17, kind: input, shape index: {}]
  %s18 = inlined_call_operand.vmem [shape: f32[1,32], index: 18, kind: input, shape index: {}]
  %s19 = inlined_call_operand.vmem [shape: f32[1,32], index: 19, kind: input, shape index: {}]
  %s20 = inlined_call_operand.vmem [shape: f32[1,32], index: 20, kind: input, shape index: {}]
  %s21 = inlined_call_operand.vmem [shape: f32[32,6], index: 21, kind: input, shape index: {}]
  %s22 = inlined_call_operand.vmem [shape: f32[1,6], index: 22, kind: input, shape index: {}]
  %s23 = inlined_call_operand.hbm [shape: f32[8,6], index: 23, kind: output, shape index: {}]
  %s24 = sld [smem:[#allocation0]]
  $region142: #{tpu_custom_call.1} parent=0
    _
  %s26 = ssub.s32 1, %s24
  %s27 = scalar_select 0, %s26, %s24
  $region1: #{tpu_custom_call.1} parent=0
    #allocation6 [shape = 'u8[1024]{0}', space=vmem, size = 0x400, scoped, tag = 'input window, operand 1, single buffered']
    #allocation7 [shape = 's32[1]{0}', space=sflag, size = 0x4, scoped, tag = 'scoped memory for tpu_custom_call.1']
    #allocation8 [shape = 's32[1]{0}', space=sflag, size = 0x4, scoped, tag = 'scoped memory for tpu_custom_call.1']
    #allocation9 [shape = 'u8[1024]{0}', space=vmem, size = 0x400, scoped, tag = 'input window, operand 2, single buffered']
    #allocation10 [shape = 's32[1]{0}', space=sflag, size = 0x4, scoped, tag = 'scoped memory for tpu_custom_call.1']
    #allocation11 [shape = 'u8[1024]{0}', space=vmem, size = 0x400, scoped, tag = 'input window, operand 3, single buffered']
    #allocation12 [shape = 'u8[512]{0}', space=vmem, size = 0x400, scoped, tag = 'input window, operand 8, single buffered']
    #allocation13 [shape = 's32[1]{0}', space=sflag, size = 0x4, scoped, tag = 'scoped memory for tpu_custom_call.1']
    #allocation14 [shape = 'u8[512]{0}', space=vmem, size = 0x400, scoped, tag = 'input window, operand 9, single buffered']
    #allocation15 [shape = 'u8[512]{0}', space=vmem, size = 0x400, scoped, tag = 'input window, operand 10, single buffered']
    #allocation16 [shape = 's32[1]{0}', space=sflag, size = 0x4, scoped, tag = 'scoped memory for tpu_custom_call.1']
    #allocation17 [shape = 'u8[8192]{0}', space=vmem, size = 0x2000, scoped, tag = 'input window, operand 14, single buffered']
    #allocation18 [shape = 'u8[8192]{0}', space=vmem, size = 0x2000, scoped, tag = 'input window, operand 15, single buffered']
    #allocation19 [shape = 's32[1]{0}', space=sflag, size = 0x4, scoped, tag = 'scoped memory for tpu_custom_call.1']
    #allocation20 [shape = 'u8[8192]{0}', space=vmem, size = 0x2000, scoped, tag = 'input window, operand 16, single buffered']
    #allocation21 [shape = 'u8[512]{0}', space=vmem, size = 0x400, scoped, tag = 'input window, operand 17, single buffered']
    #allocation22 [shape = 's32[1]{0}', space=sflag, size = 0x4, scoped, tag = 'scoped memory for tpu_custom_call.1']
    #allocation23 [shape = 'u8[4096]{0}', space=vmem, size = 0x1000, scoped, tag = 'output window, operand 0, single buffered']
    %28 = vsyncpa [#allocation7], 0
    %29 = vsyncpa [#allocation10], 0
    %30 = vsyncpa [#allocation13], 0
    %31 = vsyncpa [#allocation16], 0
    %32 = vsyncpa [#allocation19], 0
    %33 = vsyncpa [#allocation22], 0
    %34 = vsyncpa [#allocation8], 0
    // Predicated region
    $region2: #{tpu_custom_call.1} parent=1 // pred_check
      _
    $region3: #{tpu_custom_call.1} parent=1 // pred_check_branch
      %36 = sbr.rel (0) target = $region5
    $region4: #{tpu_custom_call.1} parent=1 // pred_region
      _
    $region5: #{tpu_custom_call.1} parent=1 // pred_fallthru
      _
    // Predicated region
    $region6: #{tpu_custom_call.1} parent=1 // pred_check
      _
    $region7: #{tpu_custom_call.1} parent=1 // pred_check_branch
      %38 = sbr.rel (0) target = $region9
    $region8: #{tpu_custom_call.1} parent=1 // pred_region
      %s40 = ssub.s32 32, 32
      %41 = vsyncadd [#allocation7], %s40
      %s43 = sshll.u32 [#allocation6], 4
      %s44 = int_to_ptr.vmem [resolvable:$true] %s43
      %46 = dma.hbm_to_vmem [thread:$0]  %s1, 32, %s44, [#allocation7]
    $region9: #{tpu_custom_call.1} parent=1 // pred_fallthru
      _
    // Predicated region
    $region10: #{tpu_custom_call.1} parent=1 // pred_check
      _
    $region11: #{tpu_custom_call.1} parent=1 // pred_check_branch
      %48 = sbr.rel (0) target = $region13
    $region12: #{tpu_custom_call.1} parent=1 // pred_region
      %s50 = ssub.s32 32, 32
      %51 = vsyncadd [#allocation10], %s50
      %s53 = sshll.u32 [#allocation9], 4
      %s54 = int_to_ptr.vmem [resolvable:$true] %s53
      %56 = dma.hbm_to_vmem [thread:$0]  %s2, 32, %s54, [#allocation10]
    $region13: #{tpu_custom_call.1} parent=1 // pred_fallthru
      _
    // Predicated region
    $region14: #{tpu_custom_call.1} parent=1 // pred_check
      _
    $region15: #{tpu_custom_call.1} parent=1 // pred_check_branch
      %58 = sbr.rel (0) target = $region17
    $region16: #{tpu_custom_call.1} parent=1 // pred_region
      %s60 = ssub.s32 32, 32
      %61 = vsyncadd [#allocation10], %s60
      %s63 = sshll.u32 [#allocation11], 4
      %s64 = int_to_ptr.vmem [resolvable:$true] %s63
      %66 = dma.hbm_to_vmem [thread:$0]  %s3, 32, %s64, [#allocation10]
    $region17: #{tpu_custom_call.1} parent=1 // pred_fallthru
      _
    // Predicated region
    $region18: #{tpu_custom_call.1} parent=1 // pred_check
      _
    $region19: #{tpu_custom_call.1} parent=1 // pred_check_branch
      %68 = sbr.rel (0) target = $region21
    $region20: #{tpu_custom_call.1} parent=1 // pred_region
      _
    $region21: #{tpu_custom_call.1} parent=1 // pred_fallthru
      _
    // Predicated region
    $region22: #{tpu_custom_call.1} parent=1 // pred_check
      _
    $region23: #{tpu_custom_call.1} parent=1 // pred_check_branch
      %70 = sbr.rel (0) target = $region25
    $region24: #{tpu_custom_call.1} parent=1 // pred_region
      _
    $region25: #{tpu_custom_call.1} parent=1 // pred_fallthru
      _
    // Predicated region
    $region26: #{tpu_custom_call.1} parent=1 // pred_check
      _
    $region27: #{tpu_custom_call.1} parent=1 // pred_check_branch
      %72 = sbr.rel (0) target = $region29
    $region28: #{tpu_custom_call.1} parent=1 // pred_region
      _
    $region29: #{tpu_custom_call.1} parent=1 // pred_fallthru
      _
    // Predicated region
    $region30: #{tpu_custom_call.1} parent=1 // pred_check
      _
    $region31: #{tpu_custom_call.1} parent=1 // pred_check_branch
      %74 = sbr.rel (0) target = $region33
    $region32: #{tpu_custom_call.1} parent=1 // pred_region
      _
    $region33: #{tpu_custom_call.1} parent=1 // pred_fallthru
      _
    // Predicated region
    $region34: #{tpu_custom_call.1} parent=1 // pred_check
      _
    $region35: #{tpu_custom_call.1} parent=1 // pred_check_branch
      %76 = sbr.rel (0) target = $region37
    $region36: #{tpu_custom_call.1} parent=1 // pred_region
      %s78 = ssub.s32 16, 16
      %79 = vsyncadd [#allocation13], %s78
      %s81 = sshll.u32 [#allocation12], 4
      %s82 = int_to_ptr.vmem [resolvable:$true] %s81
      %84 = dma.hbm_to_vmem [thread:$0]  %s8, 16, %s82, [#allocation13]
    $region37: #{tpu_custom_call.1} parent=1 // pred_fallthru
      _
    // Predicated region
    $region38: #{tpu_custom_call.1} parent=1 // pred_check
      _
    $region39: #{tpu_custom_call.1} parent=1 // pred_check_branch
      %86 = sbr.rel (0) target = $region41
    $region40: #{tpu_custom_call.1} parent=1 // pred_region
      %s88 = ssub.s32 16, 16
      %89 = vsyncadd [#allocation13], %s88
      %s91 = sshll.u32 [#allocation14], 4
      %s92 = int_to_ptr.vmem [resolvable:$true] %s91
      %94 = dma.hbm_to_vmem [thread:$0]  %s9, 16, %s92, [#allocation13]
    $region41: #{tpu_custom_call.1} parent=1 // pred_fallthru
      _
    // Predicated region
    $region42: #{tpu_custom_call.1} parent=1 // pred_check
      _
    $region43: #{tpu_custom_call.1} parent=1 // pred_check_branch
      %96 = sbr.rel (0) target = $region45
    $region44: #{tpu_custom_call.1} parent=1 // pred_region
      %s98 = ssub.s32 16, 16
      %99 = vsyncadd [#allocation16], %s98
      %s101 = sshll.u32 [#allocation15], 4
      %s102 = int_to_ptr.vmem [resolvable:$true] %s101
      %104 = dma.hbm_to_vmem [thread:$0]  %s10, 16, %s102, [#allocation16]
    $region45: #{tpu_custom_call.1} parent=1 // pred_fallthru
      _
    // Predicated region
    $region46: #{tpu_custom_call.1} parent=1 // pred_check
      _
    $region47: #{tpu_custom_call.1} parent=1 // pred_check_branch
      %106 = sbr.rel (0) target = $region49
    $region48: #{tpu_custom_call.1} parent=1 // pred_region
      _
    $region49: #{tpu_custom_call.1} parent=1 // pred_fallthru
      _
    // Predicated region
    $region50: #{tpu_custom_call.1} parent=1 // pred_check
      _
    $region51: #{tpu_custom_call.1} parent=1 // pred_check_branch
      %108 = sbr.rel (0) target = $region53
    $region52: #{tpu_custom_call.1} parent=1 // pred_region
      _
    $region53: #{tpu_custom_call.1} parent=1 // pred_fallthru
      _
    // Predicated region
    $region54: #{tpu_custom_call.1} parent=1 // pred_check
      _
    $region55: #{tpu_custom_call.1} parent=1 // pred_check_branch
      %110 = sbr.rel (0) target = $region57
    $region56: #{tpu_custom_call.1} parent=1 // pred_region
      _
    $region57: #{tpu_custom_call.1} parent=1 // pred_fallthru
      _
    // Predicated region
    $region58: #{tpu_custom_call.1} parent=1 // pred_check
      _
    $region59: #{tpu_custom_call.1} parent=1 // pred_check_branch
      %112 = sbr.rel (0) target = $region61
    $region60: #{tpu_custom_call.1} parent=1 // pred_region
      %s114 = ssub.s32 256, 256
      %115 = vsyncadd [#allocation16], %s114
      %s116 = sshll.u32 [#allocation17], 4
      %s117 = int_to_ptr.vmem [resolvable:$true] %s116
      %122 = dma.hbm_to_vmem [thread:$0]  %s14, 256, %s117, [#allocation16], 64, 64, 4
    $region61: #{tpu_custom_call.1} parent=1 // pred_fallthru
      _
    // Predicated region
    $region62: #{tpu_custom_call.1} parent=1 // pred_check
      _
    $region63: #{tpu_custom_call.1} parent=1 // pred_check_branch
      %124 = sbr.rel (0) target = $region65
    $region64: #{tpu_custom_call.1} parent=1 // pred_region
      %s126 = ssub.s32 256, 256
      %127 = vsyncadd [#allocation19], %s126
      %s128 = sshll.u32 [#allocation18], 4
      %s129 = int_to_ptr.vmem [resolvable:$true] %s128
      %134 = dma.hbm_to_vmem [thread:$0]  %s15, 256, %s129, [#allocation19], 64, 64, 4
    $region65: #{tpu_custom_call.1} parent=1 // pred_fallthru
      _
    // Predicated region
    $region66: #{tpu_custom_call.1} parent=1 // pred_check
      _
    $region67: #{tpu_custom_call.1} parent=1 // pred_check_branch
      %136 = sbr.rel (0) target = $region69
    $region68: #{tpu_custom_call.1} parent=1 // pred_region
      %s138 = ssub.s32 256, 256
      %139 = vsyncadd [#allocation19], %s138
      %s140 = sshll.u32 [#allocation20], 4
      %s141 = int_to_ptr.vmem [resolvable:$true] %s140
      %146 = dma.hbm_to_vmem [thread:$0]  %s16, 256, %s141, [#allocation19], 64, 64, 4
    $region69: #{tpu_custom_call.1} parent=1 // pred_fallthru
      _
    // Predicated region
    $region70: #{tpu_custom_call.1} parent=1 // pred_check
      _
    $region71: #{tpu_custom_call.1} parent=1 // pred_check_branch
      %148 = sbr.rel (0) target = $region73
    $region72: #{tpu_custom_call.1} parent=1 // pred_region
      %s150 = ssub.s32 16, 16
      %151 = vsyncadd [#allocation22], %s150
      %s153 = sshll.u32 [#allocation21], 4
      %s154 = int_to_ptr.vmem [resolvable:$true] %s153
      %156 = dma.hbm_to_vmem [thread:$0]  %s17, 16, %s154, [#allocation22]
    $region73: #{tpu_custom_call.1} parent=1 // pred_fallthru
      _
    // Predicated region
    $region74: #{tpu_custom_call.1} parent=1 // pred_check
      _
    $region75: #{tpu_custom_call.1} parent=1 // pred_check_branch
      %158 = sbr.rel (0) target = $region77
    $region76: #{tpu_custom_call.1} parent=1 // pred_region
      _
    $region77: #{tpu_custom_call.1} parent=1 // pred_fallthru
      _
    // Predicated region
    $region78: #{tpu_custom_call.1} parent=1 // pred_check
      _
    $region79: #{tpu_custom_call.1} parent=1 // pred_check_branch
      %160 = sbr.rel (0) target = $region81
    $region80: #{tpu_custom_call.1} parent=1 // pred_region
      _
    $region81: #{tpu_custom_call.1} parent=1 // pred_fallthru
      _
    // Predicated region
    $region82: #{tpu_custom_call.1} parent=1 // pred_check
      _
    $region83: #{tpu_custom_call.1} parent=1 // pred_check_branch
      %162 = sbr.rel (0) target = $region85
    $region84: #{tpu_custom_call.1} parent=1 // pred_region
      _
    $region85: #{tpu_custom_call.1} parent=1 // pred_fallthru
      _
    // Predicated region
    $region86: #{tpu_custom_call.1} parent=1 // pred_check
      _
    $region87: #{tpu_custom_call.1} parent=1 // pred_check_branch
      %164 = sbr.rel (0) target = $region89
    $region88: #{tpu_custom_call.1} parent=1 // pred_region
      _
    $region89: #{tpu_custom_call.1} parent=1 // pred_fallthru
      _
    // Predicated region
    $region90: #{tpu_custom_call.1} parent=1 // pred_check
      _
    $region91: #{tpu_custom_call.1} parent=1 // pred_check_branch
      %166 = sbr.rel (0) target = $region93
    $region92: #{tpu_custom_call.1} parent=1 // pred_region
      _
    $region93: #{tpu_custom_call.1} parent=1 // pred_fallthru
      _
    // Predicated region
    $region94: #{tpu_custom_call.1} parent=1 // pred_check
      _
    $region95: #{tpu_custom_call.1} parent=1 // pred_check_branch
      %168 = sbr.rel (0) target = $region97
    $region96: #{tpu_custom_call.1} parent=1 // pred_region
      %169 = dma.done [#allocation7], 32
    $region97: #{tpu_custom_call.1} parent=1 // pred_fallthru
      _
    // Predicated region
    $region98: #{tpu_custom_call.1} parent=1 // pred_check
      _
    $region99: #{tpu_custom_call.1} parent=1 // pred_check_branch
      %171 = sbr.rel (0) target = $region101
    $region100: #{tpu_custom_call.1} parent=1 // pred_region
      %172 = dma.done [#allocation10], 32
    $region101: #{tpu_custom_call.1} parent=1 // pred_fallthru
      _
    // Predicated region
    $region102: #{tpu_custom_call.1} parent=1 // pred_check
      _
    $region103: #{tpu_custom_call.1} parent=1 // pred_check_branch
      %174 = sbr.rel (0) target = $region105
    $region104: #{tpu_custom_call.1} parent=1 // pred_region
      %175 = dma.done [#allocation10], 32
    $region105: #{tpu_custom_call.1} parent=1 // pred_fallthru
      _
    // Predicated region
    $region106: #{tpu_custom_call.1} parent=1 // pred_check
      _
    $region107: #{tpu_custom_call.1} parent=1 // pred_check_branch
      %177 = sbr.rel (0) target = $region109
    $region108: #{tpu_custom_call.1} parent=1 // pred_region
      %178 = dma.done [#allocation13], 16
    $region109: #{tpu_custom_call.1} parent=1 // pred_fallthru
      _
    // Predicated region
    $region110: #{tpu_custom_call.1} parent=1 // pred_check
      _
    $region111: #{tpu_custom_call.1} parent=1 // pred_check_branch
      %180 = sbr.rel (0) target = $region113
    $region112: #{tpu_custom_call.1} parent=1 // pred_region
      %181 = dma.done [#allocation13], 16
    $region113: #{tpu_custom_call.1} parent=1 // pred_fallthru
      _
    // Predicated region
    $region114: #{tpu_custom_call.1} parent=1 // pred_check
      _
    $region115: #{tpu_custom_call.1} parent=1 // pred_check_branch
      %183 = sbr.rel (0) target = $region117
    $region116: #{tpu_custom_call.1} parent=1 // pred_region
      %184 = dma.done [#allocation16], 16
    $region117: #{tpu_custom_call.1} parent=1 // pred_fallthru
      _
    // Predicated region
    $region118: #{tpu_custom_call.1} parent=1 // pred_check
      _
    $region119: #{tpu_custom_call.1} parent=1 // pred_check_branch
      %186 = sbr.rel (0) target = $region121
    $region120: #{tpu_custom_call.1} parent=1 // pred_region
      %187 = dma.done [#allocation16], 256
    $region121: #{tpu_custom_call.1} parent=1 // pred_fallthru
      _
    // Predicated region
    $region122: #{tpu_custom_call.1} parent=1 // pred_check
      _
    $region123: #{tpu_custom_call.1} parent=1 // pred_check_branch
      %189 = sbr.rel (0) target = $region125
    $region124: #{tpu_custom_call.1} parent=1 // pred_region
      %190 = dma.done [#allocation19], 256
    $region125: #{tpu_custom_call.1} parent=1 // pred_fallthru
      _
    // Predicated region
    $region126: #{tpu_custom_call.1} parent=1 // pred_check
      _
    $region127: #{tpu_custom_call.1} parent=1 // pred_check_branch
      %192 = sbr.rel (0) target = $region129
    $region128: #{tpu_custom_call.1} parent=1 // pred_region
      %193 = dma.done [#allocation19], 256
    $region129: #{tpu_custom_call.1} parent=1 // pred_fallthru
      _
    // Predicated region
    $region130: #{tpu_custom_call.1} parent=1 // pred_check
      _
    $region131: #{tpu_custom_call.1} parent=1 // pred_check_branch
      %195 = sbr.rel (0) target = $region133
    $region132: #{tpu_custom_call.1} parent=1 // pred_region
      %196 = dma.done [#allocation22], 16
    $region133: #{tpu_custom_call.1} parent=1 // pred_fallthru
      _
    %v198 = vld [vmem:[#allocation6] sm:$0x3]
    %v199 = vld [vmem:[#allocation9] sm:$0x3]
    %v200 = vld [vmem:[#allocation11] sm:$0x3]
    %v201 = vld [vmem:[%s4] sm:$0xf]
    %v202 = vld [vmem:[%s4 + $0x4] sm:$0xf]
    %v203 = vld [vmem:[%s4 + $0x8] sm:$0xf]
    %v204 = vld [vmem:[%s4 + $0xc] sm:$0xf]
    %v205 = vld [vmem:[%s5] sm:$0xf]
    %v206 = vld [vmem:[%s5 + $0x4] sm:$0xf]
    %v207 = vld [vmem:[%s5 + $0x8] sm:$0xf]
    %v208 = vld [vmem:[%s5 + $0xc] sm:$0xf]
    %v209 = vld [vmem:[%s6] sm:$0xf]
    %v210 = vld [vmem:[%s6 + $0x4] sm:$0xf]
    %v211 = vld [vmem:[%s6 + $0x8] sm:$0xf]
    %v212 = vld [vmem:[%s6 + $0xc] sm:$0xf]
    %v213 = vld [vmem:[%s7] sm:$0x1]
    %v214 = vld [vmem:[#allocation12] sm:$0x1]
    %v215 = vld [vmem:[#allocation14] sm:$0x1]
    %v216 = vld [vmem:[#allocation15] sm:$0x1]
    %v217 = vld [vmem:[%s0] sm:$0xf]
    %v218 = vld [vmem:[%s0 + $0x4] sm:$0xf]
    %v219 = vld [vmem:[%s0 + $0x8] sm:$0xf]
    %v220 = vld [vmem:[%s0 + $0xc] sm:$0xf]
    %v221 = vld [vmem:[%s0 + $0x10] sm:$0xf]
    %v222 = vld [vmem:[%s0 + $0x14] sm:$0xf]
    %v223 = vld [vmem:[%s0 + $0x18] sm:$0xf]
    %v224 = vld [vmem:[%s0 + $0x1c] sm:$0xf]
    %v226 = vlaneseq
    %v227 = vshrl.u32 %v226, 7
    %v228 = vsub.s32 0, %v227
    %v229 = vrot.slane %v213, %v228
    %v239 = vunpack.c.l.b16 %v217
    %v240 = vunpack.c.l.b16 %v218
    %v241 = vunpack.c.l.b16 %v219
    %v242 = vunpack.c.l.b16 %v220
    %v243 = vunpack.c.l.b16 %v221
    %v244 = vunpack.c.l.b16 %v222
    %v245 = vunpack.c.l.b16 %v223
    %v246 = vunpack.c.l.b16 %v224
    %v247 = vpack.c.b16 %v240, %v239
    %v248 = vpack.c.b16 %v242, %v241
    %v249 = vpack.c.b16 %v244, %v243
    %v250 = vpack.c.b16 %v246, %v245
    %vm251 = vcmask 31744
    %v253 = vsel %vm251, %v247, 0
    %v256 = vsel %vm251, %v248, 0
    %v259 = vsel %vm251, %v249, 0
    %v262 = vsel %vm251, %v250, 0
    %vm264 = vcmask 1041408
    %v266 = vsel %vm264, %v198, 0
    %268 = vmatprep.subr.bf16.mxu0 0
    %269 = vmatpush1.bf16.msra.mxu0 0
    %270 = vmatprep.subr.bf16.mxu0 0
    %271 = vmatpush1.bf16.msra.mxu0 0
    %272 = vmatprep.subr.bf16.mxu0 0
    %273 = vmatpush1.bf16.msra.mxu0 0
    %274 = vmatprep.subr.bf16.mxu0 0
    %275 = vmatpush1.bf16.msra.mxu0 0
    %276 = vmatprep.subr.bf16.mxu0 0
    %277 = vmatpush1.bf16.msra.mxu0 0
    %278 = vmatprep.subr.bf16.mxu0 0
    %279 = vmatpush1.bf16.msra.mxu0 0
    %280 = vmatprep.subr.bf16.mxu0 0
    %281 = vmatpush1.bf16.msra.mxu0 0
    %282 = vmatprep.subr.bf16.mxu0 0
    %283 = vmatpush1.bf16.msra.mxu0 %v266
    %284 = vmatprep.subr.bf16.mxu0 0
    %285 = vmatpush2.bf16.msra.mxu0 0
    %286 = vmatprep.subr.bf16.mxu0 0
    %287 = vmatpush2.bf16.msra.mxu0 0
    %288 = vmatprep.subr.bf16.mxu0 0
    %289 = vmatpush2.bf16.msra.mxu0 0
    %290 = vmatprep.subr.bf16.mxu0 0
    %291 = vmatpush2.bf16.msra.mxu0 0
    %292 = vmatprep.subr.bf16.mxu0 0
    %293 = vmatpush2.bf16.msra.mxu0 0
    %294 = vmatprep.subr.bf16.mxu0 0
    %295 = vmatpush2.bf16.msra.mxu0 0
    %296 = vmatprep.subr.bf16.mxu0 0
    %297 = vmatpush2.bf16.msra.mxu0 0
    %298 = vmatprep.subr.bf16.mxu0 0
    %299 = vmatpush2.bf16.msra.mxu0 0
    %300 = vmatprep.mubr.bf16.mxu0 0
    %301 = vmatmul.mubr.bf16.gmra.mxu0 %v253
    %v302 = vpop.f32.mrf.mxu0
    %v303 = vadd.f32 %v229, %v302
    %v304 = vpop.f32.mrf.mxu0
    %v305 = vpop.f32.mrf.mxu0
    %v306 = vadd.f32 %v229, %v305
    %v307 = vpop.f32.mrf.mxu0
    %308 = vmatprep.mubr.bf16.mxu0 0
    %309 = vmatmul.mubr.bf16.gmra.mxu0 %v256
    %v310 = vpop.f32.mrf.mxu0
    %v311 = vadd.f32 %v229, %v310
    %v312 = vpop.f32.mrf.mxu0
    %v313 = vpop.f32.mrf.mxu0
    %v314 = vadd.f32 %v229, %v313
    %v315 = vpop.f32.mrf.mxu0
    %316 = vmatprep.mubr.bf16.mxu0 0
    %317 = vmatmul.mubr.bf16.gmra.mxu0 %v259
    %v318 = vpop.f32.mrf.mxu0
    %v319 = vadd.f32 %v229, %v318
    %v320 = vpop.f32.mrf.mxu0
    %v321 = vpop.f32.mrf.mxu0
    %v322 = vadd.f32 %v229, %v321
    %v323 = vpop.f32.mrf.mxu0
    %324 = vmatprep.mubr.bf16.mxu0 0
    %325 = vmatmul.mubr.bf16.gmra.mxu0 %v262
    %v326 = vpop.f32.mrf.mxu0
    %v327 = vadd.f32 %v229, %v326
    %v328 = vpop.f32.mrf.mxu0
    %v329 = vpop.f32.mrf.mxu0
    %v330 = vadd.f32 %v229, %v329
    %v331 = vpop.f32.mrf.mxu0
    %332 = vdwg.mxu0
    %vm333 = vcmask 261120
    %334 = vst.msk [vmem:[#allocation3] sm:$0xff] %vm333, %v303
    %335 = vst.msk [vmem:[#allocation3 + $0x8] sm:$0xff] %vm333, %v306
    %336 = vst.msk [vmem:[#allocation3 + $0x10] sm:$0xff] %vm333, %v311
    %337 = vst.msk [vmem:[#allocation3 + $0x18] sm:$0xff] %vm333, %v314
    %338 = vst.msk [vmem:[#allocation3 + $0x20] sm:$0xff] %vm333, %v319
    %339 = vst.msk [vmem:[#allocation3 + $0x28] sm:$0xff] %vm333, %v322
    %340 = vst.msk [vmem:[#allocation3 + $0x30] sm:$0xff] %vm333, %v327
    %341 = vst.msk [vmem:[#allocation3 + $0x38] sm:$0xff] %vm333, %v330
    %v343 = vlaneseq
    %v344 = vshrl.u32 %v343, 7
    %v345 = vsub.s32 0, %v344
    %v346 = vrot.slane %v214, %v345
    %v349 = vsel %vm264, %v199, 0
    %351 = vmatprep.subr.bf16.mxu0 0
    %352 = vmatpush1.bf16.msra.mxu0 0
    %353 = vmatprep.subr.bf16.mxu0 0
    %354 = vmatpush1.bf16.msra.mxu0 0
    %355 = vmatprep.subr.bf16.mxu0 0
    %356 = vmatpush1.bf16.msra.mxu0 0
    %357 = vmatprep.subr.bf16.mxu0 0
    %358 = vmatpush1.bf16.msra.mxu0 0
    %359 = vmatprep.subr.bf16.mxu0 0
    %360 = vmatpush1.bf16.msra.mxu0 0
    %361 = vmatprep.subr.bf16.mxu0 0
    %362 = vmatpush1.bf16.msra.mxu0 0
    %363 = vmatprep.subr.bf16.mxu0 0
    %364 = vmatpush1.bf16.msra.mxu0 0
    %365 = vmatprep.subr.bf16.mxu0 0
    %366 = vmatpush1.bf16.msra.mxu0 %v349
    %367 = vmatprep.subr.bf16.mxu0 0
    %368 = vmatpush2.bf16.msra.mxu0 0
    %369 = vmatprep.subr.bf16.mxu0 0
    %370 = vmatpush2.bf16.msra.mxu0 0
    %371 = vmatprep.subr.bf16.mxu0 0
    %372 = vmatpush2.bf16.msra.mxu0 0
    %373 = vmatprep.subr.bf16.mxu0 0
    %374 = vmatpush2.bf16.msra.mxu0 0
    %375 = vmatprep.subr.bf16.mxu0 0
    %376 = vmatpush2.bf16.msra.mxu0 0
    %377 = vmatprep.subr.bf16.mxu0 0
    %378 = vmatpush2.bf16.msra.mxu0 0
    %379 = vmatprep.subr.bf16.mxu0 0
    %380 = vmatpush2.bf16.msra.mxu0 0
    %381 = vmatprep.subr.bf16.mxu0 0
    %382 = vmatpush2.bf16.msra.mxu0 0
    %383 = vmatprep.mubr.bf16.mxu0 0
    %384 = vmatmul.mubr.bf16.gmra.mxu0 %v253
    %v385 = vpop.f32.mrf.mxu0
    %v386 = vadd.f32 %v346, %v385
    %v387 = vpop.f32.mrf.mxu0
    %v388 = vpop.f32.mrf.mxu0
    %v389 = vadd.f32 %v346, %v388
    %v390 = vpop.f32.mrf.mxu0
    %391 = vmatprep.mubr.bf16.mxu0 0
    %392 = vmatmul.mubr.bf16.gmra.mxu0 %v256
    %v393 = vpop.f32.mrf.mxu0
    %v394 = vadd.f32 %v346, %v393
    %v395 = vpop.f32.mrf.mxu0
    %v396 = vpop.f32.mrf.mxu0
    %v397 = vadd.f32 %v346, %v396
    %v398 = vpop.f32.mrf.mxu0
    %399 = vmatprep.mubr.bf16.mxu0 0
    %400 = vmatmul.mubr.bf16.gmra.mxu0 %v259
    %v401 = vpop.f32.mrf.mxu0
    %v402 = vadd.f32 %v346, %v401
    %v403 = vpop.f32.mrf.mxu0
    %v404 = vpop.f32.mrf.mxu0
    %v405 = vadd.f32 %v346, %v404
    %v406 = vpop.f32.mrf.mxu0
    %407 = vmatprep.mubr.bf16.mxu0 0
    %408 = vmatmul.mubr.bf16.gmra.mxu0 %v262
    %v409 = vpop.f32.mrf.mxu0
    %v410 = vadd.f32 %v346, %v409
    %v411 = vpop.f32.mrf.mxu0
    %v412 = vpop.f32.mrf.mxu0
    %v413 = vadd.f32 %v346, %v412
    %v414 = vpop.f32.mrf.mxu0
    %415 = vdwg.mxu0
    %416 = vst.msk [vmem:[#allocation4] sm:$0xff] %vm333, %v386
    %417 = vst.msk [vmem:[#allocation4 + $0x8] sm:$0xff] %vm333, %v389
    %418 = vst.msk [vmem:[#allocation4 + $0x10] sm:$0xff] %vm333, %v394
    %419 = vst.msk [vmem:[#allocation4 + $0x18] sm:$0xff] %vm333, %v397
    %420 = vst.msk [vmem:[#allocation4 + $0x20] sm:$0xff] %vm333, %v402
    %421 = vst.msk [vmem:[#allocation4 + $0x28] sm:$0xff] %vm333, %v405
    %422 = vst.msk [vmem:[#allocation4 + $0x30] sm:$0xff] %vm333, %v410
    %423 = vst.msk [vmem:[#allocation4 + $0x38] sm:$0xff] %vm333, %v413
    %v425 = vlaneseq
    %v426 = vshrl.u32 %v425, 7
    %v427 = vsub.s32 0, %v426
    %v428 = vrot.slane %v215, %v427
    %v431 = vsel %vm264, %v200, 0
    %433 = vmatprep.subr.bf16.mxu0 0
    %434 = vmatpush1.bf16.msra.mxu0 0
    %435 = vmatprep.subr.bf16.mxu0 0
    %436 = vmatpush1.bf16.msra.mxu0 0
    %437 = vmatprep.subr.bf16.mxu0 0
    %438 = vmatpush1.bf16.msra.mxu0 0
    %439 = vmatprep.subr.bf16.mxu0 0
    %440 = vmatpush1.bf16.msra.mxu0 0
    %441 = vmatprep.subr.bf16.mxu0 0
    %442 = vmatpush1.bf16.msra.mxu0 0
    %443 = vmatprep.subr.bf16.mxu0 0
    %444 = vmatpush1.bf16.msra.mxu0 0
    %445 = vmatprep.subr.bf16.mxu0 0
    %446 = vmatpush1.bf16.msra.mxu0 0
    %447 = vmatprep.subr.bf16.mxu0 0
    %448 = vmatpush1.bf16.msra.mxu0 %v431
    %449 = vmatprep.subr.bf16.mxu0 0
    %450 = vmatpush2.bf16.msra.mxu0 0
    %451 = vmatprep.subr.bf16.mxu0 0
    %452 = vmatpush2.bf16.msra.mxu0 0
    %453 = vmatprep.subr.bf16.mxu0 0
    %454 = vmatpush2.bf16.msra.mxu0 0
    %455 = vmatprep.subr.bf16.mxu0 0
    %456 = vmatpush2.bf16.msra.mxu0 0
    %457 = vmatprep.subr.bf16.mxu0 0
    %458 = vmatpush2.bf16.msra.mxu0 0
    %459 = vmatprep.subr.bf16.mxu0 0
    %460 = vmatpush2.bf16.msra.mxu0 0
    %461 = vmatprep.subr.bf16.mxu0 0
    %462 = vmatpush2.bf16.msra.mxu0 0
    %463 = vmatprep.subr.bf16.mxu0 0
    %464 = vmatpush2.bf16.msra.mxu0 0
    %465 = vmatprep.mubr.bf16.mxu0 0
    %466 = vmatmul.mubr.bf16.gmra.mxu0 %v253
    %v467 = vpop.f32.mrf.mxu0
    %v468 = vadd.f32 %v428, %v467
    %v469 = vpop.f32.mrf.mxu0
    %v470 = vpop.f32.mrf.mxu0
    %v471 = vadd.f32 %v428, %v470
    %v472 = vpop.f32.mrf.mxu0
    %473 = vmatprep.mubr.bf16.mxu0 0
    %474 = vmatmul.mubr.bf16.gmra.mxu0 %v256
    %v475 = vpop.f32.mrf.mxu0
    %v476 = vadd.f32 %v428, %v475
    %v477 = vpop.f32.mrf.mxu0
    %v478 = vpop.f32.mrf.mxu0
    %v479 = vadd.f32 %v428, %v478
    %v480 = vpop.f32.mrf.mxu0
    %481 = vmatprep.mubr.bf16.mxu0 0
    %482 = vmatmul.mubr.bf16.gmra.mxu0 %v259
    %v483 = vpop.f32.mrf.mxu0
    %v484 = vadd.f32 %v428, %v483
    %v485 = vpop.f32.mrf.mxu0
    %v486 = vpop.f32.mrf.mxu0
    %v487 = vadd.f32 %v428, %v486
    %v488 = vpop.f32.mrf.mxu0
    %489 = vmatprep.mubr.bf16.mxu0 0
    %490 = vmatmul.mubr.bf16.gmra.mxu0 %v262
    %v491 = vpop.f32.mrf.mxu0
    %v492 = vadd.f32 %v428, %v491
    %v493 = vpop.f32.mrf.mxu0
    %v494 = vpop.f32.mrf.mxu0
    %v495 = vadd.f32 %v428, %v494
    %v496 = vpop.f32.mrf.mxu0
    %497 = vdwg.mxu0
    %498 = vst.msk [vmem:[#allocation5] sm:$0xff] %vm333, %v468
    %499 = vst.msk [vmem:[#allocation5 + $0x8] sm:$0xff] %vm333, %v471
    %500 = vst.msk [vmem:[#allocation5 + $0x10] sm:$0xff] %vm333, %v476
    %501 = vst.msk [vmem:[#allocation5 + $0x18] sm:$0xff] %vm333, %v479
    %502 = vst.msk [vmem:[#allocation5 + $0x20] sm:$0xff] %vm333, %v484
    %503 = vst.msk [vmem:[#allocation5 + $0x28] sm:$0xff] %vm333, %v487
    %504 = vst.msk [vmem:[#allocation5 + $0x30] sm:$0xff] %vm333, %v492
    %505 = vst.msk [vmem:[#allocation5 + $0x38] sm:$0xff] %vm333, %v495
    %v507 = vlaneseq
    %v508 = vshrl.u32 %v507, 7
    %v509 = vsub.s32 0, %v508
    %v510 = vrot.slane %v216, %v509
    %v516 = vunpack.c.l.b16 %v201
    %v517 = vunpack.c.l.b16 %v202
    %v518 = vunpack.c.l.b16 %v203
    %v519 = vunpack.c.l.b16 %v204
    %v520 = vpack.c.b16 %v517, %v516
    %v521 = vpack.c.b16 %v519, %v518
    %v525 = vsel %vm333, 0, 0
    %527 = vmatprep.subr.bf16.mxu0 0
    %528 = vmatpush1.bf16.msra.mxu0 0
    %529 = vmatprep.subr.bf16.mxu0 0
    %530 = vmatpush1.bf16.msra.mxu0 0
    %531 = vmatprep.subr.bf16.mxu0 0
    %532 = vmatpush1.bf16.msra.mxu0 0
    %533 = vmatprep.subr.bf16.mxu0 0
    %534 = vmatpush1.bf16.msra.mxu0 0
    %535 = vmatprep.subr.bf16.mxu0 0
    %536 = vmatpush1.bf16.msra.mxu0 0
    %537 = vmatprep.subr.bf16.mxu0 0
    %538 = vmatpush1.bf16.msra.mxu0 0
    %539 = vmatprep.subr.bf16.mxu0 0
    %540 = vmatpush1.bf16.msra.mxu0 %v521
    %541 = vmatprep.subr.bf16.mxu0 0
    %542 = vmatpush1.bf16.msra.mxu0 %v520
    %543 = vmatprep.subr.bf16.mxu0 0
    %544 = vmatpush2.bf16.msra.mxu0 0
    %545 = vmatprep.subr.bf16.mxu0 0
    %546 = vmatpush2.bf16.msra.mxu0 0
    %547 = vmatprep.subr.bf16.mxu0 0
    %548 = vmatpush2.bf16.msra.mxu0 0
    %549 = vmatprep.subr.bf16.mxu0 0
    %550 = vmatpush2.bf16.msra.mxu0 0
    %551 = vmatprep.subr.bf16.mxu0 0
    %552 = vmatpush2.bf16.msra.mxu0 0
    %553 = vmatprep.subr.bf16.mxu0 0
    %554 = vmatpush2.bf16.msra.mxu0 0
    %555 = vmatprep.subr.bf16.mxu0 0
    %556 = vmatpush2.bf16.msra.mxu0 0
    %557 = vmatprep.subr.bf16.mxu0 0
    %558 = vmatpush2.bf16.msra.mxu0 0
    %559 = vmatprep.mubr.bf16.mxu0 0
    %560 = vmatmul.mubr.bf16.gmra.mxu0 %v525
    %v561 = vpop.f32.mrf.mxu0
    %v562 = vadd.f32 0.0, %v561
    %v563 = vpop.f32.mrf.mxu0
    %v564 = vpop.f32.mrf.mxu0
    %v565 = vpop.f32.mrf.mxu0
    %566 = vdwg.mxu0
    %v571 = vunpack.c.l.b16 %v205
    %v572 = vunpack.c.l.b16 %v206
    %v573 = vunpack.c.l.b16 %v207
    %v574 = vunpack.c.l.b16 %v208
    %v575 = vpack.c.b16 %v572, %v571
    %v576 = vpack.c.b16 %v574, %v573
    %579 = vmatprep.subr.bf16.mxu0 0
    %580 = vmatpush1.bf16.msra.mxu0 0
    %581 = vmatprep.subr.bf16.mxu0 0
    %582 = vmatpush1.bf16.msra.mxu0 0
    %583 = vmatprep.subr.bf16.mxu0 0
    %584 = vmatpush1.bf16.msra.mxu0 0
    %585 = vmatprep.subr.bf16.mxu0 0
    %586 = vmatpush1.bf16.msra.mxu0 0
    %587 = vmatprep.subr.bf16.mxu0 0
    %588 = vmatpush1.bf16.msra.mxu0 0
    %589 = vmatprep.subr.bf16.mxu0 0
    %590 = vmatpush1.bf16.msra.mxu0 0
    %591 = vmatprep.subr.bf16.mxu0 0
    %592 = vmatpush1.bf16.msra.mxu0 %v576
    %593 = vmatprep.subr.bf16.mxu0 0
    %594 = vmatpush1.bf16.msra.mxu0 %v575
    %595 = vmatprep.subr.bf16.mxu0 0
    %596 = vmatpush2.bf16.msra.mxu0 0
    %597 = vmatprep.subr.bf16.mxu0 0
    %598 = vmatpush2.bf16.msra.mxu0 0
    %599 = vmatprep.subr.bf16.mxu0 0
    %600 = vmatpush2.bf16.msra.mxu0 0
    %601 = vmatprep.subr.bf16.mxu0 0
    %602 = vmatpush2.bf16.msra.mxu0 0
    %603 = vmatprep.subr.bf16.mxu0 0
    %604 = vmatpush2.bf16.msra.mxu0 0
    %605 = vmatprep.subr.bf16.mxu0 0
    %606 = vmatpush2.bf16.msra.mxu0 0
    %607 = vmatprep.subr.bf16.mxu0 0
    %608 = vmatpush2.bf16.msra.mxu0 0
    %609 = vmatprep.subr.bf16.mxu0 0
    %610 = vmatpush2.bf16.msra.mxu0 0
    %611 = vmatprep.mubr.bf16.mxu0 0
    %612 = vmatmul.mubr.bf16.gmra.mxu0 %v525
    %v613 = vpop.f32.mrf.mxu0
    %v614 = vadd.f32 0.0, %v613
    %v615 = vpop.f32.mrf.mxu0
    %v616 = vpop.f32.mrf.mxu0
    %v617 = vpop.f32.mrf.mxu0
    %618 = vdwg.mxu0
    %v623 = vunpack.c.l.b16 %v209
    %v624 = vunpack.c.l.b16 %v210
    %v625 = vunpack.c.l.b16 %v211
    %v626 = vunpack.c.l.b16 %v212
    %v627 = vpack.c.b16 %v624, %v623
    %v628 = vpack.c.b16 %v626, %v625
    %631 = vmatprep.subr.bf16.mxu0 0
    %632 = vmatpush1.bf16.msra.mxu0 0
    %633 = vmatprep.subr.bf16.mxu0 0
    %634 = vmatpush1.bf16.msra.mxu0 0
    %635 = vmatprep.subr.bf16.mxu0 0
    %636 = vmatpush1.bf16.msra.mxu0 0
    %637 = vmatprep.subr.bf16.mxu0 0
    %638 = vmatpush1.bf16.msra.mxu0 0
    %639 = vmatprep.subr.bf16.mxu0 0
    %640 = vmatpush1.bf16.msra.mxu0 0
    %641 = vmatprep.subr.bf16.mxu0 0
    %642 = vmatpush1.bf16.msra.mxu0 0
    %643 = vmatprep.subr.bf16.mxu0 0
    %644 = vmatpush1.bf16.msra.mxu0 %v628
    %645 = vmatprep.subr.bf16.mxu0 0
    %646 = vmatpush1.bf16.msra.mxu0 %v627
    %647 = vmatprep.subr.bf16.mxu0 0
    %648 = vmatpush2.bf16.msra.mxu0 0
    %649 = vmatprep.subr.bf16.mxu0 0
    %650 = vmatpush2.bf16.msra.mxu0 0
    %651 = vmatprep.subr.bf16.mxu0 0
    %652 = vmatpush2.bf16.msra.mxu0 0
    %653 = vmatprep.subr.bf16.mxu0 0
    %654 = vmatpush2.bf16.msra.mxu0 0
    %655 = vmatprep.subr.bf16.mxu0 0
    %656 = vmatpush2.bf16.msra.mxu0 0
    %657 = vmatprep.subr.bf16.mxu0 0
    %658 = vmatpush2.bf16.msra.mxu0 0
    %659 = vmatprep.subr.bf16.mxu0 0
    %660 = vmatpush2.bf16.msra.mxu0 0
    %661 = vmatprep.subr.bf16.mxu0 0
    %662 = vmatpush2.bf16.msra.mxu0 0
    %663 = vmatprep.mubr.bf16.mxu0 0
    %664 = vmatmul.mubr.bf16.gmra.mxu0 %v525
    %v665 = vpop.f32.mrf.mxu0
    %v666 = vadd.f32 %v510, %v665
    %v667 = vpop.f32.mrf.mxu0
    %v668 = vpop.f32.mrf.mxu0
    %v669 = vpop.f32.mrf.mxu0
    %670 = vdwg.mxu0
    %v671 = vld [vmem:[#allocation3] sm:$0xff]
    %v672 = vadd.f32 %v671, %v562
    %v673 = vsub.f32 0.0, %v672
    %v674 = vmul.f32 %v673, 1.442695
    %v675 = vpow.pop %v674
    %v676 = vadd.f32 %v675, 1.0
    %v677 = vrcp.pop %v676
    %v678 = vld [vmem:[#allocation4] sm:$0xff]
    %v679 = vadd.f32 %v678, %v614
    %v680 = vsub.f32 0.0, %v679
    %v681 = vmul.f32 %v680, 1.442695
    %v682 = vpow.pop %v681
    %v683 = vadd.f32 %v682, 1.0
    %v684 = vrcp.pop %v683
    %v685 = vld [vmem:[#allocation5] sm:$0xff]
    %v686 = vmul.f32 %v677, %v666
    %v687 = vadd.f32 %v685, %v686
    %v688 = vtanh.pop %v687
    %v689 = vsub.f32 1.0, %v684
    %v690 = vmul.f32 %v689, %v688
    %v691 = vmul.f32 %v684, 0.0
    %v692 = vadd.f32 %v690, %v691
    %693 = vst.msk [vmem:[#allocation2] sm:$0xff] %vm333, %v692
    %v694 = vpack.c.bf16 %v692, %v692
    %v696 = vsel %vm333, %v694, 0
    %698 = vmatprep.subr.bf16.mxu0 0
    %699 = vmatpush1.bf16.msra.mxu0 0
    %700 = vmatprep.subr.bf16.mxu0 0
    %701 = vmatpush1.bf16.msra.mxu0 0
    %702 = vmatprep.subr.bf16.mxu0 0
    %703 = vmatpush1.bf16.msra.mxu0 0
    %704 = vmatprep.subr.bf16.mxu0 0
    %705 = vmatpush1.bf16.msra.mxu0 0
    %706 = vmatprep.subr.bf16.mxu0 0
    %707 = vmatpush1.bf16.msra.mxu0 0
    %708 = vmatprep.subr.bf16.mxu0 0
    %709 = vmatpush1.bf16.msra.mxu0 0
    %710 = vmatprep.subr.bf16.mxu0 0
    %711 = vmatpush1.bf16.msra.mxu0 %v521
    %712 = vmatprep.subr.bf16.mxu0 0
    %713 = vmatpush1.bf16.msra.mxu0 %v520
    %714 = vmatprep.subr.bf16.mxu0 0
    %715 = vmatpush2.bf16.msra.mxu0 0
    %716 = vmatprep.subr.bf16.mxu0 0
    %717 = vmatpush2.bf16.msra.mxu0 0
    %718 = vmatprep.subr.bf16.mxu0 0
    %719 = vmatpush2.bf16.msra.mxu0 0
    %720 = vmatprep.subr.bf16.mxu0 0
    %721 = vmatpush2.bf16.msra.mxu0 0
    %722 = vmatprep.subr.bf16.mxu0 0
    %723 = vmatpush2.bf16.msra.mxu0 0
    %724 = vmatprep.subr.bf16.mxu0 0
    %725 = vmatpush2.bf16.msra.mxu0 0
    %726 = vmatprep.subr.bf16.mxu0 0
    %727 = vmatpush2.bf16.msra.mxu0 0
    %728 = vmatprep.subr.bf16.mxu0 0
    %729 = vmatpush2.bf16.msra.mxu0 0
    %730 = vmatprep.mubr.bf16.mxu0 0
    %731 = vmatmul.mubr.bf16.gmra.mxu0 %v696
    %v732 = vpop.f32.mrf.mxu0
    %v733 = vadd.f32 0.0, %v732
    %v734 = vpop.f32.mrf.mxu0
    %v735 = vpop.f32.mrf.mxu0
    %v736 = vpop.f32.mrf.mxu0
    %737 = vdwg.mxu0
    %738 = vmatprep.subr.bf16.mxu0 0
    %739 = vmatpush1.bf16.msra.mxu0 0
    %740 = vmatprep.subr.bf16.mxu0 0
    %741 = vmatpush1.bf16.msra.mxu0 0
    %742 = vmatprep.subr.bf16.mxu0 0
    %743 = vmatpush1.bf16.msra.mxu0 0
    %744 = vmatprep.subr.bf16.mxu0 0
    %745 = vmatpush1.bf16.msra.mxu0 0
    %746 = vmatprep.subr.bf16.mxu0 0
    %747 = vmatpush1.bf16.msra.mxu0 0
    %748 = vmatprep.subr.bf16.mxu0 0
    %749 = vmatpush1.bf16.msra.mxu0 0
    %750 = vmatprep.subr.bf16.mxu0 0
    %751 = vmatpush1.bf16.msra.mxu0 %v576
    %752 = vmatprep.subr.bf16.mxu0 0
    %753 = vmatpush1.bf16.msra.mxu0 %v575
    %754 = vmatprep.subr.bf16.mxu0 0
    %755 = vmatpush2.bf16.msra.mxu0 0
    %756 = vmatprep.subr.bf16.mxu0 0
    %757 = vmatpush2.bf16.msra.mxu0 0
    %758 = vmatprep.subr.bf16.mxu0 0
    %759 = vmatpush2.bf16.msra.mxu0 0
    %760 = vmatprep.subr.bf16.mxu0 0
    %761 = vmatpush2.bf16.msra.mxu0 0
    %762 = vmatprep.subr.bf16.mxu0 0
    %763 = vmatpush2.bf16.msra.mxu0 0
    %764 = vmatprep.subr.bf16.mxu0 0
    %765 = vmatpush2.bf16.msra.mxu0 0
    %766 = vmatprep.subr.bf16.mxu0 0
    %767 = vmatpush2.bf16.msra.mxu0 0
    %768 = vmatprep.subr.bf16.mxu0 0
    %769 = vmatpush2.bf16.msra.mxu0 0
    %770 = vmatprep.mubr.bf16.mxu0 0
    %771 = vmatmul.mubr.bf16.gmra.mxu0 %v696
    %v772 = vpop.f32.mrf.mxu0
    %v773 = vadd.f32 0.0, %v772
    %v774 = vpop.f32.mrf.mxu0
    %v775 = vpop.f32.mrf.mxu0
    %v776 = vpop.f32.mrf.mxu0
    %777 = vdwg.mxu0
    %778 = vmatprep.subr.bf16.mxu0 0
    %779 = vmatpush1.bf16.msra.mxu0 0
    %780 = vmatprep.subr.bf16.mxu0 0
    %781 = vmatpush1.bf16.msra.mxu0 0
    %782 = vmatprep.subr.bf16.mxu0 0
    %783 = vmatpush1.bf16.msra.mxu0 0
    %784 = vmatprep.subr.bf16.mxu0 0
    %785 = vmatpush1.bf16.msra.mxu0 0
    %786 = vmatprep.subr.bf16.mxu0 0
    %787 = vmatpush1.bf16.msra.mxu0 0
    %788 = vmatprep.subr.bf16.mxu0 0
    %789 = vmatpush1.bf16.msra.mxu0 0
    %790 = vmatprep.subr.bf16.mxu0 0
    %791 = vmatpush1.bf16.msra.mxu0 %v628
    %792 = vmatprep.subr.bf16.mxu0 0
    %793 = vmatpush1.bf16.msra.mxu0 %v627
    %794 = vmatprep.subr.bf16.mxu0 0
    %795 = vmatpush2.bf16.msra.mxu0 0
    %796 = vmatprep.subr.bf16.mxu0 0
    %797 = vmatpush2.bf16.msra.mxu0 0
    %798 = vmatprep.subr.bf16.mxu0 0
    %799 = vmatpush2.bf16.msra.mxu0 0
    %800 = vmatprep.subr.bf16.mxu0 0
    %801 = vmatpush2.bf16.msra.mxu0 0
    %802 = vmatprep.subr.bf16.mxu0 0
    %803 = vmatpush2.bf16.msra.mxu0 0
    %804 = vmatprep.subr.bf16.mxu0 0
    %805 = vmatpush2.bf16.msra.mxu0 0
    %806 = vmatprep.subr.bf16.mxu0 0
    %807 = vmatpush2.bf16.msra.mxu0 0
    %808 = vmatprep.subr.bf16.mxu0 0
    %809 = vmatpush2.bf16.msra.mxu0 0
    %810 = vmatprep.mubr.bf16.mxu0 0
    %811 = vmatmul.mubr.bf16.gmra.mxu0 %v696
    %v812 = vpop.f32.mrf.mxu0
    %v813 = vadd.f32 %v510, %v812
    %v814 = vpop.f32.mrf.mxu0
    %v815 = vpop.f32.mrf.mxu0
    %v816 = vpop.f32.mrf.mxu0
    %817 = vdwg.mxu0
    %s818 = scalar_lea.vmem [#allocation3], 8
    %v819 = vld [vmem:[%s818] sm:$0xff]
    %v820 = vadd.f32 %v819, %v733
    %v821 = vsub.f32 0.0, %v820
    %v822 = vmul.f32 %v821, 1.442695
    %v823 = vpow.pop %v822
    %v824 = vadd.f32 %v823, 1.0
    %v825 = vrcp.pop %v824
    %s826 = scalar_lea.vmem [#allocation4], 8
    %v827 = vld [vmem:[%s826] sm:$0xff]
    %v828 = vadd.f32 %v827, %v773
    %v829 = vsub.f32 0.0, %v828
    %v830 = vmul.f32 %v829, 1.442695
    %v831 = vpow.pop %v830
    %v832 = vadd.f32 %v831, 1.0
    %v833 = vrcp.pop %v832
    %s834 = scalar_lea.vmem [#allocation5], 8
    %v835 = vld [vmem:[%s834] sm:$0xff]
    %v836 = vmul.f32 %v825, %v813
    %v837 = vadd.f32 %v835, %v836
    %v838 = vtanh.pop %v837
    %v839 = vsub.f32 1.0, %v833
    %v840 = vmul.f32 %v839, %v838
    %v841 = vmul.f32 %v833, %v692
    %v842 = vadd.f32 %v840, %v841
    %s843 = scalar_lea.vmem [#allocation2], 8
    %844 = vst.msk [vmem:[%s843] sm:$0xff] %vm333, %v842
    %v845 = vpack.c.bf16 %v842, %v842
    %v847 = vsel %vm333, %v845, 0
    %849 = vmatprep.subr.bf16.mxu0 0
    %850 = vmatpush1.bf16.msra.mxu0 0
    %851 = vmatprep.subr.bf16.mxu0 0
    %852 = vmatpush1.bf16.msra.mxu0 0
    %853 = vmatprep.subr.bf16.mxu0 0
    %854 = vmatpush1.bf16.msra.mxu0 0
    %855 = vmatprep.subr.bf16.mxu0 0
    %856 = vmatpush1.bf16.msra.mxu0 0
    %857 = vmatprep.subr.bf16.mxu0 0
    %858 = vmatpush1.bf16.msra.mxu0 0
    %859 = vmatprep.subr.bf16.mxu0 0
    %860 = vmatpush1.bf16.msra.mxu0 0
    %861 = vmatprep.subr.bf16.mxu0 0
    %862 = vmatpush1.bf16.msra.mxu0 %v521
    %863 = vmatprep.subr.bf16.mxu0 0
    %864 = vmatpush1.bf16.msra.mxu0 %v520
    %865 = vmatprep.subr.bf16.mxu0 0
    %866 = vmatpush2.bf16.msra.mxu0 0
    %867 = vmatprep.subr.bf16.mxu0 0
    %868 = vmatpush2.bf16.msra.mxu0 0
    %869 = vmatprep.subr.bf16.mxu0 0
    %870 = vmatpush2.bf16.msra.mxu0 0
    %871 = vmatprep.subr.bf16.mxu0 0
    %872 = vmatpush2.bf16.msra.mxu0 0
    %873 = vmatprep.subr.bf16.mxu0 0
    %874 = vmatpush2.bf16.msra.mxu0 0
    %875 = vmatprep.subr.bf16.mxu0 0
    %876 = vmatpush2.bf16.msra.mxu0 0
    %877 = vmatprep.subr.bf16.mxu0 0
    %878 = vmatpush2.bf16.msra.mxu0 0
    %879 = vmatprep.subr.bf16.mxu0 0
    %880 = vmatpush2.bf16.msra.mxu0 0
    %881 = vmatprep.mubr.bf16.mxu0 0
    %882 = vmatmul.mubr.bf16.gmra.mxu0 %v847
    %v883 = vpop.f32.mrf.mxu0
    %v884 = vadd.f32 0.0, %v883
    %v885 = vpop.f32.mrf.mxu0
    %v886 = vpop.f32.mrf.mxu0
    %v887 = vpop.f32.mrf.mxu0
    %888 = vdwg.mxu0
    %889 = vmatprep.subr.bf16.mxu0 0
    %890 = vmatpush1.bf16.msra.mxu0 0
    %891 = vmatprep.subr.bf16.mxu0 0
    %892 = vmatpush1.bf16.msra.mxu0 0
    %893 = vmatprep.subr.bf16.mxu0 0
    %894 = vmatpush1.bf16.msra.mxu0 0
    %895 = vmatprep.subr.bf16.mxu0 0
    %896 = vmatpush1.bf16.msra.mxu0 0
    %897 = vmatprep.subr.bf16.mxu0 0
    %898 = vmatpush1.bf16.msra.mxu0 0
    %899 = vmatprep.subr.bf16.mxu0 0
    %900 = vmatpush1.bf16.msra.mxu0 0
    %901 = vmatprep.subr.bf16.mxu0 0
    %902 = vmatpush1.bf16.msra.mxu0 %v576
    %903 = vmatprep.subr.bf16.mxu0 0
    %904 = vmatpush1.bf16.msra.mxu0 %v575
    %905 = vmatprep.subr.bf16.mxu0 0
    %906 = vmatpush2.bf16.msra.mxu0 0
    %907 = vmatprep.subr.bf16.mxu0 0
    %908 = vmatpush2.bf16.msra.mxu0 0
    %909 = vmatprep.subr.bf16.mxu0 0
    %910 = vmatpush2.bf16.msra.mxu0 0
    %911 = vmatprep.subr.bf16.mxu0 0
    %912 = vmatpush2.bf16.msra.mxu0 0
    %913 = vmatprep.subr.bf16.mxu0 0
    %914 = vmatpush2.bf16.msra.mxu0 0
    %915 = vmatprep.subr.bf16.mxu0 0
    %916 = vmatpush2.bf16.msra.mxu0 0
    %917 = vmatprep.subr.bf16.mxu0 0
    %918 = vmatpush2.bf16.msra.mxu0 0
    %919 = vmatprep.subr.bf16.mxu0 0
    %920 = vmatpush2.bf16.msra.mxu0 0
    %921 = vmatprep.mubr.bf16.mxu0 0
    %922 = vmatmul.mubr.bf16.gmra.mxu0 %v847
    %v923 = vpop.f32.mrf.mxu0
    %v924 = vadd.f32 0.0, %v923
    %v925 = vpop.f32.mrf.mxu0
    %v926 = vpop.f32.mrf.mxu0
    %v927 = vpop.f32.mrf.mxu0
    %928 = vdwg.mxu0
    %929 = vmatprep.subr.bf16.mxu0 0
    %930 = vmatpush1.bf16.msra.mxu0 0
    %931 = vmatprep.subr.bf16.mxu0 0
    %932 = vmatpush1.bf16.msra.mxu0 0
    %933 = vmatprep.subr.bf16.mxu0 0
    %934 = vmatpush1.bf16.msra.mxu0 0
    %935 = vmatprep.subr.bf16.mxu0 0
    %936 = vmatpush1.bf16.msra.mxu0 0
    %937 = vmatprep.subr.bf16.mxu0 0
    %938 = vmatpush1.bf16.msra.mxu0 0
    %939 = vmatprep.subr.bf16.mxu0 0
    %940 = vmatpush1.bf16.msra.mxu0 0
    %941 = vmatprep.subr.bf16.mxu0 0
    %942 = vmatpush1.bf16.msra.mxu0 %v628
    %943 = vmatprep.subr.bf16.mxu0 0
    %944 = vmatpush1.bf16.msra.mxu0 %v627
    %945 = vmatprep.subr.bf16.mxu0 0
    %946 = vmatpush2.bf16.msra.mxu0 0
    %947 = vmatprep.subr.bf16.mxu0 0
    %948 = vmatpush2.bf16.msra.mxu0 0
    %949 = vmatprep.subr.bf16.mxu0 0
    %950 = vmatpush2.bf16.msra.mxu0 0
    %951 = vmatprep.subr.bf16.mxu0 0
    %952 = vmatpush2.bf16.msra.mxu0 0
    %953 = vmatprep.subr.bf16.mxu0 0
    %954 = vmatpush2.bf16.msra.mxu0 0
    %955 = vmatprep.subr.bf16.mxu0 0
    %956 = vmatpush2.bf16.msra.mxu0 0
    %957 = vmatprep.subr.bf16.mxu0 0
    %958 = vmatpush2.bf16.msra.mxu0 0
    %959 = vmatprep.subr.bf16.mxu0 0
    %960 = vmatpush2.bf16.msra.mxu0 0
    %961 = vmatprep.mubr.bf16.mxu0 0
    %962 = vmatmul.mubr.bf16.gmra.mxu0 %v847
    %v963 = vpop.f32.mrf.mxu0
    %v964 = vadd.f32 %v510, %v963
    %v965 = vpop.f32.mrf.mxu0
    %v966 = vpop.f32.mrf.mxu0
    %v967 = vpop.f32.mrf.mxu0
    %968 = vdwg.mxu0
    %s969 = scalar_lea.vmem [#allocation3], 16
    %v970 = vld [vmem:[%s969] sm:$0xff]
    %v971 = vadd.f32 %v970, %v884
    %v972 = vsub.f32 0.0, %v971
    %v973 = vmul.f32 %v972, 1.442695
    %v974 = vpow.pop %v973
    %v975 = vadd.f32 %v974, 1.0
    %v976 = vrcp.pop %v975
    %s977 = scalar_lea.vmem [#allocation4], 16
    %v978 = vld [vmem:[%s977] sm:$0xff]
    %v979 = vadd.f32 %v978, %v924
    %v980 = vsub.f32 0.0, %v979
    %v981 = vmul.f32 %v980, 1.442695
    %v982 = vpow.pop %v981
    %v983 = vadd.f32 %v982, 1.0
    %v984 = vrcp.pop %v983
    %s985 = scalar_lea.vmem [#allocation5], 16
    %v986 = vld [vmem:[%s985] sm:$0xff]
    %v987 = vmul.f32 %v976, %v964
    %v988 = vadd.f32 %v986, %v987
    %v989 = vtanh.pop %v988
    %v990 = vsub.f32 1.0, %v984
    %v991 = vmul.f32 %v990, %v989
    %v992 = vmul.f32 %v984, %v842
    %v993 = vadd.f32 %v991, %v992
    %s994 = scalar_lea.vmem [#allocation2], 16
    %995 = vst.msk [vmem:[%s994] sm:$0xff] %vm333, %v993
    %v996 = vpack.c.bf16 %v993, %v993
    %v998 = vsel %vm333, %v996, 0
    %1000 = vmatprep.subr.bf16.mxu0 0
    %1001 = vmatpush1.bf16.msra.mxu0 0
    %1002 = vmatprep.subr.bf16.mxu0 0
    %1003 = vmatpush1.bf16.msra.mxu0 0
    %1004 = vmatprep.subr.bf16.mxu0 0
    %1005 = vmatpush1.bf16.msra.mxu0 0
    %1006 = vmatprep.subr.bf16.mxu0 0
    %1007 = vmatpush1.bf16.msra.mxu0 0
    %1008 = vmatprep.subr.bf16.mxu0 0
    %1009 = vmatpush1.bf16.msra.mxu0 0
    %1010 = vmatprep.subr.bf16.mxu0 0
    %1011 = vmatpush1.bf16.msra.mxu0 0
    %1012 = vmatprep.subr.bf16.mxu0 0
    %1013 = vmatpush1.bf16.msra.mxu0 %v521
    %1014 = vmatprep.subr.bf16.mxu0 0
    %1015 = vmatpush1.bf16.msra.mxu0 %v520
    %1016 = vmatprep.subr.bf16.mxu0 0
    %1017 = vmatpush2.bf16.msra.mxu0 0
    %1018 = vmatprep.subr.bf16.mxu0 0
    %1019 = vmatpush2.bf16.msra.mxu0 0
    %1020 = vmatprep.subr.bf16.mxu0 0
    %1021 = vmatpush2.bf16.msra.mxu0 0
    %1022 = vmatprep.subr.bf16.mxu0 0
    %1023 = vmatpush2.bf16.msra.mxu0 0
    %1024 = vmatprep.subr.bf16.mxu0 0
    %1025 = vmatpush2.bf16.msra.mxu0 0
    %1026 = vmatprep.subr.bf16.mxu0 0
    %1027 = vmatpush2.bf16.msra.mxu0 0
    %1028 = vmatprep.subr.bf16.mxu0 0
    %1029 = vmatpush2.bf16.msra.mxu0 0
    %1030 = vmatprep.subr.bf16.mxu0 0
    %1031 = vmatpush2.bf16.msra.mxu0 0
    %1032 = vmatprep.mubr.bf16.mxu0 0
    %1033 = vmatmul.mubr.bf16.gmra.mxu0 %v998
    %v1034 = vpop.f32.mrf.mxu0
    %v1035 = vadd.f32 0.0, %v1034
    %v1036 = vpop.f32.mrf.mxu0
    %v1037 = vpop.f32.mrf.mxu0
    %v1038 = vpop.f32.mrf.mxu0
    %1039 = vdwg.mxu0
    %1040 = vmatprep.subr.bf16.mxu0 0
    %1041 = vmatpush1.bf16.msra.mxu0 0
    %1042 = vmatprep.subr.bf16.mxu0 0
    %1043 = vmatpush1.bf16.msra.mxu0 0
    %1044 = vmatprep.subr.bf16.mxu0 0
    %1045 = vmatpush1.bf16.msra.mxu0 0
    %1046 = vmatprep.subr.bf16.mxu0 0
    %1047 = vmatpush1.bf16.msra.mxu0 0
    %1048 = vmatprep.subr.bf16.mxu0 0
    %1049 = vmatpush1.bf16.msra.mxu0 0
    %1050 = vmatprep.subr.bf16.mxu0 0
    %1051 = vmatpush1.bf16.msra.mxu0 0
    %1052 = vmatprep.subr.bf16.mxu0 0
    %1053 = vmatpush1.bf16.msra.mxu0 %v576
    %1054 = vmatprep.subr.bf16.mxu0 0
    %1055 = vmatpush1.bf16.msra.mxu0 %v575
    %1056 = vmatprep.subr.bf16.mxu0 0
    %1057 = vmatpush2.bf16.msra.mxu0 0
    %1058 = vmatprep.subr.bf16.mxu0 0
    %1059 = vmatpush2.bf16.msra.mxu0 0
    %1060 = vmatprep.subr.bf16.mxu0 0
    %1061 = vmatpush2.bf16.msra.mxu0 0
    %1062 = vmatprep.subr.bf16.mxu0 0
    %1063 = vmatpush2.bf16.msra.mxu0 0
    %1064 = vmatprep.subr.bf16.mxu0 0
    %1065 = vmatpush2.bf16.msra.mxu0 0
    %1066 = vmatprep.subr.bf16.mxu0 0
    %1067 = vmatpush2.bf16.msra.mxu0 0
    %1068 = vmatprep.subr.bf16.mxu0 0
    %1069 = vmatpush2.bf16.msra.mxu0 0
    %1070 = vmatprep.subr.bf16.mxu0 0
    %1071 = vmatpush2.bf16.msra.mxu0 0
    %1072 = vmatprep.mubr.bf16.mxu0 0
    %1073 = vmatmul.mubr.bf16.gmra.mxu0 %v998
    %v1074 = vpop.f32.mrf.mxu0
    %v1075 = vadd.f32 0.0, %v1074
    %v1076 = vpop.f32.mrf.mxu0
    %v1077 = vpop.f32.mrf.mxu0
    %v1078 = vpop.f32.mrf.mxu0
    %1079 = vdwg.mxu0
    %1080 = vmatprep.subr.bf16.mxu0 0
    %1081 = vmatpush1.bf16.msra.mxu0 0
    %1082 = vmatprep.subr.bf16.mxu0 0
    %1083 = vmatpush1.bf16.msra.mxu0 0
    %1084 = vmatprep.subr.bf16.mxu0 0
    %1085 = vmatpush1.bf16.msra.mxu0 0
    %1086 = vmatprep.subr.bf16.mxu0 0
    %1087 = vmatpush1.bf16.msra.mxu0 0
    %1088 = vmatprep.subr.bf16.mxu0 0
    %1089 = vmatpush1.bf16.msra.mxu0 0
    %1090 = vmatprep.subr.bf16.mxu0 0
    %1091 = vmatpush1.bf16.msra.mxu0 0
    %1092 = vmatprep.subr.bf16.mxu0 0
    %1093 = vmatpush1.bf16.msra.mxu0 %v628
    %1094 = vmatprep.subr.bf16.mxu0 0
    %1095 = vmatpush1.bf16.msra.mxu0 %v627
    %1096 = vmatprep.subr.bf16.mxu0 0
    %1097 = vmatpush2.bf16.msra.mxu0 0
    %1098 = vmatprep.subr.bf16.mxu0 0
    %1099 = vmatpush2.bf16.msra.mxu0 0
    %1100 = vmatprep.subr.bf16.mxu0 0
    %1101 = vmatpush2.bf16.msra.mxu0 0
    %1102 = vmatprep.subr.bf16.mxu0 0
    %1103 = vmatpush2.bf16.msra.mxu0 0
    %1104 = vmatprep.subr.bf16.mxu0 0
    %1105 = vmatpush2.bf16.msra.mxu0 0
    %1106 = vmatprep.subr.bf16.mxu0 0
    %1107 = vmatpush2.bf16.msra.mxu0 0
    %1108 = vmatprep.subr.bf16.mxu0 0
    %1109 = vmatpush2.bf16.msra.mxu0 0
    %1110 = vmatprep.subr.bf16.mxu0 0
    %1111 = vmatpush2.bf16.msra.mxu0 0
    %1112 = vmatprep.mubr.bf16.mxu0 0
    %1113 = vmatmul.mubr.bf16.gmra.mxu0 %v998
    %v1114 = vpop.f32.mrf.mxu0
    %v1115 = vadd.f32 %v510, %v1114
    %v1116 = vpop.f32.mrf.mxu0
    %v1117 = vpop.f32.mrf.mxu0
    %v1118 = vpop.f32.mrf.mxu0
    %1119 = vdwg.mxu0
    %s1120 = scalar_lea.vmem [#allocation3], 24
    %v1121 = vld [vmem:[%s1120] sm:$0xff]
    %v1122 = vadd.f32 %v1121, %v1035
    %v1123 = vsub.f32 0.0, %v1122
    %v1124 = vmul.f32 %v1123, 1.442695
    %v1125 = vpow.pop %v1124
    %v1126 = vadd.f32 %v1125, 1.0
    %v1127 = vrcp.pop %v1126
    %s1128 = scalar_lea.vmem [#allocation4], 24
    %v1129 = vld [vmem:[%s1128] sm:$0xff]
    %v1130 = vadd.f32 %v1129, %v1075
    %v1131 = vsub.f32 0.0, %v1130
    %v1132 = vmul.f32 %v1131, 1.442695
    %v1133 = vpow.pop %v1132
    %v1134 = vadd.f32 %v1133, 1.0
    %v1135 = vrcp.pop %v1134
    %s1136 = scalar_lea.vmem [#allocation5], 24
    %v1137 = vld [vmem:[%s1136] sm:$0xff]
    %v1138 = vmul.f32 %v1127, %v1115
    %v1139 = vadd.f32 %v1137, %v1138
    %v1140 = vtanh.pop %v1139
    %v1141 = vsub.f32 1.0, %v1135
    %v1142 = vmul.f32 %v1141, %v1140
    %v1143 = vmul.f32 %v1135, %v993
    %v1144 = vadd.f32 %v1142, %v1143
    %s1145 = scalar_lea.vmem [#allocation2], 24
    %1146 = vst.msk [vmem:[%s1145] sm:$0xff] %vm333, %v1144
    %v1147 = vpack.c.bf16 %v1144, %v1144
    %v1149 = vsel %vm333, %v1147, 0
    %1151 = vmatprep.subr.bf16.mxu0 0
    %1152 = vmatpush1.bf16.msra.mxu0 0
    %1153 = vmatprep.subr.bf16.mxu0 0
    %1154 = vmatpush1.bf16.msra.mxu0 0
    %1155 = vmatprep.subr.bf16.mxu0 0
    %1156 = vmatpush1.bf16.msra.mxu0 0
    %1157 = vmatprep.subr.bf16.mxu0 0
    %1158 = vmatpush1.bf16.msra.mxu0 0
    %1159 = vmatprep.subr.bf16.mxu0 0
    %1160 = vmatpush1.bf16.msra.mxu0 0
    %1161 = vmatprep.subr.bf16.mxu0 0
    %1162 = vmatpush1.bf16.msra.mxu0 0
    %1163 = vmatprep.subr.bf16.mxu0 0
    %1164 = vmatpush1.bf16.msra.mxu0 %v521
    %1165 = vmatprep.subr.bf16.mxu0 0
    %1166 = vmatpush1.bf16.msra.mxu0 %v520
    %1167 = vmatprep.subr.bf16.mxu0 0
    %1168 = vmatpush2.bf16.msra.mxu0 0
    %1169 = vmatprep.subr.bf16.mxu0 0
    %1170 = vmatpush2.bf16.msra.mxu0 0
    %1171 = vmatprep.subr.bf16.mxu0 0
    %1172 = vmatpush2.bf16.msra.mxu0 0
    %1173 = vmatprep.subr.bf16.mxu0 0
    %1174 = vmatpush2.bf16.msra.mxu0 0
    %1175 = vmatprep.subr.bf16.mxu0 0
    %1176 = vmatpush2.bf16.msra.mxu0 0
    %1177 = vmatprep.subr.bf16.mxu0 0
    %1178 = vmatpush2.bf16.msra.mxu0 0
    %1179 = vmatprep.subr.bf16.mxu0 0
    %1180 = vmatpush2.bf16.msra.mxu0 0
    %1181 = vmatprep.subr.bf16.mxu0 0
    %1182 = vmatpush2.bf16.msra.mxu0 0
    %1183 = vmatprep.mubr.bf16.mxu0 0
    %1184 = vmatmul.mubr.bf16.gmra.mxu0 %v1149
    %v1185 = vpop.f32.mrf.mxu0
    %v1186 = vadd.f32 0.0, %v1185
    %v1187 = vpop.f32.mrf.mxu0
    %v1188 = vpop.f32.mrf.mxu0
    %v1189 = vpop.f32.mrf.mxu0
    %1190 = vdwg.mxu0
    %1191 = vmatprep.subr.bf16.mxu0 0
    %1192 = vmatpush1.bf16.msra.mxu0 0
    %1193 = vmatprep.subr.bf16.mxu0 0
    %1194 = vmatpush1.bf16.msra.mxu0 0
    %1195 = vmatprep.subr.bf16.mxu0 0
    %1196 = vmatpush1.bf16.msra.mxu0 0
    %1197 = vmatprep.subr.bf16.mxu0 0
    %1198 = vmatpush1.bf16.msra.mxu0 0
    %1199 = vmatprep.subr.bf16.mxu0 0
    %1200 = vmatpush1.bf16.msra.mxu0 0
    %1201 = vmatprep.subr.bf16.mxu0 0
    %1202 = vmatpush1.bf16.msra.mxu0 0
    %1203 = vmatprep.subr.bf16.mxu0 0
    %1204 = vmatpush1.bf16.msra.mxu0 %v576
    %1205 = vmatprep.subr.bf16.mxu0 0
    %1206 = vmatpush1.bf16.msra.mxu0 %v575
    %1207 = vmatprep.subr.bf16.mxu0 0
    %1208 = vmatpush2.bf16.msra.mxu0 0
    %1209 = vmatprep.subr.bf16.mxu0 0
    %1210 = vmatpush2.bf16.msra.mxu0 0
    %1211 = vmatprep.subr.bf16.mxu0 0
    %1212 = vmatpush2.bf16.msra.mxu0 0
    %1213 = vmatprep.subr.bf16.mxu0 0
    %1214 = vmatpush2.bf16.msra.mxu0 0
    %1215 = vmatprep.subr.bf16.mxu0 0
    %1216 = vmatpush2.bf16.msra.mxu0 0
    %1217 = vmatprep.subr.bf16.mxu0 0
    %1218 = vmatpush2.bf16.msra.mxu0 0
    %1219 = vmatprep.subr.bf16.mxu0 0
    %1220 = vmatpush2.bf16.msra.mxu0 0
    %1221 = vmatprep.subr.bf16.mxu0 0
    %1222 = vmatpush2.bf16.msra.mxu0 0
    %1223 = vmatprep.mubr.bf16.mxu0 0
    %1224 = vmatmul.mubr.bf16.gmra.mxu0 %v1149
    %v1225 = vpop.f32.mrf.mxu0
    %v1226 = vadd.f32 0.0, %v1225
    %v1227 = vpop.f32.mrf.mxu0
    %v1228 = vpop.f32.mrf.mxu0
    %v1229 = vpop.f32.mrf.mxu0
    %1230 = vdwg.mxu0
    %1231 = vmatprep.subr.bf16.mxu0 0
    %1232 = vmatpush1.bf16.msra.mxu0 0
    %1233 = vmatprep.subr.bf16.mxu0 0
    %1234 = vmatpush1.bf16.msra.mxu0 0
    %1235 = vmatprep.subr.bf16.mxu0 0
    %1236 = vmatpush1.bf16.msra.mxu0 0
    %1237 = vmatprep.subr.bf16.mxu0 0
    %1238 = vmatpush1.bf16.msra.mxu0 0
    %1239 = vmatprep.subr.bf16.mxu0 0
    %1240 = vmatpush1.bf16.msra.mxu0 0
    %1241 = vmatprep.subr.bf16.mxu0 0
    %1242 = vmatpush1.bf16.msra.mxu0 0
    %1243 = vmatprep.subr.bf16.mxu0 0
    %1244 = vmatpush1.bf16.msra.mxu0 %v628
    %1245 = vmatprep.subr.bf16.mxu0 0
    %1246 = vmatpush1.bf16.msra.mxu0 %v627
    %1247 = vmatprep.subr.bf16.mxu0 0
    %1248 = vmatpush2.bf16.msra.mxu0 0
    %1249 = vmatprep.subr.bf16.mxu0 0
    %1250 = vmatpush2.bf16.msra.mxu0 0
    %1251 = vmatprep.subr.bf16.mxu0 0
    %1252 = vmatpush2.bf16.msra.mxu0 0
    %1253 = vmatprep.subr.bf16.mxu0 0
    %1254 = vmatpush2.bf16.msra.mxu0 0
    %1255 = vmatprep.subr.bf16.mxu0 0
    %1256 = vmatpush2.bf16.msra.mxu0 0
    %1257 = vmatprep.subr.bf16.mxu0 0
    %1258 = vmatpush2.bf16.msra.mxu0 0
    %1259 = vmatprep.subr.bf16.mxu0 0
    %1260 = vmatpush2.bf16.msra.mxu0 0
    %1261 = vmatprep.subr.bf16.mxu0 0
    %1262 = vmatpush2.bf16.msra.mxu0 0
    %1263 = vmatprep.mubr.bf16.mxu0 0
    %1264 = vmatmul.mubr.bf16.gmra.mxu0 %v1149
    %v1265 = vpop.f32.mrf.mxu0
    %v1266 = vadd.f32 %v510, %v1265
    %v1267 = vpop.f32.mrf.mxu0
    %v1268 = vpop.f32.mrf.mxu0
    %v1269 = vpop.f32.mrf.mxu0
    %1270 = vdwg.mxu0
    %s1271 = scalar_lea.vmem [#allocation3], 32
    %v1272 = vld [vmem:[%s1271] sm:$0xff]
    %v1273 = vadd.f32 %v1272, %v1186
    %v1274 = vsub.f32 0.0, %v1273
    %v1275 = vmul.f32 %v1274, 1.442695
    %v1276 = vpow.pop %v1275
    %v1277 = vadd.f32 %v1276, 1.0
    %v1278 = vrcp.pop %v1277
    %s1279 = scalar_lea.vmem [#allocation4], 32
    %v1280 = vld [vmem:[%s1279] sm:$0xff]
    %v1281 = vadd.f32 %v1280, %v1226
    %v1282 = vsub.f32 0.0, %v1281
    %v1283 = vmul.f32 %v1282, 1.442695
    %v1284 = vpow.pop %v1283
    %v1285 = vadd.f32 %v1284, 1.0
    %v1286 = vrcp.pop %v1285
    %s1287 = scalar_lea.vmem [#allocation5], 32
    %v1288 = vld [vmem:[%s1287] sm:$0xff]
    %v1289 = vmul.f32 %v1278, %v1266
    %v1290 = vadd.f32 %v1288, %v1289
    %v1291 = vtanh.pop %v1290
    %v1292 = vsub.f32 1.0, %v1286
    %v1293 = vmul.f32 %v1292, %v1291
    %v1294 = vmul.f32 %v1286, %v1144
    %v1295 = vadd.f32 %v1293, %v1294
    %s1296 = scalar_lea.vmem [#allocation2], 32
    %1297 = vst.msk [vmem:[%s1296] sm:$0xff] %vm333, %v1295
    %v1298 = vpack.c.bf16 %v1295, %v1295
    %v1300 = vsel %vm333, %v1298, 0
    %1302 = vmatprep.subr.bf16.mxu0 0
    %1303 = vmatpush1.bf16.msra.mxu0 0
    %1304 = vmatprep.subr.bf16.mxu0 0
    %1305 = vmatpush1.bf16.msra.mxu0 0
    %1306 = vmatprep.subr.bf16.mxu0 0
    %1307 = vmatpush1.bf16.msra.mxu0 0
    %1308 = vmatprep.subr.bf16.mxu0 0
    %1309 = vmatpush1.bf16.msra.mxu0 0
    %1310 = vmatprep.subr.bf16.mxu0 0
    %1311 = vmatpush1.bf16.msra.mxu0 0
    %1312 = vmatprep.subr.bf16.mxu0 0
    %1313 = vmatpush1.bf16.msra.mxu0 0
    %1314 = vmatprep.subr.bf16.mxu0 0
    %1315 = vmatpush1.bf16.msra.mxu0 %v521
    %1316 = vmatprep.subr.bf16.mxu0 0
    %1317 = vmatpush1.bf16.msra.mxu0 %v520
    %1318 = vmatprep.subr.bf16.mxu0 0
    %1319 = vmatpush2.bf16.msra.mxu0 0
    %1320 = vmatprep.subr.bf16.mxu0 0
    %1321 = vmatpush2.bf16.msra.mxu0 0
    %1322 = vmatprep.subr.bf16.mxu0 0
    %1323 = vmatpush2.bf16.msra.mxu0 0
    %1324 = vmatprep.subr.bf16.mxu0 0
    %1325 = vmatpush2.bf16.msra.mxu0 0
    %1326 = vmatprep.subr.bf16.mxu0 0
    %1327 = vmatpush2.bf16.msra.mxu0 0
    %1328 = vmatprep.subr.bf16.mxu0 0
    %1329 = vmatpush2.bf16.msra.mxu0 0
    %1330 = vmatprep.subr.bf16.mxu0 0
    %1331 = vmatpush2.bf16.msra.mxu0 0
    %1332 = vmatprep.subr.bf16.mxu0 0
    %1333 = vmatpush2.bf16.msra.mxu0 0
    %1334 = vmatprep.mubr.bf16.mxu0 0
    %1335 = vmatmul.mubr.bf16.gmra.mxu0 %v1300
    %v1336 = vpop.f32.mrf.mxu0
    %v1337 = vadd.f32 0.0, %v1336
    %v1338 = vpop.f32.mrf.mxu0
    %v1339 = vpop.f32.mrf.mxu0
    %v1340 = vpop.f32.mrf.mxu0
    %1341 = vdwg.mxu0
    %1342 = vmatprep.subr.bf16.mxu0 0
    %1343 = vmatpush1.bf16.msra.mxu0 0
    %1344 = vmatprep.subr.bf16.mxu0 0
    %1345 = vmatpush1.bf16.msra.mxu0 0
    %1346 = vmatprep.subr.bf16.mxu0 0
    %1347 = vmatpush1.bf16.msra.mxu0 0
    %1348 = vmatprep.subr.bf16.mxu0 0
    %1349 = vmatpush1.bf16.msra.mxu0 0
    %1350 = vmatprep.subr.bf16.mxu0 0
    %1351 = vmatpush1.bf16.msra.mxu0 0
    %1352 = vmatprep.subr.bf16.mxu0 0
    %1353 = vmatpush1.bf16.msra.mxu0 0
    %1354 = vmatprep.subr.bf16.mxu0 0
    %1355 = vmatpush1.bf16.msra.mxu0 %v576
    %1356 = vmatprep.subr.bf16.mxu0 0
    %1357 = vmatpush1.bf16.msra.mxu0 %v575
    %1358 = vmatprep.subr.bf16.mxu0 0
    %1359 = vmatpush2.bf16.msra.mxu0 0
    %1360 = vmatprep.subr.bf16.mxu0 0
    %1361 = vmatpush2.bf16.msra.mxu0 0
    %1362 = vmatprep.subr.bf16.mxu0 0
    %1363 = vmatpush2.bf16.msra.mxu0 0
    %1364 = vmatprep.subr.bf16.mxu0 0
    %1365 = vmatpush2.bf16.msra.mxu0 0
    %1366 = vmatprep.subr.bf16.mxu0 0
    %1367 = vmatpush2.bf16.msra.mxu0 0
    %1368 = vmatprep.subr.bf16.mxu0 0
    %1369 = vmatpush2.bf16.msra.mxu0 0
    %1370 = vmatprep.subr.bf16.mxu0 0
    %1371 = vmatpush2.bf16.msra.mxu0 0
    %1372 = vmatprep.subr.bf16.mxu0 0
    %1373 = vmatpush2.bf16.msra.mxu0 0
    %1374 = vmatprep.mubr.bf16.mxu0 0
    %1375 = vmatmul.mubr.bf16.gmra.mxu0 %v1300
    %v1376 = vpop.f32.mrf.mxu0
    %v1377 = vadd.f32 0.0, %v1376
    %v1378 = vpop.f32.mrf.mxu0
    %v1379 = vpop.f32.mrf.mxu0
    %v1380 = vpop.f32.mrf.mxu0
    %1381 = vdwg.mxu0
    %1382 = vmatprep.subr.bf16.mxu0 0
    %1383 = vmatpush1.bf16.msra.mxu0 0
    %1384 = vmatprep.subr.bf16.mxu0 0
    %1385 = vmatpush1.bf16.msra.mxu0 0
    %1386 = vmatprep.subr.bf16.mxu0 0
    %1387 = vmatpush1.bf16.msra.mxu0 0
    %1388 = vmatprep.subr.bf16.mxu0 0
    %1389 = vmatpush1.bf16.msra.mxu0 0
    %1390 = vmatprep.subr.bf16.mxu0 0
    %1391 = vmatpush1.bf16.msra.mxu0 0
    %1392 = vmatprep.subr.bf16.mxu0 0
    %1393 = vmatpush1.bf16.msra.mxu0 0
    %1394 = vmatprep.subr.bf16.mxu0 0
    %1395 = vmatpush1.bf16.msra.mxu0 %v628
    %1396 = vmatprep.subr.bf16.mxu0 0
    %1397 = vmatpush1.bf16.msra.mxu0 %v627
    %1398 = vmatprep.subr.bf16.mxu0 0
    %1399 = vmatpush2.bf16.msra.mxu0 0
    %1400 = vmatprep.subr.bf16.mxu0 0
    %1401 = vmatpush2.bf16.msra.mxu0 0
    %1402 = vmatprep.subr.bf16.mxu0 0
    %1403 = vmatpush2.bf16.msra.mxu0 0
    %1404 = vmatprep.subr.bf16.mxu0 0
    %1405 = vmatpush2.bf16.msra.mxu0 0
    %1406 = vmatprep.subr.bf16.mxu0 0
    %1407 = vmatpush2.bf16.msra.mxu0 0
    %1408 = vmatprep.subr.bf16.mxu0 0
    %1409 = vmatpush2.bf16.msra.mxu0 0
    %1410 = vmatprep.subr.bf16.mxu0 0
    %1411 = vmatpush2.bf16.msra.mxu0 0
    %1412 = vmatprep.subr.bf16.mxu0 0
    %1413 = vmatpush2.bf16.msra.mxu0 0
    %1414 = vmatprep.mubr.bf16.mxu0 0
    %1415 = vmatmul.mubr.bf16.gmra.mxu0 %v1300
    %v1416 = vpop.f32.mrf.mxu0
    %v1417 = vadd.f32 %v510, %v1416
    %v1418 = vpop.f32.mrf.mxu0
    %v1419 = vpop.f32.mrf.mxu0
    %v1420 = vpop.f32.mrf.mxu0
    %1421 = vdwg.mxu0
    %s1422 = scalar_lea.vmem [#allocation3], 40
    %v1423 = vld [vmem:[%s1422] sm:$0xff]
    %v1424 = vadd.f32 %v1423, %v1337
    %v1425 = vsub.f32 0.0, %v1424
    %v1426 = vmul.f32 %v1425, 1.442695
    %v1427 = vpow.pop %v1426
    %v1428 = vadd.f32 %v1427, 1.0
    %v1429 = vrcp.pop %v1428
    %s1430 = scalar_lea.vmem [#allocation4], 40
    %v1431 = vld [vmem:[%s1430] sm:$0xff]
    %v1432 = vadd.f32 %v1431, %v1377
    %v1433 = vsub.f32 0.0, %v1432
    %v1434 = vmul.f32 %v1433, 1.442695
    %v1435 = vpow.pop %v1434
    %v1436 = vadd.f32 %v1435, 1.0
    %v1437 = vrcp.pop %v1436
    %s1438 = scalar_lea.vmem [#allocation5], 40
    %v1439 = vld [vmem:[%s1438] sm:$0xff]
    %v1440 = vmul.f32 %v1429, %v1417
    %v1441 = vadd.f32 %v1439, %v1440
    %v1442 = vtanh.pop %v1441
    %v1443 = vsub.f32 1.0, %v1437
    %v1444 = vmul.f32 %v1443, %v1442
    %v1445 = vmul.f32 %v1437, %v1295
    %v1446 = vadd.f32 %v1444, %v1445
    %s1447 = scalar_lea.vmem [#allocation2], 40
    %1448 = vst.msk [vmem:[%s1447] sm:$0xff] %vm333, %v1446
    %v1449 = vpack.c.bf16 %v1446, %v1446
    %v1451 = vsel %vm333, %v1449, 0
    %1453 = vmatprep.subr.bf16.mxu0 0
    %1454 = vmatpush1.bf16.msra.mxu0 0
    %1455 = vmatprep.subr.bf16.mxu0 0
    %1456 = vmatpush1.bf16.msra.mxu0 0
    %1457 = vmatprep.subr.bf16.mxu0 0
    %1458 = vmatpush1.bf16.msra.mxu0 0
    %1459 = vmatprep.subr.bf16.mxu0 0
    %1460 = vmatpush1.bf16.msra.mxu0 0
    %1461 = vmatprep.subr.bf16.mxu0 0
    %1462 = vmatpush1.bf16.msra.mxu0 0
    %1463 = vmatprep.subr.bf16.mxu0 0
    %1464 = vmatpush1.bf16.msra.mxu0 0
    %1465 = vmatprep.subr.bf16.mxu0 0
    %1466 = vmatpush1.bf16.msra.mxu0 %v521
    %1467 = vmatprep.subr.bf16.mxu0 0
    %1468 = vmatpush1.bf16.msra.mxu0 %v520
    %1469 = vmatprep.subr.bf16.mxu0 0
    %1470 = vmatpush2.bf16.msra.mxu0 0
    %1471 = vmatprep.subr.bf16.mxu0 0
    %1472 = vmatpush2.bf16.msra.mxu0 0
    %1473 = vmatprep.subr.bf16.mxu0 0
    %1474 = vmatpush2.bf16.msra.mxu0 0
    %1475 = vmatprep.subr.bf16.mxu0 0
    %1476 = vmatpush2.bf16.msra.mxu0 0
    %1477 = vmatprep.subr.bf16.mxu0 0
    %1478 = vmatpush2.bf16.msra.mxu0 0
    %1479 = vmatprep.subr.bf16.mxu0 0
    %1480 = vmatpush2.bf16.msra.mxu0 0
    %1481 = vmatprep.subr.bf16.mxu0 0
    %1482 = vmatpush2.bf16.msra.mxu0 0
    %1483 = vmatprep.subr.bf16.mxu0 0
    %1484 = vmatpush2.bf16.msra.mxu0 0
    %1485 = vmatprep.mubr.bf16.mxu0 0
    %1486 = vmatmul.mubr.bf16.gmra.mxu0 %v1451
    %v1487 = vpop.f32.mrf.mxu0
    %v1488 = vadd.f32 0.0, %v1487
    %v1489 = vpop.f32.mrf.mxu0
    %v1490 = vpop.f32.mrf.mxu0
    %v1491 = vpop.f32.mrf.mxu0
    %1492 = vdwg.mxu0
    %1493 = vmatprep.subr.bf16.mxu0 0
    %1494 = vmatpush1.bf16.msra.mxu0 0
    %1495 = vmatprep.subr.bf16.mxu0 0
    %1496 = vmatpush1.bf16.msra.mxu0 0
    %1497 = vmatprep.subr.bf16.mxu0 0
    %1498 = vmatpush1.bf16.msra.mxu0 0
    %1499 = vmatprep.subr.bf16.mxu0 0
    %1500 = vmatpush1.bf16.msra.mxu0 0
    %1501 = vmatprep.subr.bf16.mxu0 0
    %1502 = vmatpush1.bf16.msra.mxu0 0
    %1503 = vmatprep.subr.bf16.mxu0 0
    %1504 = vmatpush1.bf16.msra.mxu0 0
    %1505 = vmatprep.subr.bf16.mxu0 0
    %1506 = vmatpush1.bf16.msra.mxu0 %v576
    %1507 = vmatprep.subr.bf16.mxu0 0
    %1508 = vmatpush1.bf16.msra.mxu0 %v575
    %1509 = vmatprep.subr.bf16.mxu0 0
    %1510 = vmatpush2.bf16.msra.mxu0 0
    %1511 = vmatprep.subr.bf16.mxu0 0
    %1512 = vmatpush2.bf16.msra.mxu0 0
    %1513 = vmatprep.subr.bf16.mxu0 0
    %1514 = vmatpush2.bf16.msra.mxu0 0
    %1515 = vmatprep.subr.bf16.mxu0 0
    %1516 = vmatpush2.bf16.msra.mxu0 0
    %1517 = vmatprep.subr.bf16.mxu0 0
    %1518 = vmatpush2.bf16.msra.mxu0 0
    %1519 = vmatprep.subr.bf16.mxu0 0
    %1520 = vmatpush2.bf16.msra.mxu0 0
    %1521 = vmatprep.subr.bf16.mxu0 0
    %1522 = vmatpush2.bf16.msra.mxu0 0
    %1523 = vmatprep.subr.bf16.mxu0 0
    %1524 = vmatpush2.bf16.msra.mxu0 0
    %1525 = vmatprep.mubr.bf16.mxu0 0
    %1526 = vmatmul.mubr.bf16.gmra.mxu0 %v1451
    %v1527 = vpop.f32.mrf.mxu0
    %v1528 = vadd.f32 0.0, %v1527
    %v1529 = vpop.f32.mrf.mxu0
    %v1530 = vpop.f32.mrf.mxu0
    %v1531 = vpop.f32.mrf.mxu0
    %1532 = vdwg.mxu0
    %1533 = vmatprep.subr.bf16.mxu0 0
    %1534 = vmatpush1.bf16.msra.mxu0 0
    %1535 = vmatprep.subr.bf16.mxu0 0
    %1536 = vmatpush1.bf16.msra.mxu0 0
    %1537 = vmatprep.subr.bf16.mxu0 0
    %1538 = vmatpush1.bf16.msra.mxu0 0
    %1539 = vmatprep.subr.bf16.mxu0 0
    %1540 = vmatpush1.bf16.msra.mxu0 0
    %1541 = vmatprep.subr.bf16.mxu0 0
    %1542 = vmatpush1.bf16.msra.mxu0 0
    %1543 = vmatprep.subr.bf16.mxu0 0
    %1544 = vmatpush1.bf16.msra.mxu0 0
    %1545 = vmatprep.subr.bf16.mxu0 0
    %1546 = vmatpush1.bf16.msra.mxu0 %v628
    %1547 = vmatprep.subr.bf16.mxu0 0
    %1548 = vmatpush1.bf16.msra.mxu0 %v627
    %1549 = vmatprep.subr.bf16.mxu0 0
    %1550 = vmatpush2.bf16.msra.mxu0 0
    %1551 = vmatprep.subr.bf16.mxu0 0
    %1552 = vmatpush2.bf16.msra.mxu0 0
    %1553 = vmatprep.subr.bf16.mxu0 0
    %1554 = vmatpush2.bf16.msra.mxu0 0
    %1555 = vmatprep.subr.bf16.mxu0 0
    %1556 = vmatpush2.bf16.msra.mxu0 0
    %1557 = vmatprep.subr.bf16.mxu0 0
    %1558 = vmatpush2.bf16.msra.mxu0 0
    %1559 = vmatprep.subr.bf16.mxu0 0
    %1560 = vmatpush2.bf16.msra.mxu0 0
    %1561 = vmatprep.subr.bf16.mxu0 0
    %1562 = vmatpush2.bf16.msra.mxu0 0
    %1563 = vmatprep.subr.bf16.mxu0 0
    %1564 = vmatpush2.bf16.msra.mxu0 0
    %1565 = vmatprep.mubr.bf16.mxu0 0
    %1566 = vmatmul.mubr.bf16.gmra.mxu0 %v1451
    %v1567 = vpop.f32.mrf.mxu0
    %v1568 = vadd.f32 %v510, %v1567
    %v1569 = vpop.f32.mrf.mxu0
    %v1570 = vpop.f32.mrf.mxu0
    %v1571 = vpop.f32.mrf.mxu0
    %1572 = vdwg.mxu0
    %s1573 = scalar_lea.vmem [#allocation3], 48
    %v1574 = vld [vmem:[%s1573] sm:$0xff]
    %v1575 = vadd.f32 %v1574, %v1488
    %v1576 = vsub.f32 0.0, %v1575
    %v1577 = vmul.f32 %v1576, 1.442695
    %v1578 = vpow.pop %v1577
    %v1579 = vadd.f32 %v1578, 1.0
    %v1580 = vrcp.pop %v1579
    %s1581 = scalar_lea.vmem [#allocation4], 48
    %v1582 = vld [vmem:[%s1581] sm:$0xff]
    %v1583 = vadd.f32 %v1582, %v1528
    %v1584 = vsub.f32 0.0, %v1583
    %v1585 = vmul.f32 %v1584, 1.442695
    %v1586 = vpow.pop %v1585
    %v1587 = vadd.f32 %v1586, 1.0
    %v1588 = vrcp.pop %v1587
    %s1589 = scalar_lea.vmem [#allocation5], 48
    %v1590 = vld [vmem:[%s1589] sm:$0xff]
    %v1591 = vmul.f32 %v1580, %v1568
    %v1592 = vadd.f32 %v1590, %v1591
    %v1593 = vtanh.pop %v1592
    %v1594 = vsub.f32 1.0, %v1588
    %v1595 = vmul.f32 %v1594, %v1593
    %v1596 = vmul.f32 %v1588, %v1446
    %v1597 = vadd.f32 %v1595, %v1596
    %s1598 = scalar_lea.vmem [#allocation2], 48
    %1599 = vst.msk [vmem:[%s1598] sm:$0xff] %vm333, %v1597
    %v1600 = vpack.c.bf16 %v1597, %v1597
    %v1602 = vsel %vm333, %v1600, 0
    %1604 = vmatprep.subr.bf16.mxu0 0
    %1605 = vmatpush1.bf16.msra.mxu0 0
    %1606 = vmatprep.subr.bf16.mxu0 0
    %1607 = vmatpush1.bf16.msra.mxu0 0
    %1608 = vmatprep.subr.bf16.mxu0 0
    %1609 = vmatpush1.bf16.msra.mxu0 0
    %1610 = vmatprep.subr.bf16.mxu0 0
    %1611 = vmatpush1.bf16.msra.mxu0 0
    %1612 = vmatprep.subr.bf16.mxu0 0
    %1613 = vmatpush1.bf16.msra.mxu0 0
    %1614 = vmatprep.subr.bf16.mxu0 0
    %1615 = vmatpush1.bf16.msra.mxu0 0
    %1616 = vmatprep.subr.bf16.mxu0 0
    %1617 = vmatpush1.bf16.msra.mxu0 %v521
    %1618 = vmatprep.subr.bf16.mxu0 0
    %1619 = vmatpush1.bf16.msra.mxu0 %v520
    %1620 = vmatprep.subr.bf16.mxu0 0
    %1621 = vmatpush2.bf16.msra.mxu0 0
    %1622 = vmatprep.subr.bf16.mxu0 0
    %1623 = vmatpush2.bf16.msra.mxu0 0
    %1624 = vmatprep.subr.bf16.mxu0 0
    %1625 = vmatpush2.bf16.msra.mxu0 0
    %1626 = vmatprep.subr.bf16.mxu0 0
    %1627 = vmatpush2.bf16.msra.mxu0 0
    %1628 = vmatprep.subr.bf16.mxu0 0
    %1629 = vmatpush2.bf16.msra.mxu0 0
    %1630 = vmatprep.subr.bf16.mxu0 0
    %1631 = vmatpush2.bf16.msra.mxu0 0
    %1632 = vmatprep.subr.bf16.mxu0 0
    %1633 = vmatpush2.bf16.msra.mxu0 0
    %1634 = vmatprep.subr.bf16.mxu0 0
    %1635 = vmatpush2.bf16.msra.mxu0 0
    %1636 = vmatprep.mubr.bf16.mxu0 0
    %1637 = vmatmul.mubr.bf16.gmra.mxu0 %v1602
    %v1638 = vpop.f32.mrf.mxu0
    %v1639 = vadd.f32 0.0, %v1638
    %v1640 = vpop.f32.mrf.mxu0
    %v1641 = vpop.f32.mrf.mxu0
    %v1642 = vpop.f32.mrf.mxu0
    %1643 = vdwg.mxu0
    %1644 = vmatprep.subr.bf16.mxu0 0
    %1645 = vmatpush1.bf16.msra.mxu0 0
    %1646 = vmatprep.subr.bf16.mxu0 0
    %1647 = vmatpush1.bf16.msra.mxu0 0
    %1648 = vmatprep.subr.bf16.mxu0 0
    %1649 = vmatpush1.bf16.msra.mxu0 0
    %1650 = vmatprep.subr.bf16.mxu0 0
    %1651 = vmatpush1.bf16.msra.mxu0 0
    %1652 = vmatprep.subr.bf16.mxu0 0
    %1653 = vmatpush1.bf16.msra.mxu0 0
    %1654 = vmatprep.subr.bf16.mxu0 0
    %1655 = vmatpush1.bf16.msra.mxu0 0
    %1656 = vmatprep.subr.bf16.mxu0 0
    %1657 = vmatpush1.bf16.msra.mxu0 %v576
    %1658 = vmatprep.subr.bf16.mxu0 0
    %1659 = vmatpush1.bf16.msra.mxu0 %v575
    %1660 = vmatprep.subr.bf16.mxu0 0
    %1661 = vmatpush2.bf16.msra.mxu0 0
    %1662 = vmatprep.subr.bf16.mxu0 0
    %1663 = vmatpush2.bf16.msra.mxu0 0
    %1664 = vmatprep.subr.bf16.mxu0 0
    %1665 = vmatpush2.bf16.msra.mxu0 0
    %1666 = vmatprep.subr.bf16.mxu0 0
    %1667 = vmatpush2.bf16.msra.mxu0 0
    %1668 = vmatprep.subr.bf16.mxu0 0
    %1669 = vmatpush2.bf16.msra.mxu0 0
    %1670 = vmatprep.subr.bf16.mxu0 0
    %1671 = vmatpush2.bf16.msra.mxu0 0
    %1672 = vmatprep.subr.bf16.mxu0 0
    %1673 = vmatpush2.bf16.msra.mxu0 0
    %1674 = vmatprep.subr.bf16.mxu0 0
    %1675 = vmatpush2.bf16.msra.mxu0 0
    %1676 = vmatprep.mubr.bf16.mxu0 0
    %1677 = vmatmul.mubr.bf16.gmra.mxu0 %v1602
    %v1678 = vpop.f32.mrf.mxu0
    %v1679 = vadd.f32 0.0, %v1678
    %v1680 = vpop.f32.mrf.mxu0
    %v1681 = vpop.f32.mrf.mxu0
    %v1682 = vpop.f32.mrf.mxu0
    %1683 = vdwg.mxu0
    %1684 = vmatprep.subr.bf16.mxu0 0
    %1685 = vmatpush1.bf16.msra.mxu0 0
    %1686 = vmatprep.subr.bf16.mxu0 0
    %1687 = vmatpush1.bf16.msra.mxu0 0
    %1688 = vmatprep.subr.bf16.mxu0 0
    %1689 = vmatpush1.bf16.msra.mxu0 0
    %1690 = vmatprep.subr.bf16.mxu0 0
    %1691 = vmatpush1.bf16.msra.mxu0 0
    %1692 = vmatprep.subr.bf16.mxu0 0
    %1693 = vmatpush1.bf16.msra.mxu0 0
    %1694 = vmatprep.subr.bf16.mxu0 0
    %1695 = vmatpush1.bf16.msra.mxu0 0
    %1696 = vmatprep.subr.bf16.mxu0 0
    %1697 = vmatpush1.bf16.msra.mxu0 %v628
    %1698 = vmatprep.subr.bf16.mxu0 0
    %1699 = vmatpush1.bf16.msra.mxu0 %v627
    %1700 = vmatprep.subr.bf16.mxu0 0
    %1701 = vmatpush2.bf16.msra.mxu0 0
    %1702 = vmatprep.subr.bf16.mxu0 0
    %1703 = vmatpush2.bf16.msra.mxu0 0
    %1704 = vmatprep.subr.bf16.mxu0 0
    %1705 = vmatpush2.bf16.msra.mxu0 0
    %1706 = vmatprep.subr.bf16.mxu0 0
    %1707 = vmatpush2.bf16.msra.mxu0 0
    %1708 = vmatprep.subr.bf16.mxu0 0
    %1709 = vmatpush2.bf16.msra.mxu0 0
    %1710 = vmatprep.subr.bf16.mxu0 0
    %1711 = vmatpush2.bf16.msra.mxu0 0
    %1712 = vmatprep.subr.bf16.mxu0 0
    %1713 = vmatpush2.bf16.msra.mxu0 0
    %1714 = vmatprep.subr.bf16.mxu0 0
    %1715 = vmatpush2.bf16.msra.mxu0 0
    %1716 = vmatprep.mubr.bf16.mxu0 0
    %1717 = vmatmul.mubr.bf16.gmra.mxu0 %v1602
    %v1718 = vpop.f32.mrf.mxu0
    %v1719 = vadd.f32 %v510, %v1718
    %v1720 = vpop.f32.mrf.mxu0
    %v1721 = vpop.f32.mrf.mxu0
    %v1722 = vpop.f32.mrf.mxu0
    %1723 = vdwg.mxu0
    %s1724 = scalar_lea.vmem [#allocation3], 56
    %v1725 = vld [vmem:[%s1724] sm:$0xff]
    %v1726 = vadd.f32 %v1725, %v1639
    %v1727 = vsub.f32 0.0, %v1726
    %v1728 = vmul.f32 %v1727, 1.442695
    %v1729 = vpow.pop %v1728
    %v1730 = vadd.f32 %v1729, 1.0
    %v1731 = vrcp.pop %v1730
    %s1732 = scalar_lea.vmem [#allocation4], 56
    %v1733 = vld [vmem:[%s1732] sm:$0xff]
    %v1734 = vadd.f32 %v1733, %v1679
    %v1735 = vsub.f32 0.0, %v1734
    %v1736 = vmul.f32 %v1735, 1.442695
    %v1737 = vpow.pop %v1736
    %v1738 = vadd.f32 %v1737, 1.0
    %v1739 = vrcp.pop %v1738
    %s1740 = scalar_lea.vmem [#allocation5], 56
    %v1741 = vld [vmem:[%s1740] sm:$0xff]
    %v1742 = vmul.f32 %v1731, %v1719
    %v1743 = vadd.f32 %v1741, %v1742
    %v1744 = vtanh.pop %v1743
    %v1745 = vsub.f32 1.0, %v1739
    %v1746 = vmul.f32 %v1745, %v1744
    %v1747 = vmul.f32 %v1739, %v1597
    %v1748 = vadd.f32 %v1746, %v1747
    %s1749 = scalar_lea.vmem [#allocation2], 56
    %1750 = vst.msk [vmem:[%s1749] sm:$0xff] %vm333, %v1748
    %v1751 = vld [vmem:[%s11] sm:$0xf]
    %v1752 = vld [vmem:[%s11 + $0x4] sm:$0xf]
    %v1753 = vld [vmem:[%s11 + $0x8] sm:$0xf]
    %v1754 = vld [vmem:[%s11 + $0xc] sm:$0xf]
    %v1755 = vld [vmem:[%s12] sm:$0xf]
    %v1756 = vld [vmem:[%s12 + $0x4] sm:$0xf]
    %v1757 = vld [vmem:[%s12 + $0x8] sm:$0xf]
    %v1758 = vld [vmem:[%s12 + $0xc] sm:$0xf]
    %v1759 = vld [vmem:[%s13] sm:$0xf]
    %v1760 = vld [vmem:[%s13 + $0x4] sm:$0xf]
    %v1761 = vld [vmem:[%s13 + $0x8] sm:$0xf]
    %v1762 = vld [vmem:[%s13 + $0xc] sm:$0xf]
    %v1763 = vld [vmem:[#allocation17] sm:$0xf]
    %v1764 = vld [vmem:[#allocation17 + $0x4] sm:$0xf]
    %v1765 = vld [vmem:[#allocation17 + $0x8] sm:$0xf]
    %v1766 = vld [vmem:[#allocation17 + $0xc] sm:$0xf]
    %v1767 = vld [vmem:[#allocation18] sm:$0xf]
    %v1768 = vld [vmem:[#allocation18 + $0x4] sm:$0xf]
    %v1769 = vld [vmem:[#allocation18 + $0x8] sm:$0xf]
    %v1770 = vld [vmem:[#allocation18 + $0xc] sm:$0xf]
    %v1771 = vld [vmem:[#allocation20] sm:$0xf]
    %v1772 = vld [vmem:[#allocation20 + $0x4] sm:$0xf]
    %v1773 = vld [vmem:[#allocation20 + $0x8] sm:$0xf]
    %v1774 = vld [vmem:[#allocation20 + $0xc] sm:$0xf]
    %v1775 = vld [vmem:[#allocation21] sm:$0x1]
    %v1776 = vld [vmem:[%s18] sm:$0x1]
    %v1777 = vld [vmem:[%s19] sm:$0x1]
    %v1778 = vld [vmem:[%s20] sm:$0x1]
    %v1779 = vld [vmem:[#allocation2] sm:$0xff]
    %v1780 = vld [vmem:[#allocation2 + $0x8] sm:$0xff]
    %v1781 = vld [vmem:[#allocation2 + $0x10] sm:$0xff]
    %v1782 = vld [vmem:[#allocation2 + $0x18] sm:$0xff]
    %v1783 = vld [vmem:[#allocation2 + $0x20] sm:$0xff]
    %v1784 = vld [vmem:[#allocation2 + $0x28] sm:$0xff]
    %v1785 = vld [vmem:[#allocation2 + $0x30] sm:$0xff]
    %v1786 = vld [vmem:[#allocation2 + $0x38] sm:$0xff]
    %v1787 = vpack.c.bf16 %v1780, %v1779
    %v1788 = vpack.c.bf16 %v1782, %v1781
    %v1789 = vpack.c.bf16 %v1784, %v1783
    %v1790 = vpack.c.bf16 %v1786, %v1785
    %v1792 = vlaneseq
    %v1793 = vshrl.u32 %v1792, 7
    %v1794 = vsub.s32 0, %v1793
    %v1795 = vrot.slane %v1775, %v1794
    %v1801 = vunpack.c.l.b16 %v1751
    %v1802 = vunpack.c.l.b16 %v1752
    %v1803 = vunpack.c.l.b16 %v1753
    %v1804 = vunpack.c.l.b16 %v1754
    %v1805 = vpack.c.b16 %v1802, %v1801
    %v1806 = vpack.c.b16 %v1804, %v1803
    %v1810 = vsel %vm333, %v1787, 0
    %v1813 = vsel %vm333, %v1788, 0
    %v1816 = vsel %vm333, %v1789, 0
    %v1819 = vsel %vm333, %v1790, 0
    %1821 = vmatprep.subr.bf16.mxu0 0
    %1822 = vmatpush1.bf16.msra.mxu0 0
    %1823 = vmatprep.subr.bf16.mxu0 0
    %1824 = vmatpush1.bf16.msra.mxu0 0
    %1825 = vmatprep.subr.bf16.mxu0 0
    %1826 = vmatpush1.bf16.msra.mxu0 0
    %1827 = vmatprep.subr.bf16.mxu0 0
    %1828 = vmatpush1.bf16.msra.mxu0 0
    %1829 = vmatprep.subr.bf16.mxu0 0
    %1830 = vmatpush1.bf16.msra.mxu0 0
    %1831 = vmatprep.subr.bf16.mxu0 0
    %1832 = vmatpush1.bf16.msra.mxu0 0
    %1833 = vmatprep.subr.bf16.mxu0 0
    %1834 = vmatpush1.bf16.msra.mxu0 %v1806
    %1835 = vmatprep.subr.bf16.mxu0 0
    %1836 = vmatpush1.bf16.msra.mxu0 %v1805
    %1837 = vmatprep.subr.bf16.mxu0 0
    %1838 = vmatpush2.bf16.msra.mxu0 0
    %1839 = vmatprep.subr.bf16.mxu0 0
    %1840 = vmatpush2.bf16.msra.mxu0 0
    %1841 = vmatprep.subr.bf16.mxu0 0
    %1842 = vmatpush2.bf16.msra.mxu0 0
    %1843 = vmatprep.subr.bf16.mxu0 0
    %1844 = vmatpush2.bf16.msra.mxu0 0
    %1845 = vmatprep.subr.bf16.mxu0 0
    %1846 = vmatpush2.bf16.msra.mxu0 0
    %1847 = vmatprep.subr.bf16.mxu0 0
    %1848 = vmatpush2.bf16.msra.mxu0 0
    %1849 = vmatprep.subr.bf16.mxu0 0
    %1850 = vmatpush2.bf16.msra.mxu0 0
    %1851 = vmatprep.subr.bf16.mxu0 0
    %1852 = vmatpush2.bf16.msra.mxu0 0
    %1853 = vmatprep.mubr.bf16.mxu0 0
    %1854 = vmatmul.mubr.bf16.gmra.mxu0 %v1810
    %v1855 = vpop.f32.mrf.mxu0
    %v1856 = vadd.f32 %v1795, %v1855
    %v1857 = vpop.f32.mrf.mxu0
    %v1858 = vpop.f32.mrf.mxu0
    %v1859 = vadd.f32 %v1795, %v1858
    %v1860 = vpop.f32.mrf.mxu0
    %1861 = vmatprep.mubr.bf16.mxu0 0
    %1862 = vmatmul.mubr.bf16.gmra.mxu0 %v1813
    %v1863 = vpop.f32.mrf.mxu0
    %v1864 = vadd.f32 %v1795, %v1863
    %v1865 = vpop.f32.mrf.mxu0
    %v1866 = vpop.f32.mrf.mxu0
    %v1867 = vadd.f32 %v1795, %v1866
    %v1868 = vpop.f32.mrf.mxu0
    %1869 = vmatprep.mubr.bf16.mxu0 0
    %1870 = vmatmul.mubr.bf16.gmra.mxu0 %v1816
    %v1871 = vpop.f32.mrf.mxu0
    %v1872 = vadd.f32 %v1795, %v1871
    %v1873 = vpop.f32.mrf.mxu0
    %v1874 = vpop.f32.mrf.mxu0
    %v1875 = vadd.f32 %v1795, %v1874
    %v1876 = vpop.f32.mrf.mxu0
    %1877 = vmatprep.mubr.bf16.mxu0 0
    %1878 = vmatmul.mubr.bf16.gmra.mxu0 %v1819
    %v1879 = vpop.f32.mrf.mxu0
    %v1880 = vadd.f32 %v1795, %v1879
    %v1881 = vpop.f32.mrf.mxu0
    %v1882 = vpop.f32.mrf.mxu0
    %v1883 = vadd.f32 %v1795, %v1882
    %v1884 = vpop.f32.mrf.mxu0
    %1885 = vdwg.mxu0
    %1886 = vst.msk [vmem:[#allocation3] sm:$0xff] %vm333, %v1856
    %1887 = vst.msk [vmem:[#allocation3 + $0x8] sm:$0xff] %vm333, %v1859
    %1888 = vst.msk [vmem:[#allocation3 + $0x10] sm:$0xff] %vm333, %v1864
    %1889 = vst.msk [vmem:[#allocation3 + $0x18] sm:$0xff] %vm333, %v1867
    %1890 = vst.msk [vmem:[#allocation3 + $0x20] sm:$0xff] %vm333, %v1872
    %1891 = vst.msk [vmem:[#allocation3 + $0x28] sm:$0xff] %vm333, %v1875
    %1892 = vst.msk [vmem:[#allocation3 + $0x30] sm:$0xff] %vm333, %v1880
    %1893 = vst.msk [vmem:[#allocation3 + $0x38] sm:$0xff] %vm333, %v1883
    %v1895 = vlaneseq
    %v1896 = vshrl.u32 %v1895, 7
    %v1897 = vsub.s32 0, %v1896
    %v1898 = vrot.slane %v1776, %v1897
    %v1904 = vunpack.c.l.b16 %v1755
    %v1905 = vunpack.c.l.b16 %v1756
    %v1906 = vunpack.c.l.b16 %v1757
    %v1907 = vunpack.c.l.b16 %v1758
    %v1908 = vpack.c.b16 %v1905, %v1904
    %v1909 = vpack.c.b16 %v1907, %v1906
    %1912 = vmatprep.subr.bf16.mxu0 0
    %1913 = vmatpush1.bf16.msra.mxu0 0
    %1914 = vmatprep.subr.bf16.mxu0 0
    %1915 = vmatpush1.bf16.msra.mxu0 0
    %1916 = vmatprep.subr.bf16.mxu0 0
    %1917 = vmatpush1.bf16.msra.mxu0 0
    %1918 = vmatprep.subr.bf16.mxu0 0
    %1919 = vmatpush1.bf16.msra.mxu0 0
    %1920 = vmatprep.subr.bf16.mxu0 0
    %1921 = vmatpush1.bf16.msra.mxu0 0
    %1922 = vmatprep.subr.bf16.mxu0 0
    %1923 = vmatpush1.bf16.msra.mxu0 0
    %1924 = vmatprep.subr.bf16.mxu0 0
    %1925 = vmatpush1.bf16.msra.mxu0 %v1909
    %1926 = vmatprep.subr.bf16.mxu0 0
    %1927 = vmatpush1.bf16.msra.mxu0 %v1908
    %1928 = vmatprep.subr.bf16.mxu0 0
    %1929 = vmatpush2.bf16.msra.mxu0 0
    %1930 = vmatprep.subr.bf16.mxu0 0
    %1931 = vmatpush2.bf16.msra.mxu0 0
    %1932 = vmatprep.subr.bf16.mxu0 0
    %1933 = vmatpush2.bf16.msra.mxu0 0
    %1934 = vmatprep.subr.bf16.mxu0 0
    %1935 = vmatpush2.bf16.msra.mxu0 0
    %1936 = vmatprep.subr.bf16.mxu0 0
    %1937 = vmatpush2.bf16.msra.mxu0 0
    %1938 = vmatprep.subr.bf16.mxu0 0
    %1939 = vmatpush2.bf16.msra.mxu0 0
    %1940 = vmatprep.subr.bf16.mxu0 0
    %1941 = vmatpush2.bf16.msra.mxu0 0
    %1942 = vmatprep.subr.bf16.mxu0 0
    %1943 = vmatpush2.bf16.msra.mxu0 0
    %1944 = vmatprep.mubr.bf16.mxu0 0
    %1945 = vmatmul.mubr.bf16.gmra.mxu0 %v1810
    %v1946 = vpop.f32.mrf.mxu0
    %v1947 = vadd.f32 %v1898, %v1946
    %v1948 = vpop.f32.mrf.mxu0
    %v1949 = vpop.f32.mrf.mxu0
    %v1950 = vadd.f32 %v1898, %v1949
    %v1951 = vpop.f32.mrf.mxu0
    %1952 = vmatprep.mubr.bf16.mxu0 0
    %1953 = vmatmul.mubr.bf16.gmra.mxu0 %v1813
    %v1954 = vpop.f32.mrf.mxu0
    %v1955 = vadd.f32 %v1898, %v1954
    %v1956 = vpop.f32.mrf.mxu0
    %v1957 = vpop.f32.mrf.mxu0
    %v1958 = vadd.f32 %v1898, %v1957
    %v1959 = vpop.f32.mrf.mxu0
    %1960 = vmatprep.mubr.bf16.mxu0 0
    %1961 = vmatmul.mubr.bf16.gmra.mxu0 %v1816
    %v1962 = vpop.f32.mrf.mxu0
    %v1963 = vadd.f32 %v1898, %v1962
    %v1964 = vpop.f32.mrf.mxu0
    %v1965 = vpop.f32.mrf.mxu0
    %v1966 = vadd.f32 %v1898, %v1965
    %v1967 = vpop.f32.mrf.mxu0
    %1968 = vmatprep.mubr.bf16.mxu0 0
    %1969 = vmatmul.mubr.bf16.gmra.mxu0 %v1819
    %v1970 = vpop.f32.mrf.mxu0
    %v1971 = vadd.f32 %v1898, %v1970
    %v1972 = vpop.f32.mrf.mxu0
    %v1973 = vpop.f32.mrf.mxu0
    %v1974 = vadd.f32 %v1898, %v1973
    %v1975 = vpop.f32.mrf.mxu0
    %1976 = vdwg.mxu0
    %1977 = vst.msk [vmem:[#allocation4] sm:$0xff] %vm333, %v1947
    %1978 = vst.msk [vmem:[#allocation4 + $0x8] sm:$0xff] %vm333, %v1950
    %1979 = vst.msk [vmem:[#allocation4 + $0x10] sm:$0xff] %vm333, %v1955
    %1980 = vst.msk [vmem:[#allocation4 + $0x18] sm:$0xff] %vm333, %v1958
    %1981 = vst.msk [vmem:[#allocation4 + $0x20] sm:$0xff] %vm333, %v1963
    %1982 = vst.msk [vmem:[#allocation4 + $0x28] sm:$0xff] %vm333, %v1966
    %1983 = vst.msk [vmem:[#allocation4 + $0x30] sm:$0xff] %vm333, %v1971
    %1984 = vst.msk [vmem:[#allocation4 + $0x38] sm:$0xff] %vm333, %v1974
    %v1986 = vlaneseq
    %v1987 = vshrl.u32 %v1986, 7
    %v1988 = vsub.s32 0, %v1987
    %v1989 = vrot.slane %v1777, %v1988
    %v1995 = vunpack.c.l.b16 %v1759
    %v1996 = vunpack.c.l.b16 %v1760
    %v1997 = vunpack.c.l.b16 %v1761
    %v1998 = vunpack.c.l.b16 %v1762
    %v1999 = vpack.c.b16 %v1996, %v1995
    %v2000 = vpack.c.b16 %v1998, %v1997
    %2003 = vmatprep.subr.bf16.mxu0 0
    %2004 = vmatpush1.bf16.msra.mxu0 0
    %2005 = vmatprep.subr.bf16.mxu0 0
    %2006 = vmatpush1.bf16.msra.mxu0 0
    %2007 = vmatprep.subr.bf16.mxu0 0
    %2008 = vmatpush1.bf16.msra.mxu0 0
    %2009 = vmatprep.subr.bf16.mxu0 0
    %2010 = vmatpush1.bf16.msra.mxu0 0
    %2011 = vmatprep.subr.bf16.mxu0 0
    %2012 = vmatpush1.bf16.msra.mxu0 0
    %2013 = vmatprep.subr.bf16.mxu0 0
    %2014 = vmatpush1.bf16.msra.mxu0 0
    %2015 = vmatprep.subr.bf16.mxu0 0
    %2016 = vmatpush1.bf16.msra.mxu0 %v2000
    %2017 = vmatprep.subr.bf16.mxu0 0
    %2018 = vmatpush1.bf16.msra.mxu0 %v1999
    %2019 = vmatprep.subr.bf16.mxu0 0
    %2020 = vmatpush2.bf16.msra.mxu0 0
    %2021 = vmatprep.subr.bf16.mxu0 0
    %2022 = vmatpush2.bf16.msra.mxu0 0
    %2023 = vmatprep.subr.bf16.mxu0 0
    %2024 = vmatpush2.bf16.msra.mxu0 0
    %2025 = vmatprep.subr.bf16.mxu0 0
    %2026 = vmatpush2.bf16.msra.mxu0 0
    %2027 = vmatprep.subr.bf16.mxu0 0
    %2028 = vmatpush2.bf16.msra.mxu0 0
    %2029 = vmatprep.subr.bf16.mxu0 0
    %2030 = vmatpush2.bf16.msra.mxu0 0
    %2031 = vmatprep.subr.bf16.mxu0 0
    %2032 = vmatpush2.bf16.msra.mxu0 0
    %2033 = vmatprep.subr.bf16.mxu0 0
    %2034 = vmatpush2.bf16.msra.mxu0 0
    %2035 = vmatprep.mubr.bf16.mxu0 0
    %2036 = vmatmul.mubr.bf16.gmra.mxu0 %v1810
    %v2037 = vpop.f32.mrf.mxu0
    %v2038 = vadd.f32 %v1989, %v2037
    %v2039 = vpop.f32.mrf.mxu0
    %v2040 = vpop.f32.mrf.mxu0
    %v2041 = vadd.f32 %v1989, %v2040
    %v2042 = vpop.f32.mrf.mxu0
    %2043 = vmatprep.mubr.bf16.mxu0 0
    %2044 = vmatmul.mubr.bf16.gmra.mxu0 %v1813
    %v2045 = vpop.f32.mrf.mxu0
    %v2046 = vadd.f32 %v1989, %v2045
    %v2047 = vpop.f32.mrf.mxu0
    %v2048 = vpop.f32.mrf.mxu0
    %v2049 = vadd.f32 %v1989, %v2048
    %v2050 = vpop.f32.mrf.mxu0
    %2051 = vmatprep.mubr.bf16.mxu0 0
    %2052 = vmatmul.mubr.bf16.gmra.mxu0 %v1816
    %v2053 = vpop.f32.mrf.mxu0
    %v2054 = vadd.f32 %v1989, %v2053
    %v2055 = vpop.f32.mrf.mxu0
    %v2056 = vpop.f32.mrf.mxu0
    %v2057 = vadd.f32 %v1989, %v2056
    %v2058 = vpop.f32.mrf.mxu0
    %2059 = vmatprep.mubr.bf16.mxu0 0
    %2060 = vmatmul.mubr.bf16.gmra.mxu0 %v1819
    %v2061 = vpop.f32.mrf.mxu0
    %v2062 = vadd.f32 %v1989, %v2061
    %v2063 = vpop.f32.mrf.mxu0
    %v2064 = vpop.f32.mrf.mxu0
    %v2065 = vadd.f32 %v1989, %v2064
    %v2066 = vpop.f32.mrf.mxu0
    %2067 = vdwg.mxu0
    %2068 = vst.msk [vmem:[#allocation5] sm:$0xff] %vm333, %v2038
    %2069 = vst.msk [vmem:[#allocation5 + $0x8] sm:$0xff] %vm333, %v2041
    %2070 = vst.msk [vmem:[#allocation5 + $0x10] sm:$0xff] %vm333, %v2046
    %2071 = vst.msk [vmem:[#allocation5 + $0x18] sm:$0xff] %vm333, %v2049
    %2072 = vst.msk [vmem:[#allocation5 + $0x20] sm:$0xff] %vm333, %v2054
    %2073 = vst.msk [vmem:[#allocation5 + $0x28] sm:$0xff] %vm333, %v2057
    %2074 = vst.msk [vmem:[#allocation5 + $0x30] sm:$0xff] %vm333, %v2062
    %2075 = vst.msk [vmem:[#allocation5 + $0x38] sm:$0xff] %vm333, %v2065
    %v2077 = vlaneseq
    %v2078 = vshrl.u32 %v2077, 7
    %v2079 = vsub.s32 0, %v2078
    %v2080 = vrot.slane %v1778, %v2079
    %v2086 = vunpack.c.l.b16 %v1763
    %v2087 = vunpack.c.l.b16 %v1764
    %v2088 = vunpack.c.l.b16 %v1765
    %v2089 = vunpack.c.l.b16 %v1766
    %v2090 = vpack.c.b16 %v2087, %v2086
    %v2091 = vpack.c.b16 %v2089, %v2088
    %2094 = vmatprep.subr.bf16.mxu0 0
    %2095 = vmatpush1.bf16.msra.mxu0 0
    %2096 = vmatprep.subr.bf16.mxu0 0
    %2097 = vmatpush1.bf16.msra.mxu0 0
    %2098 = vmatprep.subr.bf16.mxu0 0
    %2099 = vmatpush1.bf16.msra.mxu0 0
    %2100 = vmatprep.subr.bf16.mxu0 0
    %2101 = vmatpush1.bf16.msra.mxu0 0
    %2102 = vmatprep.subr.bf16.mxu0 0
    %2103 = vmatpush1.bf16.msra.mxu0 0
    %2104 = vmatprep.subr.bf16.mxu0 0
    %2105 = vmatpush1.bf16.msra.mxu0 0
    %2106 = vmatprep.subr.bf16.mxu0 0
    %2107 = vmatpush1.bf16.msra.mxu0 %v2091
    %2108 = vmatprep.subr.bf16.mxu0 0
    %2109 = vmatpush1.bf16.msra.mxu0 %v2090
    %2110 = vmatprep.subr.bf16.mxu0 0
    %2111 = vmatpush2.bf16.msra.mxu0 0
    %2112 = vmatprep.subr.bf16.mxu0 0
    %2113 = vmatpush2.bf16.msra.mxu0 0
    %2114 = vmatprep.subr.bf16.mxu0 0
    %2115 = vmatpush2.bf16.msra.mxu0 0
    %2116 = vmatprep.subr.bf16.mxu0 0
    %2117 = vmatpush2.bf16.msra.mxu0 0
    %2118 = vmatprep.subr.bf16.mxu0 0
    %2119 = vmatpush2.bf16.msra.mxu0 0
    %2120 = vmatprep.subr.bf16.mxu0 0
    %2121 = vmatpush2.bf16.msra.mxu0 0
    %2122 = vmatprep.subr.bf16.mxu0 0
    %2123 = vmatpush2.bf16.msra.mxu0 0
    %2124 = vmatprep.subr.bf16.mxu0 0
    %2125 = vmatpush2.bf16.msra.mxu0 0
    %2126 = vmatprep.mubr.bf16.mxu0 0
    %2127 = vmatmul.mubr.bf16.gmra.mxu0 %v525
    %v2128 = vpop.f32.mrf.mxu0
    %v2129 = vadd.f32 0.0, %v2128
    %v2130 = vpop.f32.mrf.mxu0
    %v2131 = vpop.f32.mrf.mxu0
    %v2132 = vpop.f32.mrf.mxu0
    %2133 = vdwg.mxu0
    %v2138 = vunpack.c.l.b16 %v1767
    %v2139 = vunpack.c.l.b16 %v1768
    %v2140 = vunpack.c.l.b16 %v1769
    %v2141 = vunpack.c.l.b16 %v1770
    %v2142 = vpack.c.b16 %v2139, %v2138
    %v2143 = vpack.c.b16 %v2141, %v2140
    %2146 = vmatprep.subr.bf16.mxu0 0
    %2147 = vmatpush1.bf16.msra.mxu0 0
    %2148 = vmatprep.subr.bf16.mxu0 0
    %2149 = vmatpush1.bf16.msra.mxu0 0
    %2150 = vmatprep.subr.bf16.mxu0 0
    %2151 = vmatpush1.bf16.msra.mxu0 0
    %2152 = vmatprep.subr.bf16.mxu0 0
    %2153 = vmatpush1.bf16.msra.mxu0 0
    %2154 = vmatprep.subr.bf16.mxu0 0
    %2155 = vmatpush1.bf16.msra.mxu0 0
    %2156 = vmatprep.subr.bf16.mxu0 0
    %2157 = vmatpush1.bf16.msra.mxu0 0
    %2158 = vmatprep.subr.bf16.mxu0 0
    %2159 = vmatpush1.bf16.msra.mxu0 %v2143
    %2160 = vmatprep.subr.bf16.mxu0 0
    %2161 = vmatpush1.bf16.msra.mxu0 %v2142
    %2162 = vmatprep.subr.bf16.mxu0 0
    %2163 = vmatpush2.bf16.msra.mxu0 0
    %2164 = vmatprep.subr.bf16.mxu0 0
    %2165 = vmatpush2.bf16.msra.mxu0 0
    %2166 = vmatprep.subr.bf16.mxu0 0
    %2167 = vmatpush2.bf16.msra.mxu0 0
    %2168 = vmatprep.subr.bf16.mxu0 0
    %2169 = vmatpush2.bf16.msra.mxu0 0
    %2170 = vmatprep.subr.bf16.mxu0 0
    %2171 = vmatpush2.bf16.msra.mxu0 0
    %2172 = vmatprep.subr.bf16.mxu0 0
    %2173 = vmatpush2.bf16.msra.mxu0 0
    %2174 = vmatprep.subr.bf16.mxu0 0
    %2175 = vmatpush2.bf16.msra.mxu0 0
    %2176 = vmatprep.subr.bf16.mxu0 0
    %2177 = vmatpush2.bf16.msra.mxu0 0
    %2178 = vmatprep.mubr.bf16.mxu0 0
    %2179 = vmatmul.mubr.bf16.gmra.mxu0 %v525
    %v2180 = vpop.f32.mrf.mxu0
    %v2181 = vadd.f32 0.0, %v2180
    %v2182 = vpop.f32.mrf.mxu0
    %v2183 = vpop.f32.mrf.mxu0
    %v2184 = vpop.f32.mrf.mxu0
    %2185 = vdwg.mxu0
    %v2190 = vunpack.c.l.b16 %v1771
    %v2191 = vunpack.c.l.b16 %v1772
    %v2192 = vunpack.c.l.b16 %v1773
    %v2193 = vunpack.c.l.b16 %v1774
    %v2194 = vpack.c.b16 %v2191, %v2190
    %v2195 = vpack.c.b16 %v2193, %v2192
    %2198 = vmatprep.subr.bf16.mxu0 0
    %2199 = vmatpush1.bf16.msra.mxu0 0
    %2200 = vmatprep.subr.bf16.mxu0 0
    %2201 = vmatpush1.bf16.msra.mxu0 0
    %2202 = vmatprep.subr.bf16.mxu0 0
    %2203 = vmatpush1.bf16.msra.mxu0 0
    %2204 = vmatprep.subr.bf16.mxu0 0
    %2205 = vmatpush1.bf16.msra.mxu0 0
    %2206 = vmatprep.subr.bf16.mxu0 0
    %2207 = vmatpush1.bf16.msra.mxu0 0
    %2208 = vmatprep.subr.bf16.mxu0 0
    %2209 = vmatpush1.bf16.msra.mxu0 0
    %2210 = vmatprep.subr.bf16.mxu0 0
    %2211 = vmatpush1.bf16.msra.mxu0 %v2195
    %2212 = vmatprep.subr.bf16.mxu0 0
    %2213 = vmatpush1.bf16.msra.mxu0 %v2194
    %2214 = vmatprep.subr.bf16.mxu0 0
    %2215 = vmatpush2.bf16.msra.mxu0 0
    %2216 = vmatprep.subr.bf16.mxu0 0
    %2217 = vmatpush2.bf16.msra.mxu0 0
    %2218 = vmatprep.subr.bf16.mxu0 0
    %2219 = vmatpush2.bf16.msra.mxu0 0
    %2220 = vmatprep.subr.bf16.mxu0 0
    %2221 = vmatpush2.bf16.msra.mxu0 0
    %2222 = vmatprep.subr.bf16.mxu0 0
    %2223 = vmatpush2.bf16.msra.mxu0 0
    %2224 = vmatprep.subr.bf16.mxu0 0
    %2225 = vmatpush2.bf16.msra.mxu0 0
    %2226 = vmatprep.subr.bf16.mxu0 0
    %2227 = vmatpush2.bf16.msra.mxu0 0
    %2228 = vmatprep.subr.bf16.mxu0 0
    %2229 = vmatpush2.bf16.msra.mxu0 0
    %2230 = vmatprep.mubr.bf16.mxu0 0
    %2231 = vmatmul.mubr.bf16.gmra.mxu0 %v525
    %v2232 = vpop.f32.mrf.mxu0
    %v2233 = vadd.f32 %v2080, %v2232
    %v2234 = vpop.f32.mrf.mxu0
    %v2235 = vpop.f32.mrf.mxu0
    %v2236 = vpop.f32.mrf.mxu0
    %2237 = vdwg.mxu0
    %v2238 = vld [vmem:[#allocation3] sm:$0xff]
    %v2239 = vadd.f32 %v2238, %v2129
    %v2240 = vsub.f32 0.0, %v2239
    %v2241 = vmul.f32 %v2240, 1.442695
    %v2242 = vpow.pop %v2241
    %v2243 = vadd.f32 %v2242, 1.0
    %v2244 = vrcp.pop %v2243
    %v2245 = vld [vmem:[#allocation4] sm:$0xff]
    %v2246 = vadd.f32 %v2245, %v2181
    %v2247 = vsub.f32 0.0, %v2246
    %v2248 = vmul.f32 %v2247, 1.442695
    %v2249 = vpow.pop %v2248
    %v2250 = vadd.f32 %v2249, 1.0
    %v2251 = vrcp.pop %v2250
    %v2252 = vld [vmem:[#allocation5] sm:$0xff]
    %v2253 = vmul.f32 %v2244, %v2233
    %v2254 = vadd.f32 %v2252, %v2253
    %v2255 = vtanh.pop %v2254
    %v2256 = vsub.f32 1.0, %v2251
    %v2257 = vmul.f32 %v2256, %v2255
    %v2258 = vmul.f32 %v2251, 0.0
    %v2259 = vadd.f32 %v2257, %v2258
    %v2260 = vpack.c.bf16 %v2259, %v2259
    %v2262 = vsel %vm333, %v2260, 0
    %2264 = vmatprep.subr.bf16.mxu0 0
    %2265 = vmatpush1.bf16.msra.mxu0 0
    %2266 = vmatprep.subr.bf16.mxu0 0
    %2267 = vmatpush1.bf16.msra.mxu0 0
    %2268 = vmatprep.subr.bf16.mxu0 0
    %2269 = vmatpush1.bf16.msra.mxu0 0
    %2270 = vmatprep.subr.bf16.mxu0 0
    %2271 = vmatpush1.bf16.msra.mxu0 0
    %2272 = vmatprep.subr.bf16.mxu0 0
    %2273 = vmatpush1.bf16.msra.mxu0 0
    %2274 = vmatprep.subr.bf16.mxu0 0
    %2275 = vmatpush1.bf16.msra.mxu0 0
    %2276 = vmatprep.subr.bf16.mxu0 0
    %2277 = vmatpush1.bf16.msra.mxu0 %v2091
    %2278 = vmatprep.subr.bf16.mxu0 0
    %2279 = vmatpush1.bf16.msra.mxu0 %v2090
    %2280 = vmatprep.subr.bf16.mxu0 0
    %2281 = vmatpush2.bf16.msra.mxu0 0
    %2282 = vmatprep.subr.bf16.mxu0 0
    %2283 = vmatpush2.bf16.msra.mxu0 0
    %2284 = vmatprep.subr.bf16.mxu0 0
    %2285 = vmatpush2.bf16.msra.mxu0 0
    %2286 = vmatprep.subr.bf16.mxu0 0
    %2287 = vmatpush2.bf16.msra.mxu0 0
    %2288 = vmatprep.subr.bf16.mxu0 0
    %2289 = vmatpush2.bf16.msra.mxu0 0
    %2290 = vmatprep.subr.bf16.mxu0 0
    %2291 = vmatpush2.bf16.msra.mxu0 0
    %2292 = vmatprep.subr.bf16.mxu0 0
    %2293 = vmatpush2.bf16.msra.mxu0 0
    %2294 = vmatprep.subr.bf16.mxu0 0
    %2295 = vmatpush2.bf16.msra.mxu0 0
    %2296 = vmatprep.mubr.bf16.mxu0 0
    %2297 = vmatmul.mubr.bf16.gmra.mxu0 %v2262
    %v2298 = vpop.f32.mrf.mxu0
    %v2299 = vadd.f32 0.0, %v2298
    %v2300 = vpop.f32.mrf.mxu0
    %v2301 = vpop.f32.mrf.mxu0
    %v2302 = vpop.f32.mrf.mxu0
    %2303 = vdwg.mxu0
    %2304 = vmatprep.subr.bf16.mxu0 0
    %2305 = vmatpush1.bf16.msra.mxu0 0
    %2306 = vmatprep.subr.bf16.mxu0 0
    %2307 = vmatpush1.bf16.msra.mxu0 0
    %2308 = vmatprep.subr.bf16.mxu0 0
    %2309 = vmatpush1.bf16.msra.mxu0 0
    %2310 = vmatprep.subr.bf16.mxu0 0
    %2311 = vmatpush1.bf16.msra.mxu0 0
    %2312 = vmatprep.subr.bf16.mxu0 0
    %2313 = vmatpush1.bf16.msra.mxu0 0
    %2314 = vmatprep.subr.bf16.mxu0 0
    %2315 = vmatpush1.bf16.msra.mxu0 0
    %2316 = vmatprep.subr.bf16.mxu0 0
    %2317 = vmatpush1.bf16.msra.mxu0 %v2143
    %2318 = vmatprep.subr.bf16.mxu0 0
    %2319 = vmatpush1.bf16.msra.mxu0 %v2142
    %2320 = vmatprep.subr.bf16.mxu0 0
    %2321 = vmatpush2.bf16.msra.mxu0 0
    %2322 = vmatprep.subr.bf16.mxu0 0
    %2323 = vmatpush2.bf16.msra.mxu0 0
    %2324 = vmatprep.subr.bf16.mxu0 0
    %2325 = vmatpush2.bf16.msra.mxu0 0
    %2326 = vmatprep.subr.bf16.mxu0 0
    %2327 = vmatpush2.bf16.msra.mxu0 0
    %2328 = vmatprep.subr.bf16.mxu0 0
    %2329 = vmatpush2.bf16.msra.mxu0 0
    %2330 = vmatprep.subr.bf16.mxu0 0
    %2331 = vmatpush2.bf16.msra.mxu0 0
    %2332 = vmatprep.subr.bf16.mxu0 0
    %2333 = vmatpush2.bf16.msra.mxu0 0
    %2334 = vmatprep.subr.bf16.mxu0 0
    %2335 = vmatpush2.bf16.msra.mxu0 0
    %2336 = vmatprep.mubr.bf16.mxu0 0
    %2337 = vmatmul.mubr.bf16.gmra.mxu0 %v2262
    %v2338 = vpop.f32.mrf.mxu0
    %v2339 = vadd.f32 0.0, %v2338
    %v2340 = vpop.f32.mrf.mxu0
    %v2341 = vpop.f32.mrf.mxu0
    %v2342 = vpop.f32.mrf.mxu0
    %2343 = vdwg.mxu0
    %2344 = vmatprep.subr.bf16.mxu0 0
    %2345 = vmatpush1.bf16.msra.mxu0 0
    %2346 = vmatprep.subr.bf16.mxu0 0
    %2347 = vmatpush1.bf16.msra.mxu0 0
    %2348 = vmatprep.subr.bf16.mxu0 0
    %2349 = vmatpush1.bf16.msra.mxu0 0
    %2350 = vmatprep.subr.bf16.mxu0 0
    %2351 = vmatpush1.bf16.msra.mxu0 0
    %2352 = vmatprep.subr.bf16.mxu0 0
    %2353 = vmatpush1.bf16.msra.mxu0 0
    %2354 = vmatprep.subr.bf16.mxu0 0
    %2355 = vmatpush1.bf16.msra.mxu0 0
    %2356 = vmatprep.subr.bf16.mxu0 0
    %2357 = vmatpush1.bf16.msra.mxu0 %v2195
    %2358 = vmatprep.subr.bf16.mxu0 0
    %2359 = vmatpush1.bf16.msra.mxu0 %v2194
    %2360 = vmatprep.subr.bf16.mxu0 0
    %2361 = vmatpush2.bf16.msra.mxu0 0
    %2362 = vmatprep.subr.bf16.mxu0 0
    %2363 = vmatpush2.bf16.msra.mxu0 0
    %2364 = vmatprep.subr.bf16.mxu0 0
    %2365 = vmatpush2.bf16.msra.mxu0 0
    %2366 = vmatprep.subr.bf16.mxu0 0
    %2367 = vmatpush2.bf16.msra.mxu0 0
    %2368 = vmatprep.subr.bf16.mxu0 0
    %2369 = vmatpush2.bf16.msra.mxu0 0
    %2370 = vmatprep.subr.bf16.mxu0 0
    %2371 = vmatpush2.bf16.msra.mxu0 0
    %2372 = vmatprep.subr.bf16.mxu0 0
    %2373 = vmatpush2.bf16.msra.mxu0 0
    %2374 = vmatprep.subr.bf16.mxu0 0
    %2375 = vmatpush2.bf16.msra.mxu0 0
    %2376 = vmatprep.mubr.bf16.mxu0 0
    %2377 = vmatmul.mubr.bf16.gmra.mxu0 %v2262
    %v2378 = vpop.f32.mrf.mxu0
    %v2379 = vadd.f32 %v2080, %v2378
    %v2380 = vpop.f32.mrf.mxu0
    %v2381 = vpop.f32.mrf.mxu0
    %v2382 = vpop.f32.mrf.mxu0
    %2383 = vdwg.mxu0
    %v2384 = vld [vmem:[%s818] sm:$0xff]
    %v2385 = vadd.f32 %v2384, %v2299
    %v2386 = vsub.f32 0.0, %v2385
    %v2387 = vmul.f32 %v2386, 1.442695
    %v2388 = vpow.pop %v2387
    %v2389 = vadd.f32 %v2388, 1.0
    %v2390 = vrcp.pop %v2389
    %v2391 = vld [vmem:[%s826] sm:$0xff]
    %v2392 = vadd.f32 %v2391, %v2339
    %v2393 = vsub.f32 0.0, %v2392
    %v2394 = vmul.f32 %v2393, 1.442695
    %v2395 = vpow.pop %v2394
    %v2396 = vadd.f32 %v2395, 1.0
    %v2397 = vrcp.pop %v2396
    %v2398 = vld [vmem:[%s834] sm:$0xff]
    %v2399 = vmul.f32 %v2390, %v2379
    %v2400 = vadd.f32 %v2398, %v2399
    %v2401 = vtanh.pop %v2400
    %v2402 = vsub.f32 1.0, %v2397
    %v2403 = vmul.f32 %v2402, %v2401
    %v2404 = vmul.f32 %v2397, %v2259
    %v2405 = vadd.f32 %v2403, %v2404
    %v2406 = vpack.c.bf16 %v2405, %v2405
    %v2408 = vsel %vm333, %v2406, 0
    %2410 = vmatprep.subr.bf16.mxu0 0
    %2411 = vmatpush1.bf16.msra.mxu0 0
    %2412 = vmatprep.subr.bf16.mxu0 0
    %2413 = vmatpush1.bf16.msra.mxu0 0
    %2414 = vmatprep.subr.bf16.mxu0 0
    %2415 = vmatpush1.bf16.msra.mxu0 0
    %2416 = vmatprep.subr.bf16.mxu0 0
    %2417 = vmatpush1.bf16.msra.mxu0 0
    %2418 = vmatprep.subr.bf16.mxu0 0
    %2419 = vmatpush1.bf16.msra.mxu0 0
    %2420 = vmatprep.subr.bf16.mxu0 0
    %2421 = vmatpush1.bf16.msra.mxu0 0
    %2422 = vmatprep.subr.bf16.mxu0 0
    %2423 = vmatpush1.bf16.msra.mxu0 %v2091
    %2424 = vmatprep.subr.bf16.mxu0 0
    %2425 = vmatpush1.bf16.msra.mxu0 %v2090
    %2426 = vmatprep.subr.bf16.mxu0 0
    %2427 = vmatpush2.bf16.msra.mxu0 0
    %2428 = vmatprep.subr.bf16.mxu0 0
    %2429 = vmatpush2.bf16.msra.mxu0 0
    %2430 = vmatprep.subr.bf16.mxu0 0
    %2431 = vmatpush2.bf16.msra.mxu0 0
    %2432 = vmatprep.subr.bf16.mxu0 0
    %2433 = vmatpush2.bf16.msra.mxu0 0
    %2434 = vmatprep.subr.bf16.mxu0 0
    %2435 = vmatpush2.bf16.msra.mxu0 0
    %2436 = vmatprep.subr.bf16.mxu0 0
    %2437 = vmatpush2.bf16.msra.mxu0 0
    %2438 = vmatprep.subr.bf16.mxu0 0
    %2439 = vmatpush2.bf16.msra.mxu0 0
    %2440 = vmatprep.subr.bf16.mxu0 0
    %2441 = vmatpush2.bf16.msra.mxu0 0
    %2442 = vmatprep.mubr.bf16.mxu0 0
    %2443 = vmatmul.mubr.bf16.gmra.mxu0 %v2408
    %v2444 = vpop.f32.mrf.mxu0
    %v2445 = vadd.f32 0.0, %v2444
    %v2446 = vpop.f32.mrf.mxu0
    %v2447 = vpop.f32.mrf.mxu0
    %v2448 = vpop.f32.mrf.mxu0
    %2449 = vdwg.mxu0
    %2450 = vmatprep.subr.bf16.mxu0 0
    %2451 = vmatpush1.bf16.msra.mxu0 0
    %2452 = vmatprep.subr.bf16.mxu0 0
    %2453 = vmatpush1.bf16.msra.mxu0 0
    %2454 = vmatprep.subr.bf16.mxu0 0
    %2455 = vmatpush1.bf16.msra.mxu0 0
    %2456 = vmatprep.subr.bf16.mxu0 0
    %2457 = vmatpush1.bf16.msra.mxu0 0
    %2458 = vmatprep.subr.bf16.mxu0 0
    %2459 = vmatpush1.bf16.msra.mxu0 0
    %2460 = vmatprep.subr.bf16.mxu0 0
    %2461 = vmatpush1.bf16.msra.mxu0 0
    %2462 = vmatprep.subr.bf16.mxu0 0
    %2463 = vmatpush1.bf16.msra.mxu0 %v2143
    %2464 = vmatprep.subr.bf16.mxu0 0
    %2465 = vmatpush1.bf16.msra.mxu0 %v2142
    %2466 = vmatprep.subr.bf16.mxu0 0
    %2467 = vmatpush2.bf16.msra.mxu0 0
    %2468 = vmatprep.subr.bf16.mxu0 0
    %2469 = vmatpush2.bf16.msra.mxu0 0
    %2470 = vmatprep.subr.bf16.mxu0 0
    %2471 = vmatpush2.bf16.msra.mxu0 0
    %2472 = vmatprep.subr.bf16.mxu0 0
    %2473 = vmatpush2.bf16.msra.mxu0 0
    %2474 = vmatprep.subr.bf16.mxu0 0
    %2475 = vmatpush2.bf16.msra.mxu0 0
    %2476 = vmatprep.subr.bf16.mxu0 0
    %2477 = vmatpush2.bf16.msra.mxu0 0
    %2478 = vmatprep.subr.bf16.mxu0 0
    %2479 = vmatpush2.bf16.msra.mxu0 0
    %2480 = vmatprep.subr.bf16.mxu0 0
    %2481 = vmatpush2.bf16.msra.mxu0 0
    %2482 = vmatprep.mubr.bf16.mxu0 0
    %2483 = vmatmul.mubr.bf16.gmra.mxu0 %v2408
    %v2484 = vpop.f32.mrf.mxu0
    %v2485 = vadd.f32 0.0, %v2484
    %v2486 = vpop.f32.mrf.mxu0
    %v2487 = vpop.f32.mrf.mxu0
    %v2488 = vpop.f32.mrf.mxu0
    %2489 = vdwg.mxu0
    %2490 = vmatprep.subr.bf16.mxu0 0
    %2491 = vmatpush1.bf16.msra.mxu0 0
    %2492 = vmatprep.subr.bf16.mxu0 0
    %2493 = vmatpush1.bf16.msra.mxu0 0
    %2494 = vmatprep.subr.bf16.mxu0 0
    %2495 = vmatpush1.bf16.msra.mxu0 0
    %2496 = vmatprep.subr.bf16.mxu0 0
    %2497 = vmatpush1.bf16.msra.mxu0 0
    %2498 = vmatprep.subr.bf16.mxu0 0
    %2499 = vmatpush1.bf16.msra.mxu0 0
    %2500 = vmatprep.subr.bf16.mxu0 0
    %2501 = vmatpush1.bf16.msra.mxu0 0
    %2502 = vmatprep.subr.bf16.mxu0 0
    %2503 = vmatpush1.bf16.msra.mxu0 %v2195
    %2504 = vmatprep.subr.bf16.mxu0 0
    %2505 = vmatpush1.bf16.msra.mxu0 %v2194
    %2506 = vmatprep.subr.bf16.mxu0 0
    %2507 = vmatpush2.bf16.msra.mxu0 0
    %2508 = vmatprep.subr.bf16.mxu0 0
    %2509 = vmatpush2.bf16.msra.mxu0 0
    %2510 = vmatprep.subr.bf16.mxu0 0
    %2511 = vmatpush2.bf16.msra.mxu0 0
    %2512 = vmatprep.subr.bf16.mxu0 0
    %2513 = vmatpush2.bf16.msra.mxu0 0
    %2514 = vmatprep.subr.bf16.mxu0 0
    %2515 = vmatpush2.bf16.msra.mxu0 0
    %2516 = vmatprep.subr.bf16.mxu0 0
    %2517 = vmatpush2.bf16.msra.mxu0 0
    %2518 = vmatprep.subr.bf16.mxu0 0
    %2519 = vmatpush2.bf16.msra.mxu0 0
    %2520 = vmatprep.subr.bf16.mxu0 0
    %2521 = vmatpush2.bf16.msra.mxu0 0
    %2522 = vmatprep.mubr.bf16.mxu0 0
    %2523 = vmatmul.mubr.bf16.gmra.mxu0 %v2408
    %v2524 = vpop.f32.mrf.mxu0
    %v2525 = vadd.f32 %v2080, %v2524
    %v2526 = vpop.f32.mrf.mxu0
    %v2527 = vpop.f32.mrf.mxu0
    %v2528 = vpop.f32.mrf.mxu0
    %2529 = vdwg.mxu0
    %v2530 = vld [vmem:[%s969] sm:$0xff]
    %v2531 = vadd.f32 %v2530, %v2445
    %v2532 = vsub.f32 0.0, %v2531
    %v2533 = vmul.f32 %v2532, 1.442695
    %v2534 = vpow.pop %v2533
    %v2535 = vadd.f32 %v2534, 1.0
    %v2536 = vrcp.pop %v2535
    %v2537 = vld [vmem:[%s977] sm:$0xff]
    %v2538 = vadd.f32 %v2537, %v2485
    %v2539 = vsub.f32 0.0, %v2538
    %v2540 = vmul.f32 %v2539, 1.442695
    %v2541 = vpow.pop %v2540
    %v2542 = vadd.f32 %v2541, 1.0
    %v2543 = vrcp.pop %v2542
    %v2544 = vld [vmem:[%s985] sm:$0xff]
    %v2545 = vmul.f32 %v2536, %v2525
    %v2546 = vadd.f32 %v2544, %v2545
    %v2547 = vtanh.pop %v2546
    %v2548 = vsub.f32 1.0, %v2543
    %v2549 = vmul.f32 %v2548, %v2547
    %v2550 = vmul.f32 %v2543, %v2405
    %v2551 = vadd.f32 %v2549, %v2550
    %v2552 = vpack.c.bf16 %v2551, %v2551
    %v2554 = vsel %vm333, %v2552, 0
    %2556 = vmatprep.subr.bf16.mxu0 0
    %2557 = vmatpush1.bf16.msra.mxu0 0
    %2558 = vmatprep.subr.bf16.mxu0 0
    %2559 = vmatpush1.bf16.msra.mxu0 0
    %2560 = vmatprep.subr.bf16.mxu0 0
    %2561 = vmatpush1.bf16.msra.mxu0 0
    %2562 = vmatprep.subr.bf16.mxu0 0
    %2563 = vmatpush1.bf16.msra.mxu0 0
    %2564 = vmatprep.subr.bf16.mxu0 0
    %2565 = vmatpush1.bf16.msra.mxu0 0
    %2566 = vmatprep.subr.bf16.mxu0 0
    %2567 = vmatpush1.bf16.msra.mxu0 0
    %2568 = vmatprep.subr.bf16.mxu0 0
    %2569 = vmatpush1.bf16.msra.mxu0 %v2091
    %2570 = vmatprep.subr.bf16.mxu0 0
    %2571 = vmatpush1.bf16.msra.mxu0 %v2090
    %2572 = vmatprep.subr.bf16.mxu0 0
    %2573 = vmatpush2.bf16.msra.mxu0 0
    %2574 = vmatprep.subr.bf16.mxu0 0
    %2575 = vmatpush2.bf16.msra.mxu0 0
    %2576 = vmatprep.subr.bf16.mxu0 0
    %2577 = vmatpush2.bf16.msra.mxu0 0
    %2578 = vmatprep.subr.bf16.mxu0 0
    %2579 = vmatpush2.bf16.msra.mxu0 0
    %2580 = vmatprep.subr.bf16.mxu0 0
    %2581 = vmatpush2.bf16.msra.mxu0 0
    %2582 = vmatprep.subr.bf16.mxu0 0
    %2583 = vmatpush2.bf16.msra.mxu0 0
    %2584 = vmatprep.subr.bf16.mxu0 0
    %2585 = vmatpush2.bf16.msra.mxu0 0
    %2586 = vmatprep.subr.bf16.mxu0 0
    %2587 = vmatpush2.bf16.msra.mxu0 0
    %2588 = vmatprep.mubr.bf16.mxu0 0
    %2589 = vmatmul.mubr.bf16.gmra.mxu0 %v2554
    %v2590 = vpop.f32.mrf.mxu0
    %v2591 = vadd.f32 0.0, %v2590
    %v2592 = vpop.f32.mrf.mxu0
    %v2593 = vpop.f32.mrf.mxu0
    %v2594 = vpop.f32.mrf.mxu0
    %2595 = vdwg.mxu0
    %2596 = vmatprep.subr.bf16.mxu0 0
    %2597 = vmatpush1.bf16.msra.mxu0 0
    %2598 = vmatprep.subr.bf16.mxu0 0
    %2599 = vmatpush1.bf16.msra.mxu0 0
    %2600 = vmatprep.subr.bf16.mxu0 0
    %2601 = vmatpush1.bf16.msra.mxu0 0
    %2602 = vmatprep.subr.bf16.mxu0 0
    %2603 = vmatpush1.bf16.msra.mxu0 0
    %2604 = vmatprep.subr.bf16.mxu0 0
    %2605 = vmatpush1.bf16.msra.mxu0 0
    %2606 = vmatprep.subr.bf16.mxu0 0
    %2607 = vmatpush1.bf16.msra.mxu0 0
    %2608 = vmatprep.subr.bf16.mxu0 0
    %2609 = vmatpush1.bf16.msra.mxu0 %v2143
    %2610 = vmatprep.subr.bf16.mxu0 0
    %2611 = vmatpush1.bf16.msra.mxu0 %v2142
    %2612 = vmatprep.subr.bf16.mxu0 0
    %2613 = vmatpush2.bf16.msra.mxu0 0
    %2614 = vmatprep.subr.bf16.mxu0 0
    %2615 = vmatpush2.bf16.msra.mxu0 0
    %2616 = vmatprep.subr.bf16.mxu0 0
    %2617 = vmatpush2.bf16.msra.mxu0 0
    %2618 = vmatprep.subr.bf16.mxu0 0
    %2619 = vmatpush2.bf16.msra.mxu0 0
    %2620 = vmatprep.subr.bf16.mxu0 0
    %2621 = vmatpush2.bf16.msra.mxu0 0
    %2622 = vmatprep.subr.bf16.mxu0 0
    %2623 = vmatpush2.bf16.msra.mxu0 0
    %2624 = vmatprep.subr.bf16.mxu0 0
    %2625 = vmatpush2.bf16.msra.mxu0 0
    %2626 = vmatprep.subr.bf16.mxu0 0
    %2627 = vmatpush2.bf16.msra.mxu0 0
    %2628 = vmatprep.mubr.bf16.mxu0 0
    %2629 = vmatmul.mubr.bf16.gmra.mxu0 %v2554
    %v2630 = vpop.f32.mrf.mxu0
    %v2631 = vadd.f32 0.0, %v2630
    %v2632 = vpop.f32.mrf.mxu0
    %v2633 = vpop.f32.mrf.mxu0
    %v2634 = vpop.f32.mrf.mxu0
    %2635 = vdwg.mxu0
    %2636 = vmatprep.subr.bf16.mxu0 0
    %2637 = vmatpush1.bf16.msra.mxu0 0
    %2638 = vmatprep.subr.bf16.mxu0 0
    %2639 = vmatpush1.bf16.msra.mxu0 0
    %2640 = vmatprep.subr.bf16.mxu0 0
    %2641 = vmatpush1.bf16.msra.mxu0 0
    %2642 = vmatprep.subr.bf16.mxu0 0
    %2643 = vmatpush1.bf16.msra.mxu0 0
    %2644 = vmatprep.subr.bf16.mxu0 0
    %2645 = vmatpush1.bf16.msra.mxu0 0
    %2646 = vmatprep.subr.bf16.mxu0 0
    %2647 = vmatpush1.bf16.msra.mxu0 0
    %2648 = vmatprep.subr.bf16.mxu0 0
    %2649 = vmatpush1.bf16.msra.mxu0 %v2195
    %2650 = vmatprep.subr.bf16.mxu0 0
    %2651 = vmatpush1.bf16.msra.mxu0 %v2194
    %2652 = vmatprep.subr.bf16.mxu0 0
    %2653 = vmatpush2.bf16.msra.mxu0 0
    %2654 = vmatprep.subr.bf16.mxu0 0
    %2655 = vmatpush2.bf16.msra.mxu0 0
    %2656 = vmatprep.subr.bf16.mxu0 0
    %2657 = vmatpush2.bf16.msra.mxu0 0
    %2658 = vmatprep.subr.bf16.mxu0 0
    %2659 = vmatpush2.bf16.msra.mxu0 0
    %2660 = vmatprep.subr.bf16.mxu0 0
    %2661 = vmatpush2.bf16.msra.mxu0 0
    %2662 = vmatprep.subr.bf16.mxu0 0
    %2663 = vmatpush2.bf16.msra.mxu0 0
    %2664 = vmatprep.subr.bf16.mxu0 0
    %2665 = vmatpush2.bf16.msra.mxu0 0
    %2666 = vmatprep.subr.bf16.mxu0 0
    %2667 = vmatpush2.bf16.msra.mxu0 0
    %2668 = vmatprep.mubr.bf16.mxu0 0
    %2669 = vmatmul.mubr.bf16.gmra.mxu0 %v2554
    %v2670 = vpop.f32.mrf.mxu0
    %v2671 = vadd.f32 %v2080, %v2670
    %v2672 = vpop.f32.mrf.mxu0
    %v2673 = vpop.f32.mrf.mxu0
    %v2674 = vpop.f32.mrf.mxu0
    %2675 = vdwg.mxu0
    %v2676 = vld [vmem:[%s1120] sm:$0xff]
    %v2677 = vadd.f32 %v2676, %v2591
    %v2678 = vsub.f32 0.0, %v2677
    %v2679 = vmul.f32 %v2678, 1.442695
    %v2680 = vpow.pop %v2679
    %v2681 = vadd.f32 %v2680, 1.0
    %v2682 = vrcp.pop %v2681
    %v2683 = vld [vmem:[%s1128] sm:$0xff]
    %v2684 = vadd.f32 %v2683, %v2631
    %v2685 = vsub.f32 0.0, %v2684
    %v2686 = vmul.f32 %v2685, 1.442695
    %v2687 = vpow.pop %v2686
    %v2688 = vadd.f32 %v2687, 1.0
    %v2689 = vrcp.pop %v2688
    %v2690 = vld [vmem:[%s1136] sm:$0xff]
    %v2691 = vmul.f32 %v2682, %v2671
    %v2692 = vadd.f32 %v2690, %v2691
    %v2693 = vtanh.pop %v2692
    %v2694 = vsub.f32 1.0, %v2689
    %v2695 = vmul.f32 %v2694, %v2693
    %v2696 = vmul.f32 %v2689, %v2551
    %v2697 = vadd.f32 %v2695, %v2696
    %v2698 = vpack.c.bf16 %v2697, %v2697
    %v2700 = vsel %vm333, %v2698, 0
    %2702 = vmatprep.subr.bf16.mxu0 0
    %2703 = vmatpush1.bf16.msra.mxu0 0
    %2704 = vmatprep.subr.bf16.mxu0 0
    %2705 = vmatpush1.bf16.msra.mxu0 0
    %2706 = vmatprep.subr.bf16.mxu0 0
    %2707 = vmatpush1.bf16.msra.mxu0 0
    %2708 = vmatprep.subr.bf16.mxu0 0
    %2709 = vmatpush1.bf16.msra.mxu0 0
    %2710 = vmatprep.subr.bf16.mxu0 0
    %2711 = vmatpush1.bf16.msra.mxu0 0
    %2712 = vmatprep.subr.bf16.mxu0 0
    %2713 = vmatpush1.bf16.msra.mxu0 0
    %2714 = vmatprep.subr.bf16.mxu0 0
    %2715 = vmatpush1.bf16.msra.mxu0 %v2091
    %2716 = vmatprep.subr.bf16.mxu0 0
    %2717 = vmatpush1.bf16.msra.mxu0 %v2090
    %2718 = vmatprep.subr.bf16.mxu0 0
    %2719 = vmatpush2.bf16.msra.mxu0 0
    %2720 = vmatprep.subr.bf16.mxu0 0
    %2721 = vmatpush2.bf16.msra.mxu0 0
    %2722 = vmatprep.subr.bf16.mxu0 0
    %2723 = vmatpush2.bf16.msra.mxu0 0
    %2724 = vmatprep.subr.bf16.mxu0 0
    %2725 = vmatpush2.bf16.msra.mxu0 0
    %2726 = vmatprep.subr.bf16.mxu0 0
    %2727 = vmatpush2.bf16.msra.mxu0 0
    %2728 = vmatprep.subr.bf16.mxu0 0
    %2729 = vmatpush2.bf16.msra.mxu0 0
    %2730 = vmatprep.subr.bf16.mxu0 0
    %2731 = vmatpush2.bf16.msra.mxu0 0
    %2732 = vmatprep.subr.bf16.mxu0 0
    %2733 = vmatpush2.bf16.msra.mxu0 0
    %2734 = vmatprep.mubr.bf16.mxu0 0
    %2735 = vmatmul.mubr.bf16.gmra.mxu0 %v2700
    %v2736 = vpop.f32.mrf.mxu0
    %v2737 = vadd.f32 0.0, %v2736
    %v2738 = vpop.f32.mrf.mxu0
    %v2739 = vpop.f32.mrf.mxu0
    %v2740 = vpop.f32.mrf.mxu0
    %2741 = vdwg.mxu0
    %2742 = vmatprep.subr.bf16.mxu0 0
    %2743 = vmatpush1.bf16.msra.mxu0 0
    %2744 = vmatprep.subr.bf16.mxu0 0
    %2745 = vmatpush1.bf16.msra.mxu0 0
    %2746 = vmatprep.subr.bf16.mxu0 0
    %2747 = vmatpush1.bf16.msra.mxu0 0
    %2748 = vmatprep.subr.bf16.mxu0 0
    %2749 = vmatpush1.bf16.msra.mxu0 0
    %2750 = vmatprep.subr.bf16.mxu0 0
    %2751 = vmatpush1.bf16.msra.mxu0 0
    %2752 = vmatprep.subr.bf16.mxu0 0
    %2753 = vmatpush1.bf16.msra.mxu0 0
    %2754 = vmatprep.subr.bf16.mxu0 0
    %2755 = vmatpush1.bf16.msra.mxu0 %v2143
    %2756 = vmatprep.subr.bf16.mxu0 0
    %2757 = vmatpush1.bf16.msra.mxu0 %v2142
    %2758 = vmatprep.subr.bf16.mxu0 0
    %2759 = vmatpush2.bf16.msra.mxu0 0
    %2760 = vmatprep.subr.bf16.mxu0 0
    %2761 = vmatpush2.bf16.msra.mxu0 0
    %2762 = vmatprep.subr.bf16.mxu0 0
    %2763 = vmatpush2.bf16.msra.mxu0 0
    %2764 = vmatprep.subr.bf16.mxu0 0
    %2765 = vmatpush2.bf16.msra.mxu0 0
    %2766 = vmatprep.subr.bf16.mxu0 0
    %2767 = vmatpush2.bf16.msra.mxu0 0
    %2768 = vmatprep.subr.bf16.mxu0 0
    %2769 = vmatpush2.bf16.msra.mxu0 0
    %2770 = vmatprep.subr.bf16.mxu0 0
    %2771 = vmatpush2.bf16.msra.mxu0 0
    %2772 = vmatprep.subr.bf16.mxu0 0
    %2773 = vmatpush2.bf16.msra.mxu0 0
    %2774 = vmatprep.mubr.bf16.mxu0 0
    %2775 = vmatmul.mubr.bf16.gmra.mxu0 %v2700
    %v2776 = vpop.f32.mrf.mxu0
    %v2777 = vadd.f32 0.0, %v2776
    %v2778 = vpop.f32.mrf.mxu0
    %v2779 = vpop.f32.mrf.mxu0
    %v2780 = vpop.f32.mrf.mxu0
    %2781 = vdwg.mxu0
    %2782 = vmatprep.subr.bf16.mxu0 0
    %2783 = vmatpush1.bf16.msra.mxu0 0
    %2784 = vmatprep.subr.bf16.mxu0 0
    %2785 = vmatpush1.bf16.msra.mxu0 0
    %2786 = vmatprep.subr.bf16.mxu0 0
    %2787 = vmatpush1.bf16.msra.mxu0 0
    %2788 = vmatprep.subr.bf16.mxu0 0
    %2789 = vmatpush1.bf16.msra.mxu0 0
    %2790 = vmatprep.subr.bf16.mxu0 0
    %2791 = vmatpush1.bf16.msra.mxu0 0
    %2792 = vmatprep.subr.bf16.mxu0 0
    %2793 = vmatpush1.bf16.msra.mxu0 0
    %2794 = vmatprep.subr.bf16.mxu0 0
    %2795 = vmatpush1.bf16.msra.mxu0 %v2195
    %2796 = vmatprep.subr.bf16.mxu0 0
    %2797 = vmatpush1.bf16.msra.mxu0 %v2194
    %2798 = vmatprep.subr.bf16.mxu0 0
    %2799 = vmatpush2.bf16.msra.mxu0 0
    %2800 = vmatprep.subr.bf16.mxu0 0
    %2801 = vmatpush2.bf16.msra.mxu0 0
    %2802 = vmatprep.subr.bf16.mxu0 0
    %2803 = vmatpush2.bf16.msra.mxu0 0
    %2804 = vmatprep.subr.bf16.mxu0 0
    %2805 = vmatpush2.bf16.msra.mxu0 0
    %2806 = vmatprep.subr.bf16.mxu0 0
    %2807 = vmatpush2.bf16.msra.mxu0 0
    %2808 = vmatprep.subr.bf16.mxu0 0
    %2809 = vmatpush2.bf16.msra.mxu0 0
    %2810 = vmatprep.subr.bf16.mxu0 0
    %2811 = vmatpush2.bf16.msra.mxu0 0
    %2812 = vmatprep.subr.bf16.mxu0 0
    %2813 = vmatpush2.bf16.msra.mxu0 0
    %2814 = vmatprep.mubr.bf16.mxu0 0
    %2815 = vmatmul.mubr.bf16.gmra.mxu0 %v2700
    %v2816 = vpop.f32.mrf.mxu0
    %v2817 = vadd.f32 %v2080, %v2816
    %v2818 = vpop.f32.mrf.mxu0
    %v2819 = vpop.f32.mrf.mxu0
    %v2820 = vpop.f32.mrf.mxu0
    %2821 = vdwg.mxu0
    %v2822 = vld [vmem:[%s1271] sm:$0xff]
    %v2823 = vadd.f32 %v2822, %v2737
    %v2824 = vsub.f32 0.0, %v2823
    %v2825 = vmul.f32 %v2824, 1.442695
    %v2826 = vpow.pop %v2825
    %v2827 = vadd.f32 %v2826, 1.0
    %v2828 = vrcp.pop %v2827
    %v2829 = vld [vmem:[%s1279] sm:$0xff]
    %v2830 = vadd.f32 %v2829, %v2777
    %v2831 = vsub.f32 0.0, %v2830
    %v2832 = vmul.f32 %v2831, 1.442695
    %v2833 = vpow.pop %v2832
    %v2834 = vadd.f32 %v2833, 1.0
    %v2835 = vrcp.pop %v2834
    %v2836 = vld [vmem:[%s1287] sm:$0xff]
    %v2837 = vmul.f32 %v2828, %v2817
    %v2838 = vadd.f32 %v2836, %v2837
    %v2839 = vtanh.pop %v2838
    %v2840 = vsub.f32 1.0, %v2835
    %v2841 = vmul.f32 %v2840, %v2839
    %v2842 = vmul.f32 %v2835, %v2697
    %v2843 = vadd.f32 %v2841, %v2842
    %v2844 = vpack.c.bf16 %v2843, %v2843
    %v2846 = vsel %vm333, %v2844, 0
    %2848 = vmatprep.subr.bf16.mxu0 0
    %2849 = vmatpush1.bf16.msra.mxu0 0
    %2850 = vmatprep.subr.bf16.mxu0 0
    %2851 = vmatpush1.bf16.msra.mxu0 0
    %2852 = vmatprep.subr.bf16.mxu0 0
    %2853 = vmatpush1.bf16.msra.mxu0 0
    %2854 = vmatprep.subr.bf16.mxu0 0
    %2855 = vmatpush1.bf16.msra.mxu0 0
    %2856 = vmatprep.subr.bf16.mxu0 0
    %2857 = vmatpush1.bf16.msra.mxu0 0
    %2858 = vmatprep.subr.bf16.mxu0 0
    %2859 = vmatpush1.bf16.msra.mxu0 0
    %2860 = vmatprep.subr.bf16.mxu0 0
    %2861 = vmatpush1.bf16.msra.mxu0 %v2091
    %2862 = vmatprep.subr.bf16.mxu0 0
    %2863 = vmatpush1.bf16.msra.mxu0 %v2090
    %2864 = vmatprep.subr.bf16.mxu0 0
    %2865 = vmatpush2.bf16.msra.mxu0 0
    %2866 = vmatprep.subr.bf16.mxu0 0
    %2867 = vmatpush2.bf16.msra.mxu0 0
    %2868 = vmatprep.subr.bf16.mxu0 0
    %2869 = vmatpush2.bf16.msra.mxu0 0
    %2870 = vmatprep.subr.bf16.mxu0 0
    %2871 = vmatpush2.bf16.msra.mxu0 0
    %2872 = vmatprep.subr.bf16.mxu0 0
    %2873 = vmatpush2.bf16.msra.mxu0 0
    %2874 = vmatprep.subr.bf16.mxu0 0
    %2875 = vmatpush2.bf16.msra.mxu0 0
    %2876 = vmatprep.subr.bf16.mxu0 0
    %2877 = vmatpush2.bf16.msra.mxu0 0
    %2878 = vmatprep.subr.bf16.mxu0 0
    %2879 = vmatpush2.bf16.msra.mxu0 0
    %2880 = vmatprep.mubr.bf16.mxu0 0
    %2881 = vmatmul.mubr.bf16.gmra.mxu0 %v2846
    %v2882 = vpop.f32.mrf.mxu0
    %v2883 = vadd.f32 0.0, %v2882
    %v2884 = vpop.f32.mrf.mxu0
    %v2885 = vpop.f32.mrf.mxu0
    %v2886 = vpop.f32.mrf.mxu0
    %2887 = vdwg.mxu0
    %2888 = vmatprep.subr.bf16.mxu0 0
    %2889 = vmatpush1.bf16.msra.mxu0 0
    %2890 = vmatprep.subr.bf16.mxu0 0
    %2891 = vmatpush1.bf16.msra.mxu0 0
    %2892 = vmatprep.subr.bf16.mxu0 0
    %2893 = vmatpush1.bf16.msra.mxu0 0
    %2894 = vmatprep.subr.bf16.mxu0 0
    %2895 = vmatpush1.bf16.msra.mxu0 0
    %2896 = vmatprep.subr.bf16.mxu0 0
    %2897 = vmatpush1.bf16.msra.mxu0 0
    %2898 = vmatprep.subr.bf16.mxu0 0
    %2899 = vmatpush1.bf16.msra.mxu0 0
    %2900 = vmatprep.subr.bf16.mxu0 0
    %2901 = vmatpush1.bf16.msra.mxu0 %v2143
    %2902 = vmatprep.subr.bf16.mxu0 0
    %2903 = vmatpush1.bf16.msra.mxu0 %v2142
    %2904 = vmatprep.subr.bf16.mxu0 0
    %2905 = vmatpush2.bf16.msra.mxu0 0
    %2906 = vmatprep.subr.bf16.mxu0 0
    %2907 = vmatpush2.bf16.msra.mxu0 0
    %2908 = vmatprep.subr.bf16.mxu0 0
    %2909 = vmatpush2.bf16.msra.mxu0 0
    %2910 = vmatprep.subr.bf16.mxu0 0
    %2911 = vmatpush2.bf16.msra.mxu0 0
    %2912 = vmatprep.subr.bf16.mxu0 0
    %2913 = vmatpush2.bf16.msra.mxu0 0
    %2914 = vmatprep.subr.bf16.mxu0 0
    %2915 = vmatpush2.bf16.msra.mxu0 0
    %2916 = vmatprep.subr.bf16.mxu0 0
    %2917 = vmatpush2.bf16.msra.mxu0 0
    %2918 = vmatprep.subr.bf16.mxu0 0
    %2919 = vmatpush2.bf16.msra.mxu0 0
    %2920 = vmatprep.mubr.bf16.mxu0 0
    %2921 = vmatmul.mubr.bf16.gmra.mxu0 %v2846
    %v2922 = vpop.f32.mrf.mxu0
    %v2923 = vadd.f32 0.0, %v2922
    %v2924 = vpop.f32.mrf.mxu0
    %v2925 = vpop.f32.mrf.mxu0
    %v2926 = vpop.f32.mrf.mxu0
    %2927 = vdwg.mxu0
    %2928 = vmatprep.subr.bf16.mxu0 0
    %2929 = vmatpush1.bf16.msra.mxu0 0
    %2930 = vmatprep.subr.bf16.mxu0 0
    %2931 = vmatpush1.bf16.msra.mxu0 0
    %2932 = vmatprep.subr.bf16.mxu0 0
    %2933 = vmatpush1.bf16.msra.mxu0 0
    %2934 = vmatprep.subr.bf16.mxu0 0
    %2935 = vmatpush1.bf16.msra.mxu0 0
    %2936 = vmatprep.subr.bf16.mxu0 0
    %2937 = vmatpush1.bf16.msra.mxu0 0
    %2938 = vmatprep.subr.bf16.mxu0 0
    %2939 = vmatpush1.bf16.msra.mxu0 0
    %2940 = vmatprep.subr.bf16.mxu0 0
    %2941 = vmatpush1.bf16.msra.mxu0 %v2195
    %2942 = vmatprep.subr.bf16.mxu0 0
    %2943 = vmatpush1.bf16.msra.mxu0 %v2194
    %2944 = vmatprep.subr.bf16.mxu0 0
    %2945 = vmatpush2.bf16.msra.mxu0 0
    %2946 = vmatprep.subr.bf16.mxu0 0
    %2947 = vmatpush2.bf16.msra.mxu0 0
    %2948 = vmatprep.subr.bf16.mxu0 0
    %2949 = vmatpush2.bf16.msra.mxu0 0
    %2950 = vmatprep.subr.bf16.mxu0 0
    %2951 = vmatpush2.bf16.msra.mxu0 0
    %2952 = vmatprep.subr.bf16.mxu0 0
    %2953 = vmatpush2.bf16.msra.mxu0 0
    %2954 = vmatprep.subr.bf16.mxu0 0
    %2955 = vmatpush2.bf16.msra.mxu0 0
    %2956 = vmatprep.subr.bf16.mxu0 0
    %2957 = vmatpush2.bf16.msra.mxu0 0
    %2958 = vmatprep.subr.bf16.mxu0 0
    %2959 = vmatpush2.bf16.msra.mxu0 0
    %2960 = vmatprep.mubr.bf16.mxu0 0
    %2961 = vmatmul.mubr.bf16.gmra.mxu0 %v2846
    %v2962 = vpop.f32.mrf.mxu0
    %v2963 = vadd.f32 %v2080, %v2962
    %v2964 = vpop.f32.mrf.mxu0
    %v2965 = vpop.f32.mrf.mxu0
    %v2966 = vpop.f32.mrf.mxu0
    %2967 = vdwg.mxu0
    %v2968 = vld [vmem:[%s1422] sm:$0xff]
    %v2969 = vadd.f32 %v2968, %v2883
    %v2970 = vsub.f32 0.0, %v2969
    %v2971 = vmul.f32 %v2970, 1.442695
    %v2972 = vpow.pop %v2971
    %v2973 = vadd.f32 %v2972, 1.0
    %v2974 = vrcp.pop %v2973
    %v2975 = vld [vmem:[%s1430] sm:$0xff]
    %v2976 = vadd.f32 %v2975, %v2923
    %v2977 = vsub.f32 0.0, %v2976
    %v2978 = vmul.f32 %v2977, 1.442695
    %v2979 = vpow.pop %v2978
    %v2980 = vadd.f32 %v2979, 1.0
    %v2981 = vrcp.pop %v2980
    %v2982 = vld [vmem:[%s1438] sm:$0xff]
    %v2983 = vmul.f32 %v2974, %v2963
    %v2984 = vadd.f32 %v2982, %v2983
    %v2985 = vtanh.pop %v2984
    %v2986 = vsub.f32 1.0, %v2981
    %v2987 = vmul.f32 %v2986, %v2985
    %v2988 = vmul.f32 %v2981, %v2843
    %v2989 = vadd.f32 %v2987, %v2988
    %v2990 = vpack.c.bf16 %v2989, %v2989
    %v2992 = vsel %vm333, %v2990, 0
    %2994 = vmatprep.subr.bf16.mxu0 0
    %2995 = vmatpush1.bf16.msra.mxu0 0
    %2996 = vmatprep.subr.bf16.mxu0 0
    %2997 = vmatpush1.bf16.msra.mxu0 0
    %2998 = vmatprep.subr.bf16.mxu0 0
    %2999 = vmatpush1.bf16.msra.mxu0 0
    %3000 = vmatprep.subr.bf16.mxu0 0
    %3001 = vmatpush1.bf16.msra.mxu0 0
    %3002 = vmatprep.subr.bf16.mxu0 0
    %3003 = vmatpush1.bf16.msra.mxu0 0
    %3004 = vmatprep.subr.bf16.mxu0 0
    %3005 = vmatpush1.bf16.msra.mxu0 0
    %3006 = vmatprep.subr.bf16.mxu0 0
    %3007 = vmatpush1.bf16.msra.mxu0 %v2091
    %3008 = vmatprep.subr.bf16.mxu0 0
    %3009 = vmatpush1.bf16.msra.mxu0 %v2090
    %3010 = vmatprep.subr.bf16.mxu0 0
    %3011 = vmatpush2.bf16.msra.mxu0 0
    %3012 = vmatprep.subr.bf16.mxu0 0
    %3013 = vmatpush2.bf16.msra.mxu0 0
    %3014 = vmatprep.subr.bf16.mxu0 0
    %3015 = vmatpush2.bf16.msra.mxu0 0
    %3016 = vmatprep.subr.bf16.mxu0 0
    %3017 = vmatpush2.bf16.msra.mxu0 0
    %3018 = vmatprep.subr.bf16.mxu0 0
    %3019 = vmatpush2.bf16.msra.mxu0 0
    %3020 = vmatprep.subr.bf16.mxu0 0
    %3021 = vmatpush2.bf16.msra.mxu0 0
    %3022 = vmatprep.subr.bf16.mxu0 0
    %3023 = vmatpush2.bf16.msra.mxu0 0
    %3024 = vmatprep.subr.bf16.mxu0 0
    %3025 = vmatpush2.bf16.msra.mxu0 0
    %3026 = vmatprep.mubr.bf16.mxu0 0
    %3027 = vmatmul.mubr.bf16.gmra.mxu0 %v2992
    %v3028 = vpop.f32.mrf.mxu0
    %v3029 = vadd.f32 0.0, %v3028
    %v3030 = vpop.f32.mrf.mxu0
    %v3031 = vpop.f32.mrf.mxu0
    %v3032 = vpop.f32.mrf.mxu0
    %3033 = vdwg.mxu0
    %3034 = vmatprep.subr.bf16.mxu0 0
    %3035 = vmatpush1.bf16.msra.mxu0 0
    %3036 = vmatprep.subr.bf16.mxu0 0
    %3037 = vmatpush1.bf16.msra.mxu0 0
    %3038 = vmatprep.subr.bf16.mxu0 0
    %3039 = vmatpush1.bf16.msra.mxu0 0
    %3040 = vmatprep.subr.bf16.mxu0 0
    %3041 = vmatpush1.bf16.msra.mxu0 0
    %3042 = vmatprep.subr.bf16.mxu0 0
    %3043 = vmatpush1.bf16.msra.mxu0 0
    %3044 = vmatprep.subr.bf16.mxu0 0
    %3045 = vmatpush1.bf16.msra.mxu0 0
    %3046 = vmatprep.subr.bf16.mxu0 0
    %3047 = vmatpush1.bf16.msra.mxu0 %v2143
    %3048 = vmatprep.subr.bf16.mxu0 0
    %3049 = vmatpush1.bf16.msra.mxu0 %v2142
    %3050 = vmatprep.subr.bf16.mxu0 0
    %3051 = vmatpush2.bf16.msra.mxu0 0
    %3052 = vmatprep.subr.bf16.mxu0 0
    %3053 = vmatpush2.bf16.msra.mxu0 0
    %3054 = vmatprep.subr.bf16.mxu0 0
    %3055 = vmatpush2.bf16.msra.mxu0 0
    %3056 = vmatprep.subr.bf16.mxu0 0
    %3057 = vmatpush2.bf16.msra.mxu0 0
    %3058 = vmatprep.subr.bf16.mxu0 0
    %3059 = vmatpush2.bf16.msra.mxu0 0
    %3060 = vmatprep.subr.bf16.mxu0 0
    %3061 = vmatpush2.bf16.msra.mxu0 0
    %3062 = vmatprep.subr.bf16.mxu0 0
    %3063 = vmatpush2.bf16.msra.mxu0 0
    %3064 = vmatprep.subr.bf16.mxu0 0
    %3065 = vmatpush2.bf16.msra.mxu0 0
    %3066 = vmatprep.mubr.bf16.mxu0 0
    %3067 = vmatmul.mubr.bf16.gmra.mxu0 %v2992
    %v3068 = vpop.f32.mrf.mxu0
    %v3069 = vadd.f32 0.0, %v3068
    %v3070 = vpop.f32.mrf.mxu0
    %v3071 = vpop.f32.mrf.mxu0
    %v3072 = vpop.f32.mrf.mxu0
    %3073 = vdwg.mxu0
    %3074 = vmatprep.subr.bf16.mxu0 0
    %3075 = vmatpush1.bf16.msra.mxu0 0
    %3076 = vmatprep.subr.bf16.mxu0 0
    %3077 = vmatpush1.bf16.msra.mxu0 0
    %3078 = vmatprep.subr.bf16.mxu0 0
    %3079 = vmatpush1.bf16.msra.mxu0 0
    %3080 = vmatprep.subr.bf16.mxu0 0
    %3081 = vmatpush1.bf16.msra.mxu0 0
    %3082 = vmatprep.subr.bf16.mxu0 0
    %3083 = vmatpush1.bf16.msra.mxu0 0
    %3084 = vmatprep.subr.bf16.mxu0 0
    %3085 = vmatpush1.bf16.msra.mxu0 0
    %3086 = vmatprep.subr.bf16.mxu0 0
    %3087 = vmatpush1.bf16.msra.mxu0 %v2195
    %3088 = vmatprep.subr.bf16.mxu0 0
    %3089 = vmatpush1.bf16.msra.mxu0 %v2194
    %3090 = vmatprep.subr.bf16.mxu0 0
    %3091 = vmatpush2.bf16.msra.mxu0 0
    %3092 = vmatprep.subr.bf16.mxu0 0
    %3093 = vmatpush2.bf16.msra.mxu0 0
    %3094 = vmatprep.subr.bf16.mxu0 0
    %3095 = vmatpush2.bf16.msra.mxu0 0
    %3096 = vmatprep.subr.bf16.mxu0 0
    %3097 = vmatpush2.bf16.msra.mxu0 0
    %3098 = vmatprep.subr.bf16.mxu0 0
    %3099 = vmatpush2.bf16.msra.mxu0 0
    %3100 = vmatprep.subr.bf16.mxu0 0
    %3101 = vmatpush2.bf16.msra.mxu0 0
    %3102 = vmatprep.subr.bf16.mxu0 0
    %3103 = vmatpush2.bf16.msra.mxu0 0
    %3104 = vmatprep.subr.bf16.mxu0 0
    %3105 = vmatpush2.bf16.msra.mxu0 0
    %3106 = vmatprep.mubr.bf16.mxu0 0
    %3107 = vmatmul.mubr.bf16.gmra.mxu0 %v2992
    %v3108 = vpop.f32.mrf.mxu0
    %v3109 = vadd.f32 %v2080, %v3108
    %v3110 = vpop.f32.mrf.mxu0
    %v3111 = vpop.f32.mrf.mxu0
    %v3112 = vpop.f32.mrf.mxu0
    %3113 = vdwg.mxu0
    %v3114 = vld [vmem:[%s1573] sm:$0xff]
    %v3115 = vadd.f32 %v3114, %v3029
    %v3116 = vsub.f32 0.0, %v3115
    %v3117 = vmul.f32 %v3116, 1.442695
    %v3118 = vpow.pop %v3117
    %v3119 = vadd.f32 %v3118, 1.0
    %v3120 = vrcp.pop %v3119
    %v3121 = vld [vmem:[%s1581] sm:$0xff]
    %v3122 = vadd.f32 %v3121, %v3069
    %v3123 = vsub.f32 0.0, %v3122
    %v3124 = vmul.f32 %v3123, 1.442695
    %v3125 = vpow.pop %v3124
    %v3126 = vadd.f32 %v3125, 1.0
    %v3127 = vrcp.pop %v3126
    %v3128 = vld [vmem:[%s1589] sm:$0xff]
    %v3129 = vmul.f32 %v3120, %v3109
    %v3130 = vadd.f32 %v3128, %v3129
    %v3131 = vtanh.pop %v3130
    %v3132 = vsub.f32 1.0, %v3127
    %v3133 = vmul.f32 %v3132, %v3131
    %v3134 = vmul.f32 %v3127, %v2989
    %v3135 = vadd.f32 %v3133, %v3134
    %v3136 = vpack.c.bf16 %v3135, %v3135
    %v3138 = vsel %vm333, %v3136, 0
    %3140 = vmatprep.subr.bf16.mxu0 0
    %3141 = vmatpush1.bf16.msra.mxu0 0
    %3142 = vmatprep.subr.bf16.mxu0 0
    %3143 = vmatpush1.bf16.msra.mxu0 0
    %3144 = vmatprep.subr.bf16.mxu0 0
    %3145 = vmatpush1.bf16.msra.mxu0 0
    %3146 = vmatprep.subr.bf16.mxu0 0
    %3147 = vmatpush1.bf16.msra.mxu0 0
    %3148 = vmatprep.subr.bf16.mxu0 0
    %3149 = vmatpush1.bf16.msra.mxu0 0
    %3150 = vmatprep.subr.bf16.mxu0 0
    %3151 = vmatpush1.bf16.msra.mxu0 0
    %3152 = vmatprep.subr.bf16.mxu0 0
    %3153 = vmatpush1.bf16.msra.mxu0 %v2091
    %3154 = vmatprep.subr.bf16.mxu0 0
    %3155 = vmatpush1.bf16.msra.mxu0 %v2090
    %3156 = vmatprep.subr.bf16.mxu0 0
    %3157 = vmatpush2.bf16.msra.mxu0 0
    %3158 = vmatprep.subr.bf16.mxu0 0
    %3159 = vmatpush2.bf16.msra.mxu0 0
    %3160 = vmatprep.subr.bf16.mxu0 0
    %3161 = vmatpush2.bf16.msra.mxu0 0
    %3162 = vmatprep.subr.bf16.mxu0 0
    %3163 = vmatpush2.bf16.msra.mxu0 0
    %3164 = vmatprep.subr.bf16.mxu0 0
    %3165 = vmatpush2.bf16.msra.mxu0 0
    %3166 = vmatprep.subr.bf16.mxu0 0
    %3167 = vmatpush2.bf16.msra.mxu0 0
    %3168 = vmatprep.subr.bf16.mxu0 0
    %3169 = vmatpush2.bf16.msra.mxu0 0
    %3170 = vmatprep.subr.bf16.mxu0 0
    %3171 = vmatpush2.bf16.msra.mxu0 0
    %3172 = vmatprep.mubr.bf16.mxu0 0
    %3173 = vmatmul.mubr.bf16.gmra.mxu0 %v3138
    %v3174 = vpop.f32.mrf.mxu0
    %v3175 = vadd.f32 0.0, %v3174
    %v3176 = vpop.f32.mrf.mxu0
    %v3177 = vpop.f32.mrf.mxu0
    %v3178 = vpop.f32.mrf.mxu0
    %3179 = vdwg.mxu0
    %3180 = vmatprep.subr.bf16.mxu0 0
    %3181 = vmatpush1.bf16.msra.mxu0 0
    %3182 = vmatprep.subr.bf16.mxu0 0
    %3183 = vmatpush1.bf16.msra.mxu0 0
    %3184 = vmatprep.subr.bf16.mxu0 0
    %3185 = vmatpush1.bf16.msra.mxu0 0
    %3186 = vmatprep.subr.bf16.mxu0 0
    %3187 = vmatpush1.bf16.msra.mxu0 0
    %3188 = vmatprep.subr.bf16.mxu0 0
    %3189 = vmatpush1.bf16.msra.mxu0 0
    %3190 = vmatprep.subr.bf16.mxu0 0
    %3191 = vmatpush1.bf16.msra.mxu0 0
    %3192 = vmatprep.subr.bf16.mxu0 0
    %3193 = vmatpush1.bf16.msra.mxu0 %v2143
    %3194 = vmatprep.subr.bf16.mxu0 0
    %3195 = vmatpush1.bf16.msra.mxu0 %v2142
    %3196 = vmatprep.subr.bf16.mxu0 0
    %3197 = vmatpush2.bf16.msra.mxu0 0
    %3198 = vmatprep.subr.bf16.mxu0 0
    %3199 = vmatpush2.bf16.msra.mxu0 0
    %3200 = vmatprep.subr.bf16.mxu0 0
    %3201 = vmatpush2.bf16.msra.mxu0 0
    %3202 = vmatprep.subr.bf16.mxu0 0
    %3203 = vmatpush2.bf16.msra.mxu0 0
    %3204 = vmatprep.subr.bf16.mxu0 0
    %3205 = vmatpush2.bf16.msra.mxu0 0
    %3206 = vmatprep.subr.bf16.mxu0 0
    %3207 = vmatpush2.bf16.msra.mxu0 0
    %3208 = vmatprep.subr.bf16.mxu0 0
    %3209 = vmatpush2.bf16.msra.mxu0 0
    %3210 = vmatprep.subr.bf16.mxu0 0
    %3211 = vmatpush2.bf16.msra.mxu0 0
    %3212 = vmatprep.mubr.bf16.mxu0 0
    %3213 = vmatmul.mubr.bf16.gmra.mxu0 %v3138
    %v3214 = vpop.f32.mrf.mxu0
    %v3215 = vadd.f32 0.0, %v3214
    %v3216 = vpop.f32.mrf.mxu0
    %v3217 = vpop.f32.mrf.mxu0
    %v3218 = vpop.f32.mrf.mxu0
    %3219 = vdwg.mxu0
    %3220 = vmatprep.subr.bf16.mxu0 0
    %3221 = vmatpush1.bf16.msra.mxu0 0
    %3222 = vmatprep.subr.bf16.mxu0 0
    %3223 = vmatpush1.bf16.msra.mxu0 0
    %3224 = vmatprep.subr.bf16.mxu0 0
    %3225 = vmatpush1.bf16.msra.mxu0 0
    %3226 = vmatprep.subr.bf16.mxu0 0
    %3227 = vmatpush1.bf16.msra.mxu0 0
    %3228 = vmatprep.subr.bf16.mxu0 0
    %3229 = vmatpush1.bf16.msra.mxu0 0
    %3230 = vmatprep.subr.bf16.mxu0 0
    %3231 = vmatpush1.bf16.msra.mxu0 0
    %3232 = vmatprep.subr.bf16.mxu0 0
    %3233 = vmatpush1.bf16.msra.mxu0 %v2195
    %3234 = vmatprep.subr.bf16.mxu0 0
    %3235 = vmatpush1.bf16.msra.mxu0 %v2194
    %3236 = vmatprep.subr.bf16.mxu0 0
    %3237 = vmatpush2.bf16.msra.mxu0 0
    %3238 = vmatprep.subr.bf16.mxu0 0
    %3239 = vmatpush2.bf16.msra.mxu0 0
    %3240 = vmatprep.subr.bf16.mxu0 0
    %3241 = vmatpush2.bf16.msra.mxu0 0
    %3242 = vmatprep.subr.bf16.mxu0 0
    %3243 = vmatpush2.bf16.msra.mxu0 0
    %3244 = vmatprep.subr.bf16.mxu0 0
    %3245 = vmatpush2.bf16.msra.mxu0 0
    %3246 = vmatprep.subr.bf16.mxu0 0
    %3247 = vmatpush2.bf16.msra.mxu0 0
    %3248 = vmatprep.subr.bf16.mxu0 0
    %3249 = vmatpush2.bf16.msra.mxu0 0
    %3250 = vmatprep.subr.bf16.mxu0 0
    %3251 = vmatpush2.bf16.msra.mxu0 0
    %3252 = vmatprep.mubr.bf16.mxu0 0
    %3253 = vmatmul.mubr.bf16.gmra.mxu0 %v3138
    %v3254 = vpop.f32.mrf.mxu0
    %v3255 = vadd.f32 %v2080, %v3254
    %v3256 = vpop.f32.mrf.mxu0
    %v3257 = vpop.f32.mrf.mxu0
    %v3258 = vpop.f32.mrf.mxu0
    %3259 = vdwg.mxu0
    %v3260 = vld [vmem:[%s1724] sm:$0xff]
    %v3261 = vadd.f32 %v3260, %v3175
    %v3262 = vsub.f32 0.0, %v3261
    %v3263 = vmul.f32 %v3262, 1.442695
    %v3264 = vpow.pop %v3263
    %v3265 = vadd.f32 %v3264, 1.0
    %v3266 = vrcp.pop %v3265
    %v3267 = vld [vmem:[%s1732] sm:$0xff]
    %v3268 = vadd.f32 %v3267, %v3215
    %v3269 = vsub.f32 0.0, %v3268
    %v3270 = vmul.f32 %v3269, 1.442695
    %v3271 = vpow.pop %v3270
    %v3272 = vadd.f32 %v3271, 1.0
    %v3273 = vrcp.pop %v3272
    %v3274 = vld [vmem:[%s1740] sm:$0xff]
    %v3275 = vmul.f32 %v3266, %v3255
    %v3276 = vadd.f32 %v3274, %v3275
    %v3277 = vtanh.pop %v3276
    %v3278 = vsub.f32 1.0, %v3273
    %v3279 = vmul.f32 %v3278, %v3277
    %v3280 = vmul.f32 %v3273, %v3135
    %v3281 = vadd.f32 %v3279, %v3280
    %v3282 = vld [vmem:[%s21] sm:$0xff]
    %v3283 = vld [vmem:[%s21 + $0x8] sm:$0xff]
    %v3284 = vld [vmem:[%s21 + $0x10] sm:$0xff]
    %v3285 = vld [vmem:[%s21 + $0x18] sm:$0xff]
    %v3286 = vld [vmem:[%s22] sm:$0x1]
    %v3288 = vlaneseq
    %v3289 = vshrl.u32 %v3288, 7
    %v3290 = vsub.s32 0, %v3289
    %v3291 = vrot.slane %v3286, %v3290
    %v3294 = vsel %vm333, %v3281, 0
    %3296 = vmatprep.subr.mxu0 0.0
    %3297 = vmatpush1.msra.mxu0 0.0
    %3298 = vmatprep.subr.mxu0 0.0
    %3299 = vmatpush1.msra.mxu0 0.0
    %3300 = vmatprep.subr.mxu0 0.0
    %3301 = vmatpush1.msra.mxu0 0.0
    %3302 = vmatprep.subr.mxu0 0.0
    %3303 = vmatpush1.msra.mxu0 0.0
    %3304 = vmatprep.subr.mxu0 0.0
    %3305 = vmatpush1.msra.mxu0 0.0
    %3306 = vmatprep.subr.mxu0 0.0
    %3307 = vmatpush1.msra.mxu0 0.0
    %3308 = vmatprep.subr.mxu0 0.0
    %3309 = vmatpush1.msra.mxu0 0.0
    %3310 = vmatprep.subr.mxu0 0.0
    %3311 = vmatpush1.msra.mxu0 0.0
    %3312 = vmatprep.subr.mxu0 0.0
    %3313 = vmatpush1.msra.mxu0 0.0
    %3314 = vmatprep.subr.mxu0 0.0
    %3315 = vmatpush1.msra.mxu0 0.0
    %3316 = vmatprep.subr.mxu0 0.0
    %3317 = vmatpush1.msra.mxu0 0.0
    %3318 = vmatprep.subr.mxu0 0.0
    %3319 = vmatpush1.msra.mxu0 0.0
    %3320 = vmatprep.subr.mxu0 0.0
    %3321 = vmatpush1.msra.mxu0 %v3285
    %3322 = vmatprep.subr.mxu0 0.0
    %3323 = vmatpush1.msra.mxu0 %v3284
    %3324 = vmatprep.subr.mxu0 0.0
    %3325 = vmatpush1.msra.mxu0 %v3283
    %3326 = vmatprep.subr.mxu0 0.0
    %3327 = vmatpush1.msra.mxu0 %v3282
    %3328 = vmatprep.subr.mxu0 0.0
    %3329 = vmatpush2.msra.mxu0 0.0
    %3330 = vmatprep.subr.mxu0 0.0
    %3331 = vmatpush2.msra.mxu0 0.0
    %3332 = vmatprep.subr.mxu0 0.0
    %3333 = vmatpush2.msra.mxu0 0.0
    %3334 = vmatprep.subr.mxu0 0.0
    %3335 = vmatpush2.msra.mxu0 0.0
    %3336 = vmatprep.subr.mxu0 0.0
    %3337 = vmatpush2.msra.mxu0 0.0
    %3338 = vmatprep.subr.mxu0 0.0
    %3339 = vmatpush2.msra.mxu0 0.0
    %3340 = vmatprep.subr.mxu0 0.0
    %3341 = vmatpush2.msra.mxu0 0.0
    %3342 = vmatprep.subr.mxu0 0.0
    %3343 = vmatpush2.msra.mxu0 0.0
    %3344 = vmatprep.subr.mxu0 0.0
    %3345 = vmatpush2.msra.mxu0 0.0
    %3346 = vmatprep.subr.mxu0 0.0
    %3347 = vmatpush2.msra.mxu0 0.0
    %3348 = vmatprep.subr.mxu0 0.0
    %3349 = vmatpush2.msra.mxu0 0.0
    %3350 = vmatprep.subr.mxu0 0.0
    %3351 = vmatpush2.msra.mxu0 0.0
    %3352 = vmatprep.subr.mxu0 0.0
    %3353 = vmatpush2.msra.mxu0 0.0
    %3354 = vmatprep.subr.mxu0 0.0
    %3355 = vmatpush2.msra.mxu0 0.0
    %3356 = vmatprep.subr.mxu0 0.0
    %3357 = vmatpush2.msra.mxu0 0.0
    %3358 = vmatprep.subr.mxu0 0.0
    %3359 = vmatpush2.msra.mxu0 0.0
    %3360 = vmatprep.mubr.f32.mxu0 0.0
    %3361 = vmatmul.mubr.f32.gmra.mxu0 %v3294
    %v3362 = vpop.f32.mrf.mxu0
    %v3363 = vadd.f32 %v3291, %v3362
    %v3364 = vpop.f32.mrf.mxu0
    %3365 = vdwg.mxu0
    %vm3366 = vcmask 48128
    %3367 = vst.msk [vmem:[#allocation23] sm:$0xff] %vm3366, %v3363
    // Predicated region
    $region134: #{tpu_custom_call.1} parent=1 // pred_check
      _
    $region135: #{tpu_custom_call.1} parent=1 // pred_check_branch
      %3369 = sbr.rel (0) target = $region137
    $region136: #{tpu_custom_call.1} parent=1 // pred_region
      %s3371 = ssub.s32 128, 128
      %3372 = vsyncadd [#allocation8], %s3371
      %s3374 = sshll.u32 [#allocation23], 4
      %s3375 = int_to_ptr.vmem [resolvable:$true] %s3374
      %3377 = dma.vmem_to_hbm [thread:$0]  %s3375, 128, %s23, [#allocation8]
    $region137: #{tpu_custom_call.1} parent=1 // pred_fallthru
      _
    // Predicated region
    $region138: #{tpu_custom_call.1} parent=1 // pred_check
      _
    $region139: #{tpu_custom_call.1} parent=1 // pred_check_branch
      %3379 = sbr.rel (0) target = $region141
    $region140: #{tpu_custom_call.1} parent=1 // pred_region
      %3380 = dma.done [#allocation8], 128
    $region141: #{tpu_custom_call.1} parent=1 // pred_fallthru
      _
    %3381 = vsyncpa [#allocation7], 1
    %3382 = vsyncpa [#allocation10], 1
    %3383 = vsyncpa [#allocation13], 1
    %3384 = vsyncpa [#allocation16], 1
    %3385 = vsyncpa [#allocation19], 1
    %3386 = vsyncpa [#allocation22], 1
    %3387 = vsyncpa [#allocation8], 1

</llo_original>
